<compile_context>
chip_gen: v6e
topology: v6e:2x2x1
jax: 0.10.0
libtpu: 0.0.40
codegen_flags: <defaults>
</compile_context>

<pallas_src>
import functools
import math

import jax
import jax.numpy as jnp
import numpy as np
from jax.experimental import pallas as pl
from jax.experimental.pallas import tpu as pltpu

EPS = 1e-6
IN_DIM = 758
IN_DIM_PAD = 768  # 758 -> 768 = 6 * 128


# ----------------------------- fused Pallas kernel -----------------------------

def _fused_grn_kernel(x_ref, pw_ref, pb_ref, cs_ref, sn_ref, mask_ref,
                      wattn_ref, wo_ref, w13_ref, w2_ref, hw_ref, hb_ref,
                      o_ref, *, num_layers, num_heads, head_dim, hidden_dim):
    H, D, Hd = num_heads, head_dim, hidden_dim
    E = H * D

    def rmsnorm(v):                                   # gains folded into weights
        ms = jnp.mean(v * v, axis=-1, keepdims=True)
        return v * jax.lax.rsqrt(ms + EPS)

    def bf(v):                                        # bf16 MXU feed, f32 accum
        return v.astype(jnp.bfloat16)

    x = x_ref[...]                                    # (M, K_pad) f32
    cs = cs_ref[...]                                  # (M, 2E)  [cos*scale | cos]
    sn = sn_ref[...]                                  # (M, 2E)  [sin*scale | sin]
    mask = mask_ref[...]                              # (M, M) 0 / -1e9 batch mask

    # input projection (the only large-K matmul in the model)
    h = (jnp.dot(bf(x), pw_ref[...], preferred_element_type=jnp.float32)
         + pb_ref[...])                               # (M, E) f32

    for l in range(num_layers):                       # static unroll over layers
        # ---- attention block ----
        hn = rmsnorm(h)
        qkv = jnp.dot(bf(hn), wattn_ref[l],
                      preferred_element_type=jnp.float32)        # (M, 5E)
        # RoPE (selection matrices pre-folded into the weights on the host):
        #   [q | k] = [qA | kA] * [cos*s | cos] + [qB | kB] * [sin*s | sin]
        qk = qkv[:, :2 * E] * cs + qkv[:, 2 * E:4 * E] * sn      # (M, 2E) f32
        q, k, v = qk[:, :E], qk[:, E:], qkv[:, 4 * E:]

        q_h = jnp.stack([q[:, hh * D:(hh + 1) * D] for hh in range(H)], axis=0)
        k_h = jnp.stack([k[:, hh * D:(hh + 1) * D] for hh in range(H)], axis=0)
        v_h = jnp.stack([v[:, hh * D:(hh + 1) * D] for hh in range(H)], axis=0)
        s = jnp.einsum('hqd,hkd->hqk', bf(q_h), bf(k_h),
                       preferred_element_type=jnp.float32) + mask   # (H, M, M)
        m = jnp.max(s, axis=-1, keepdims=True)
        e = jnp.exp(s - m)
        p = e * pl.reciprocal(jnp.sum(e, axis=-1, keepdims=True), approx=False)
        o = jnp.einsum('hqk,hkd->hqd', bf(p), bf(v_h),
                       preferred_element_type=jnp.float32)          # (H, M, D)
        attn = jnp.concatenate([o[hh] for hh in range(H)], axis=-1)  # (M, E)
        h = h + jnp.dot(bf(attn), wo_ref[l], preferred_element_type=jnp.float32)

        # ---- FFN block: w2( w1(x) * silu(w3(x)) ), w1|w3 fused ----
        hn2 = rmsnorm(h)
        x13 = jnp.dot(bf(hn2), w13_ref[l],
                      preferred_element_type=jnp.float32)           # (M, 2*Hd)
        x1, x3 = x13[:, :Hd], x13[:, Hd:]
        g = x1 * (x3 * jax.nn.sigmoid(x3))
        h = h + jnp.dot(bf(g), w2_ref[l], preferred_element_type=jnp.float32)

    # ---- final RMSNorm + prediction head (norm gain folded into head_w) ----
    hn = rmsnorm(h)
    o_ref[...] = (jnp.dot(bf(hn), hw_ref[...], preferred_element_type=jnp.float32)
                  + hb_ref[...]).astype(o_ref.dtype)


# ----------------------------- pallas_call wrapper -----------------------------

def _spec(shape):
    n = len(shape)
    return pl.BlockSpec(shape, lambda i, _n=n: (0,) * _n)


def fused_grn_forward(x_flat, packed, num_heads, hidden_dim):
    M, Kpad = x_flat.shape
    E = packed["proj_w"].shape[1]
    L = packed["w_attn"].shape[0]
    Gp = packed["head_w"].shape[1]
    D = E // num_heads

    kern = functools.partial(_fused_grn_kernel, num_layers=L, num_heads=num_heads,
                             head_dim=D, hidden_dim=hidden_dim)
    return pl.pallas_call(
        kern,
        out_shape=jax.ShapeDtypeStruct((M, Gp), jnp.float32),
        grid=(1,),
        in_specs=[
            _spec((M, Kpad)),                                   # x (f32)
            _spec((Kpad, E)), _spec((1, E)),                    # proj_w (bf16), proj_b
            _spec((M, 2 * E)), _spec((M, 2 * E)),               # cos/sin tables (f32)
            _spec((M, M)),                                      # batch mask (f32)
            _spec((L, E, 5 * E)),                               # fused qkv+rope (bf16)
            _spec((L, E, E)),                                   # wo (bf16)
            _spec((L, E, 2 * hidden_dim)),                      # fused w1|w3 (bf16)
            _spec((L, hidden_dim, E)),                          # w2 (bf16)
            _spec((E, Gp)), _spec((1, Gp)),                     # head_w (bf16), head_b
        ],
        out_specs=_spec((M, Gp)),
        compiler_params=pltpu.CompilerParams(dimension_semantics=("arbitrary",)),
    )(x_flat, packed["proj_w"], packed["proj_b"], packed["cs"], packed["sn"],
      packed["mask"], packed["w_attn"], packed["wo"], packed["w13"],
      packed["w2"], packed["head_w"], packed["head_b"])


# ----------------------------- host-side prep -----------------------------

def rotary_tables(seq_len, head_dim):
    half = head_dim // 2
    inv_freq = 1.0 / (10000.0 ** (np.arange(half, dtype=np.float32) / half))
    pos = np.arange(seq_len, dtype=np.float32)[:, None]
    freqs = pos * inv_freq[None, :]
    return np.cos(freqs), np.sin(freqs)               # each (seq_len, head_dim//2)


def _rope_selection(head_dim):
    # rot(t) = (t @ A) * cat[cos,cos] + (t @ B) * cat[sin,sin]
    # matching torch: cat([t_even*c - t_odd*s, t_even*s + t_odd*c], -1)
    half = head_dim // 2
    A = np.zeros((head_dim, head_dim), np.float32)
    B = np.zeros((head_dim, head_dim), np.float32)
    for c in range(half):
        A[2 * c, c] = 1.0
        B[2 * c + 1, c] = -1.0
        A[2 * c + 1, half + c] = 1.0
        B[2 * c, half + c] = 1.0
    return A, B


def prepare_packed(params, num_heads, batch, seq_len):
    E = params["proj_w"].shape[1]
    H = num_heads
    D = E // H
    scale = 1.0 / math.sqrt(D)

    def np32(a):
        return np.asarray(a, np.float32)

    cos, sin = rotary_tables(seq_len, D)              # (N, D//2)
    cos2 = np.concatenate([cos, cos], axis=-1)        # (N, D)
    sin2 = np.concatenate([sin, sin], axis=-1)
    cosE = np.tile(cos2, (1, H))                      # (N, E) lane-dense per head
    sinE = np.tile(sin2, (1, H))
    # tables for the fused [q|k] block; the attention scale is folded into the
    # q half (f32, exact to rounding) so the kernel never multiplies by it.
    cs = np.tile(np.concatenate([cosE * scale, cosE], axis=-1), (batch, 1))
    sn = np.tile(np.concatenate([sinE * scale, sinE], axis=-1), (batch, 1))

    # block-diagonal batch mask: -1e9 on cross-batch score entries
    bid = np.repeat(np.arange(batch), seq_len)
    mask = np.where(bid[:, None] == bid[None, :], 0.0, -1e9).astype(np.float32)

    A, B = _rope_selection(D)
    eye = np.eye(H, dtype=np.float32)
    bdA = np.kron(eye, A)                             # (E, E) block-diagonal
    bdB = np.kron(eye, B)

    w_attn, wo, w13, w2 = [], [], [], []
    for lp in params["layers"]:
        g1 = np32(lp["g1"]).reshape(E, 1)             # fold RMSNorm gains into
        g2 = np32(lp["g2"]).reshape(E, 1)             # the downstream weights
        wq, wk, wv = g1 * np32(lp["wq"]), g1 * np32(lp["wk"]), g1 * np32(lp["wv"])
        w_attn.append(np.concatenate(
            [wq @ bdA, wk @ bdA, wq @ bdB, wk @ bdB, wv], axis=1))   # (E, 5E)
        wo.append(np32(lp["wo"]))
        w13.append(np.concatenate([g2 * np32(lp["w1"]), g2 * np32(lp["w3"])], axis=1))
        w2.append(np32(lp["w2"]))

    proj_w = np.zeros((IN_DIM_PAD, E), np.float32)
    proj_w[:params["proj_w"].shape[0]] = np32(params["proj_w"])

    G = params["head_w"].shape[1]
    Gp = ((G + 127) // 128) * 128                     # lane-dense output store
    head_w = np.zeros((E, Gp), np.float32)
    head_w[:, :G] = np32(params["norm_g"]).reshape(E, 1) * np32(params["head_w"])
    head_b = np.zeros((1, Gp), np.float32)
    head_b[0, :G] = np32(params["head_b"])

    bf = jnp.bfloat16
    return {
        "proj_w": jnp.asarray(proj_w, bf),
        "proj_b": jnp.asarray(np32(params["proj_b"]).reshape(1, E)),
        "cs": jnp.asarray(cs), "sn": jnp.asarray(sn), "mask": jnp.asarray(mask),
        "w_attn": jnp.asarray(np.stack(w_attn), bf),
        "wo": jnp.asarray(np.stack(wo), bf),
        "w13": jnp.asarray(np.stack(w13), bf),
        "w2": jnp.asarray(np.stack(w2), bf),
        "head_w": jnp.asarray(head_w, bf),
        "head_b": jnp.asarray(head_b),
    }


def grn_transformer_forward(x, params, num_heads, hidden_dim):
    B, N, K = x.shape
    G = params["head_w"].shape[1]
    x_pad = jnp.pad(x, ((0, 0), (0, 0), (0, IN_DIM_PAD - K)))
    x_flat = x_pad.reshape(B * N, IN_DIM_PAD)         # collapse batch (single TC)
    packed = prepare_packed(params, num_heads, B, N)
    out_pad = fused_grn_forward(x_flat, packed, num_heads, hidden_dim)
    return out_pad[:, :G].reshape(B, N, G)


# ----------------------------- params init -----------------------------

def init_params(key, num_genes, in_dim, embed_dim, num_heads, hidden_dim, num_layers):
    n_keys = 4 + 7 * num_layers
    keys = iter(jax.random.split(key, n_keys))

    def dense(k, fan_in, fan_out):
        # weight stored as (in, out)  <=>  torch's W.T
        return jax.random.normal(k, (fan_in, fan_out), jnp.float32) / math.sqrt(fan_in)

    params = {
        "proj_w": dense(next(keys), in_dim, embed_dim),
        "proj_b": jax.random.normal(next(keys), (embed_dim,), jnp.float32) * 0.01,
        "head_w": dense(next(keys), hidden_dim, num_genes),
        "head_b": jax.random.normal(next(keys), (num_genes,), jnp.float32) * 0.01,
        "norm_g": jnp.ones((1, embed_dim), jnp.float32),
        "layers": [],
    }
    for _ in range(num_layers):
        params["layers"].append({
            "g1": jnp.ones((1, embed_dim), jnp.float32),
            "g2": jnp.ones((1, embed_dim), jnp.float32),
            "wq": dense(next(keys), embed_dim, embed_dim),
            "wk": dense(next(keys), embed_dim, embed_dim),
            "wv": dense(next(keys), embed_dim, embed_dim),
            "wo": dense(next(keys), embed_dim, embed_dim),
            "w1": dense(next(keys), embed_dim, hidden_dim),
            "w3": dense(next(keys), embed_dim, hidden_dim),
            "w2": dense(next(keys), hidden_dim, embed_dim),
        })
    return params


# ----------------------------- pure-JAX reference (torch semantics) -----------------------------

def ref_forward(x, params, num_heads, matmul_dtype=jnp.bfloat16):
    """GrnTransformer forward with PyTorch semantics.

    matmul_dtype=bfloat16 mirrors the kernel's bf16 MXU operands (f32 accum);
    pass jnp.float32 for exact full-precision torch math.
    """
    def mm(a, b):
        return jnp.dot(a.astype(matmul_dtype), b.astype(matmul_dtype),
                       preferred_element_type=jnp.float32)

    def rmsnorm(v, g):
        ms = jnp.mean(v * v, axis=-1, keepdims=True)
        return g.reshape(-1) * (v * jax.lax.rsqrt(ms + EPS))

    B, N, _ = x.shape
    E = params["proj_w"].shape[1]
    H = num_heads
    D = E // H
    cos_np, sin_np = rotary_tables(N, D)
    cos, sin = jnp.asarray(cos_np), jnp.asarray(sin_np)

    def rope(t):                       # t: (B, H, N, D)
        t1, t2 = t[..., ::2], t[..., 1::2]
        c, s = cos[None, None], sin[None, None]
        return jnp.concatenate([t1 * c - t2 * s, t1 * s + t2 * c], axis=-1)

    h = mm(x, params["proj_w"]) + params["proj_b"]
    for lp in params["layers"]:
        hn = rmsnorm(h, lp["g1"])
        q = mm(hn, lp["wq"]).reshape(B, N, H, D).transpose(0, 2, 1, 3)
        k = mm(hn, lp["wk"]).reshape(B, N, H, D).transpose(0, 2, 1, 3)
        v = mm(hn, lp["wv"]).reshape(B, N, H, D).transpose(0, 2, 1, 3)
        q = rope(q) * (1.0 / math.sqrt(D))   # scale on q (math-equivalent to /sqrt(D) on scores)
        k = rope(k)
        s = jnp.einsum("bhnd,bhmd->bhnm", q.astype(matmul_dtype), k.astype(matmul_dtype),
                       preferred_element_type=jnp.float32)
        p = jax.nn.softmax(s, axis=-1)
        o = jnp.einsum("bhnm,bhmd->bhnd", p.astype(matmul_dtype), v.astype(matmul_dtype),
                       preferred_element_type=jnp.float32)
        o = o.transpose(0, 2, 1, 3).reshape(B, N, E)
        h = h + mm(o, lp["wo"])
        hn2 = rmsnorm(h, lp["g2"])
        x1, x3 = mm(hn2, lp["w1"]), mm(hn2, lp["w3"])
        h = h + mm(x1 * (x3 * jax.nn.sigmoid(x3)), lp["w2"])
    hn = rmsnorm(h, params["norm_g"])
    return mm(hn, params["head_w"]) + params["head_b"]


# ----------------------------- main -----------------------------

if __name__ == "__main__":
    B, num_genes, in_dim = 2, 16, IN_DIM
    embed_dim, num_heads, num_layers = 64, 8, 1
    hidden_dim = embed_dim  # required for grn_pred_head shapes to be consistent

    key = jax.random.PRNGKey(0)
    kx, kp = jax.random.split(key)
    x = jax.random.normal(kx, (B, num_genes, in_dim), jnp.float32)
    params = init_params(kp, num_genes, in_dim, embed_dim, num_heads,
                         hidden_dim, num_layers)

    out = grn_transformer_forward(x, params, num_heads, hidden_dim)
    out = jax.block_until_ready(out)

    # Reference uses the same bf16 matmul-operand precision as the kernel
    # (f32 accumulation); everything else is exact torch-forward math.
    ref = jax.block_until_ready(ref_forward(x, params, num_heads,
                                            matmul_dtype=jnp.bfloat16))
    np.testing.assert_allclose(np.asarray(out), np.asarray(ref),
                               rtol=5e-3, atol=5e-3)
    assert out.shape == (B, num_genes, num_genes)
    print("KERNEL_OK")
</pallas_src>

<mosaic_0001>
module attributes {stable_mosaic.version = 11 : i64} {
  func.func @_fused_grn_kernel(%arg0: i32, %arg1: memref<32x768xf32, #tpu.memory_space<vmem>>, %arg2: memref<768x64xbf16, #tpu.memory_space<vmem>>, %arg3: memref<1x64xf32, #tpu.memory_space<vmem>>, %arg4: memref<32x128xf32, #tpu.memory_space<vmem>>, %arg5: memref<32x128xf32, #tpu.memory_space<vmem>>, %arg6: memref<32x32xf32, #tpu.memory_space<vmem>>, %arg7: memref<1x64x320xbf16, #tpu.memory_space<vmem>>, %arg8: memref<1x64x64xbf16, #tpu.memory_space<vmem>>, %arg9: memref<1x64x128xbf16, #tpu.memory_space<vmem>>, %arg10: memref<1x64x64xbf16, #tpu.memory_space<vmem>>, %arg11: memref<64x128xbf16, #tpu.memory_space<vmem>>, %arg12: memref<1x128xf32, #tpu.memory_space<vmem>>, %arg13: memref<32x128xf32, #tpu.memory_space<vmem>>) attributes {dimension_semantics = [#tpu.dimension_semantics<arbitrary>], iteration_bounds = array<i64: 1>, scalar_prefetch = 0 : i64, scratch_operands = 0 : i64, tpu.core_type = #tpu.core_type<tc>, window_params = [{pipeline_mode = #tpu.pipeline_mode<synchronous>, transform_indices = @transform_0, window_bounds = array<i64: 32, 768>}, {pipeline_mode = #tpu.pipeline_mode<synchronous>, transform_indices = @transform_1, window_bounds = array<i64: 768, 64>}, {pipeline_mode = #tpu.pipeline_mode<synchronous>, transform_indices = @transform_2, window_bounds = array<i64: 1, 64>}, {pipeline_mode = #tpu.pipeline_mode<synchronous>, transform_indices = @transform_3, window_bounds = array<i64: 32, 128>}, {pipeline_mode = #tpu.pipeline_mode<synchronous>, transform_indices = @transform_4, window_bounds = array<i64: 32, 128>}, {pipeline_mode = #tpu.pipeline_mode<synchronous>, transform_indices = @transform_5, window_bounds = array<i64: 32, 32>}, {pipeline_mode = #tpu.pipeline_mode<synchronous>, transform_indices = @transform_6, window_bounds = array<i64: 1, 64, 320>}, {pipeline_mode = #tpu.pipeline_mode<synchronous>, transform_indices = @transform_7, window_bounds = array<i64: 1, 64, 64>}, {pipeline_mode = #tpu.pipeline_mode<synchronous>, transform_indices = @transform_8, window_bounds = array<i64: 1, 64, 128>}, {pipeline_mode = #tpu.pipeline_mode<synchronous>, transform_indices = @transform_9, window_bounds = array<i64: 1, 64, 64>}, {pipeline_mode = #tpu.pipeline_mode<synchronous>, transform_indices = @transform_10, window_bounds = array<i64: 64, 128>}, {pipeline_mode = #tpu.pipeline_mode<synchronous>, transform_indices = @transform_11, window_bounds = array<i64: 1, 128>}, {pipeline_mode = #tpu.pipeline_mode<synchronous>, transform_indices = @transform_12, window_bounds = array<i64: 32, 128>}]} {
    %c0 = arith.constant 0 : index
    %c0_0 = arith.constant 0 : index
    %0 = vector.load %arg1[%c0, %c0_0] : memref<32x768xf32, #tpu.memory_space<vmem>>, vector<32x768xf32>
    %c0_1 = arith.constant 0 : index
    %c0_2 = arith.constant 0 : index
    %1 = vector.load %arg4[%c0_1, %c0_2] : memref<32x128xf32, #tpu.memory_space<vmem>>, vector<32x128xf32>
    %c0_3 = arith.constant 0 : index
    %c0_4 = arith.constant 0 : index
    %2 = vector.load %arg5[%c0_3, %c0_4] : memref<32x128xf32, #tpu.memory_space<vmem>>, vector<32x128xf32>
    %c0_5 = arith.constant 0 : index
    %c0_6 = arith.constant 0 : index
    %3 = vector.load %arg6[%c0_5, %c0_6] : memref<32x32xf32, #tpu.memory_space<vmem>>, vector<32x32xf32>
    %4 = arith.truncf %0 : vector<32x768xf32> to vector<32x768xbf16>
    %c0_7 = arith.constant 0 : index
    %c0_8 = arith.constant 0 : index
    %5 = vector.load %arg2[%c0_7, %c0_8] : memref<768x64xbf16, #tpu.memory_space<vmem>>, vector<768x64xbf16>
    %cst = arith.constant dense<0.000000e+00> : vector<32x64xf32>
    %6 = tpu.matmul %4, %5, %cst {dimension_numbers = #tpu.dot_dimension_numbers<[1], [0], [0], [1], [0, 0, 1, 1], [], []>} : vector<32x768xbf16>, vector<768x64xbf16>, vector<32x64xf32> -> vector<32x64xf32>
    %c0_9 = arith.constant 0 : index
    %c0_10 = arith.constant 0 : index
    %7 = vector.load %arg3[%c0_9, %c0_10] : memref<1x64xf32, #tpu.memory_space<vmem>>, vector<1x64xf32>
    %8 = vector.broadcast %7 : vector<1x64xf32> to vector<32x64xf32>
    %9 = arith.addf %6, %8 : vector<32x64xf32>
    %10 = arith.mulf %9, %9 : vector<32x64xf32>
    %cst_11 = arith.constant dense<0.000000e+00> : vector<32xf32>
    %11 = vector.multi_reduction <add>, %10, %cst_11 [1] : vector<32x64xf32> to vector<32xf32>
    %12 = vector.shape_cast %11 : vector<32xf32> to vector<32x1xf32>
    %cst_12 = arith.constant 6.400000e+01 : f32
    %13 = vector.broadcast %cst_12 : f32 to vector<32x1xf32>
    %14 = arith.divf %12, %13 : vector<32x1xf32>
    %cst_13 = arith.constant 9.99999997E-7 : f32
    %15 = vector.broadcast %cst_13 : f32 to vector<32x1xf32>
    %16 = arith.addf %14, %15 : vector<32x1xf32>
    %17 = math.rsqrt %16 : vector<32x1xf32>
    %18 = vector.broadcast %17 : vector<32x1xf32> to vector<32x64xf32>
    %19 = arith.mulf %9, %18 : vector<32x64xf32>
    %20 = arith.truncf %19 : vector<32x64xf32> to vector<32x64xbf16>
    %c0_14 = arith.constant 0 : index
    %c0_15 = arith.constant 0 : index
    %c0_16 = arith.constant 0 : index
    %21 = vector.load %arg7[%c0_14, %c0_15, %c0_16] : memref<1x64x320xbf16, #tpu.memory_space<vmem>>, vector<1x64x320xbf16>
    %22 = vector.shape_cast %21 : vector<1x64x320xbf16> to vector<64x320xbf16>
    %cst_17 = arith.constant dense<0.000000e+00> : vector<32x320xf32>
    %23 = tpu.matmul %20, %22, %cst_17 {dimension_numbers = #tpu.dot_dimension_numbers<[1], [0], [0], [1], [0, 0, 1, 1], [], []>} : vector<32x64xbf16>, vector<64x320xbf16>, vector<32x320xf32> -> vector<32x320xf32>
    %24 = vector.extract_strided_slice %23 {offsets = [0, 0], sizes = [32, 128], strides = [1, 1]} : vector<32x320xf32> to vector<32x128xf32>
    %25 = arith.mulf %24, %1 : vector<32x128xf32>
    %26 = vector.extract_strided_slice %23 {offsets = [0, 128], sizes = [32, 128], strides = [1, 1]} : vector<32x320xf32> to vector<32x128xf32>
    %27 = arith.mulf %26, %2 : vector<32x128xf32>
    %28 = arith.addf %25, %27 : vector<32x128xf32>
    %29 = vector.extract_strided_slice %28 {offsets = [0, 0], sizes = [32, 64], strides = [1, 1]} : vector<32x128xf32> to vector<32x64xf32>
    %30 = vector.extract_strided_slice %28 {offsets = [0, 64], sizes = [32, 64], strides = [1, 1]} : vector<32x128xf32> to vector<32x64xf32>
    %31 = vector.extract_strided_slice %23 {offsets = [0, 256], sizes = [32, 64], strides = [1, 1]} : vector<32x320xf32> to vector<32x64xf32>
    %32 = vector.extract_strided_slice %29 {offsets = [0, 0], sizes = [32, 8], strides = [1, 1]} : vector<32x64xf32> to vector<32x8xf32>
    %33 = vector.extract_strided_slice %29 {offsets = [0, 8], sizes = [32, 8], strides = [1, 1]} : vector<32x64xf32> to vector<32x8xf32>
    %34 = vector.extract_strided_slice %29 {offsets = [0, 16], sizes = [32, 8], strides = [1, 1]} : vector<32x64xf32> to vector<32x8xf32>
    %35 = vector.extract_strided_slice %29 {offsets = [0, 24], sizes = [32, 8], strides = [1, 1]} : vector<32x64xf32> to vector<32x8xf32>
    %36 = vector.extract_strided_slice %29 {offsets = [0, 32], sizes = [32, 8], strides = [1, 1]} : vector<32x64xf32> to vector<32x8xf32>
    %37 = vector.extract_strided_slice %29 {offsets = [0, 40], sizes = [32, 8], strides = [1, 1]} : vector<32x64xf32> to vector<32x8xf32>
    %38 = vector.extract_strided_slice %29 {offsets = [0, 48], sizes = [32, 8], strides = [1, 1]} : vector<32x64xf32> to vector<32x8xf32>
    %39 = vector.extract_strided_slice %29 {offsets = [0, 56], sizes = [32, 8], strides = [1, 1]} : vector<32x64xf32> to vector<32x8xf32>
    %40 = vector.shape_cast %32 : vector<32x8xf32> to vector<1x32x8xf32>
    %41 = vector.shape_cast %33 : vector<32x8xf32> to vector<1x32x8xf32>
    %42 = vector.shape_cast %34 : vector<32x8xf32> to vector<1x32x8xf32>
    %43 = vector.shape_cast %35 : vector<32x8xf32> to vector<1x32x8xf32>
    %44 = vector.shape_cast %36 : vector<32x8xf32> to vector<1x32x8xf32>
    %45 = vector.shape_cast %37 : vector<32x8xf32> to vector<1x32x8xf32>
    %46 = vector.shape_cast %38 : vector<32x8xf32> to vector<1x32x8xf32>
    %47 = vector.shape_cast %39 : vector<32x8xf32> to vector<1x32x8xf32>
    %48 = tpu.concatenate %40, %41, %42, %43, %44, %45, %46, %47 in 0 : vector<1x32x8xf32>, vector<1x32x8xf32>, vector<1x32x8xf32>, vector<1x32x8xf32>, vector<1x32x8xf32>, vector<1x32x8xf32>, vector<1x32x8xf32>, vector<1x32x8xf32> -> vector<8x32x8xf32>
    %49 = vector.extract_strided_slice %30 {offsets = [0, 0], sizes = [32, 8], strides = [1, 1]} : vector<32x64xf32> to vector<32x8xf32>
    %50 = vector.extract_strided_slice %30 {offsets = [0, 8], sizes = [32, 8], strides = [1, 1]} : vector<32x64xf32> to vector<32x8xf32>
    %51 = vector.extract_strided_slice %30 {offsets = [0, 16], sizes = [32, 8], strides = [1, 1]} : vector<32x64xf32> to vector<32x8xf32>
    %52 = vector.extract_strided_slice %30 {offsets = [0, 24], sizes = [32, 8], strides = [1, 1]} : vector<32x64xf32> to vector<32x8xf32>
    %53 = vector.extract_strided_slice %30 {offsets = [0, 32], sizes = [32, 8], strides = [1, 1]} : vector<32x64xf32> to vector<32x8xf32>
    %54 = vector.extract_strided_slice %30 {offsets = [0, 40], sizes = [32, 8], strides = [1, 1]} : vector<32x64xf32> to vector<32x8xf32>
    %55 = vector.extract_strided_slice %30 {offsets = [0, 48], sizes = [32, 8], strides = [1, 1]} : vector<32x64xf32> to vector<32x8xf32>
    %56 = vector.extract_strided_slice %30 {offsets = [0, 56], sizes = [32, 8], strides = [1, 1]} : vector<32x64xf32> to vector<32x8xf32>
    %57 = vector.shape_cast %49 : vector<32x8xf32> to vector<1x32x8xf32>
    %58 = vector.shape_cast %50 : vector<32x8xf32> to vector<1x32x8xf32>
    %59 = vector.shape_cast %51 : vector<32x8xf32> to vector<1x32x8xf32>
    %60 = vector.shape_cast %52 : vector<32x8xf32> to vector<1x32x8xf32>
    %61 = vector.shape_cast %53 : vector<32x8xf32> to vector<1x32x8xf32>
    %62 = vector.shape_cast %54 : vector<32x8xf32> to vector<1x32x8xf32>
    %63 = vector.shape_cast %55 : vector<32x8xf32> to vector<1x32x8xf32>
    %64 = vector.shape_cast %56 : vector<32x8xf32> to vector<1x32x8xf32>
    %65 = tpu.concatenate %57, %58, %59, %60, %61, %62, %63, %64 in 0 : vector<1x32x8xf32>, vector<1x32x8xf32>, vector<1x32x8xf32>, vector<1x32x8xf32>, vector<1x32x8xf32>, vector<1x32x8xf32>, vector<1x32x8xf32>, vector<1x32x8xf32> -> vector<8x32x8xf32>
    %66 = vector.extract_strided_slice %31 {offsets = [0, 0], sizes = [32, 8], strides = [1, 1]} : vector<32x64xf32> to vector<32x8xf32>
    %67 = vector.extract_strided_slice %31 {offsets = [0, 8], sizes = [32, 8], strides = [1, 1]} : vector<32x64xf32> to vector<32x8xf32>
    %68 = vector.extract_strided_slice %31 {offsets = [0, 16], sizes = [32, 8], strides = [1, 1]} : vector<32x64xf32> to vector<32x8xf32>
    %69 = vector.extract_strided_slice %31 {offsets = [0, 24], sizes = [32, 8], strides = [1, 1]} : vector<32x64xf32> to vector<32x8xf32>
    %70 = vector.extract_strided_slice %31 {offsets = [0, 32], sizes = [32, 8], strides = [1, 1]} : vector<32x64xf32> to vector<32x8xf32>
    %71 = vector.extract_strided_slice %31 {offsets = [0, 40], sizes = [32, 8], strides = [1, 1]} : vector<32x64xf32> to vector<32x8xf32>
    %72 = vector.extract_strided_slice %31 {offsets = [0, 48], sizes = [32, 8], strides = [1, 1]} : vector<32x64xf32> to vector<32x8xf32>
    %73 = vector.extract_strided_slice %31 {offsets = [0, 56], sizes = [32, 8], strides = [1, 1]} : vector<32x64xf32> to vector<32x8xf32>
    %74 = vector.shape_cast %66 : vector<32x8xf32> to vector<1x32x8xf32>
    %75 = vector.shape_cast %67 : vector<32x8xf32> to vector<1x32x8xf32>
    %76 = vector.shape_cast %68 : vector<32x8xf32> to vector<1x32x8xf32>
    %77 = vector.shape_cast %69 : vector<32x8xf32> to vector<1x32x8xf32>
    %78 = vector.shape_cast %70 : vector<32x8xf32> to vector<1x32x8xf32>
    %79 = vector.shape_cast %71 : vector<32x8xf32> to vector<1x32x8xf32>
    %80 = vector.shape_cast %72 : vector<32x8xf32> to vector<1x32x8xf32>
    %81 = vector.shape_cast %73 : vector<32x8xf32> to vector<1x32x8xf32>
    %82 = tpu.concatenate %74, %75, %76, %77, %78, %79, %80, %81 in 0 : vector<1x32x8xf32>, vector<1x32x8xf32>, vector<1x32x8xf32>, vector<1x32x8xf32>, vector<1x32x8xf32>, vector<1x32x8xf32>, vector<1x32x8xf32>, vector<1x32x8xf32> -> vector<8x32x8xf32>
    %83 = arith.truncf %48 : vector<8x32x8xf32> to vector<8x32x8xbf16>
    %84 = arith.truncf %65 : vector<8x32x8xf32> to vector<8x32x8xbf16>
    "tpu.trace_start"() <{level = 10 : i32, message = "hqd,hkd->hqk"}> : () -> ()
    %cst_18 = arith.constant dense<0.000000e+00> : vector<8x32x32xf32>
    %85 = tpu.matmul %83, %84, %cst_18 {dimension_numbers = #tpu.dot_dimension_numbers<[2], [2], [1], [1], [0, 0, 0, 1, 1, 1], [0], [0]>} : vector<8x32x8xbf16>, vector<8x32x8xbf16>, vector<8x32x32xf32> -> vector<8x32x32xf32>
    "tpu.trace_stop"() : () -> ()
    %86 = vector.shape_cast %3 : vector<32x32xf32> to vector<1x32x32xf32>
    %87 = vector.broadcast %86 : vector<1x32x32xf32> to vector<8x32x32xf32>
    %88 = arith.addf %85, %87 : vector<8x32x32xf32>
    %cst_19 = arith.constant dense<0xFF800000> : vector<8x32xf32>
    %89 = vector.multi_reduction <maximumf>, %88, %cst_19 [2] : vector<8x32x32xf32> to vector<8x32xf32>
    %90 = vector.shape_cast %89 : vector<8x32xf32> to vector<8x32x1xf32>
    %91 = vector.broadcast %90 : vector<8x32x1xf32> to vector<8x32x32xf32>
    %92 = arith.subf %88, %91 : vector<8x32x32xf32>
    %93 = math.exp %92 : vector<8x32x32xf32>
    %cst_20 = arith.constant dense<0.000000e+00> : vector<8x32xf32>
    %94 = vector.multi_reduction <add>, %93, %cst_20 [2] : vector<8x32x32xf32> to vector<8x32xf32>
    %95 = vector.shape_cast %94 : vector<8x32xf32> to vector<8x32x1xf32>
    %96 = tpu.reciprocal %95 : vector<8x32x1xf32> -> vector<8x32x1xf32>
    %97 = vector.broadcast %96 : vector<8x32x1xf32> to vector<8x32x32xf32>
    %98 = arith.mulf %93, %97 : vector<8x32x32xf32>
    %99 = arith.truncf %98 : vector<8x32x32xf32> to vector<8x32x32xbf16>
    %100 = arith.truncf %82 : vector<8x32x8xf32> to vector<8x32x8xbf16>
    "tpu.trace_start"() <{level = 10 : i32, message = "hqk,hkd->hqd"}> : () -> ()
    %cst_21 = arith.constant dense<0.000000e+00> : vector<8x32x8xf32>
    %101 = tpu.matmul %99, %100, %cst_21 {dimension_numbers = #tpu.dot_dimension_numbers<[2], [1], [1], [2], [0, 0, 0, 1, 1, 2], [0], [0]>} : vector<8x32x32xbf16>, vector<8x32x8xbf16>, vector<8x32x8xf32> -> vector<8x32x8xf32>
    "tpu.trace_stop"() : () -> ()
    %102 = vector.extract_strided_slice %101 {offsets = [0, 0, 0], sizes = [1, 32, 8], strides = [1, 1, 1]} : vector<8x32x8xf32> to vector<1x32x8xf32>
    %103 = vector.shape_cast %102 : vector<1x32x8xf32> to vector<32x8xf32>
    %104 = vector.extract_strided_slice %101 {offsets = [1, 0, 0], sizes = [1, 32, 8], strides = [1, 1, 1]} : vector<8x32x8xf32> to vector<1x32x8xf32>
    %105 = vector.shape_cast %104 : vector<1x32x8xf32> to vector<32x8xf32>
    %106 = vector.extract_strided_slice %101 {offsets = [2, 0, 0], sizes = [1, 32, 8], strides = [1, 1, 1]} : vector<8x32x8xf32> to vector<1x32x8xf32>
    %107 = vector.shape_cast %106 : vector<1x32x8xf32> to vector<32x8xf32>
    %108 = vector.extract_strided_slice %101 {offsets = [3, 0, 0], sizes = [1, 32, 8], strides = [1, 1, 1]} : vector<8x32x8xf32> to vector<1x32x8xf32>
    %109 = vector.shape_cast %108 : vector<1x32x8xf32> to vector<32x8xf32>
    %110 = vector.extract_strided_slice %101 {offsets = [4, 0, 0], sizes = [1, 32, 8], strides = [1, 1, 1]} : vector<8x32x8xf32> to vector<1x32x8xf32>
    %111 = vector.shape_cast %110 : vector<1x32x8xf32> to vector<32x8xf32>
    %112 = vector.extract_strided_slice %101 {offsets = [5, 0, 0], sizes = [1, 32, 8], strides = [1, 1, 1]} : vector<8x32x8xf32> to vector<1x32x8xf32>
    %113 = vector.shape_cast %112 : vector<1x32x8xf32> to vector<32x8xf32>
    %114 = vector.extract_strided_slice %101 {offsets = [6, 0, 0], sizes = [1, 32, 8], strides = [1, 1, 1]} : vector<8x32x8xf32> to vector<1x32x8xf32>
    %115 = vector.shape_cast %114 : vector<1x32x8xf32> to vector<32x8xf32>
    %116 = vector.extract_strided_slice %101 {offsets = [7, 0, 0], sizes = [1, 32, 8], strides = [1, 1, 1]} : vector<8x32x8xf32> to vector<1x32x8xf32>
    %117 = vector.shape_cast %116 : vector<1x32x8xf32> to vector<32x8xf32>
    %118 = tpu.concatenate %103, %105, %107, %109, %111, %113, %115, %117 in 1 : vector<32x8xf32>, vector<32x8xf32>, vector<32x8xf32>, vector<32x8xf32>, vector<32x8xf32>, vector<32x8xf32>, vector<32x8xf32>, vector<32x8xf32> -> vector<32x64xf32>
    %119 = arith.truncf %118 : vector<32x64xf32> to vector<32x64xbf16>
    %c0_22 = arith.constant 0 : index
    %c0_23 = arith.constant 0 : index
    %c0_24 = arith.constant 0 : index
    %120 = vector.load %arg8[%c0_22, %c0_23, %c0_24] : memref<1x64x64xbf16, #tpu.memory_space<vmem>>, vector<1x64x64xbf16>
    %121 = vector.shape_cast %120 : vector<1x64x64xbf16> to vector<64x64xbf16>
    %cst_25 = arith.constant dense<0.000000e+00> : vector<32x64xf32>
    %122 = tpu.matmul %119, %121, %cst_25 {dimension_numbers = #tpu.dot_dimension_numbers<[1], [0], [0], [1], [0, 0, 1, 1], [], []>} : vector<32x64xbf16>, vector<64x64xbf16>, vector<32x64xf32> -> vector<32x64xf32>
    %123 = arith.addf %9, %122 : vector<32x64xf32>
    %124 = arith.mulf %123, %123 : vector<32x64xf32>
    %cst_26 = arith.constant dense<0.000000e+00> : vector<32xf32>
    %125 = vector.multi_reduction <add>, %124, %cst_26 [1] : vector<32x64xf32> to vector<32xf32>
    %126 = vector.shape_cast %125 : vector<32xf32> to vector<32x1xf32>
    %cst_27 = arith.constant 6.400000e+01 : f32
    %127 = vector.broadcast %cst_27 : f32 to vector<32x1xf32>
    %128 = arith.divf %126, %127 : vector<32x1xf32>
    %cst_28 = arith.constant 9.99999997E-7 : f32
    %129 = vector.broadcast %cst_28 : f32 to vector<32x1xf32>
    %130 = arith.addf %128, %129 : vector<32x1xf32>
    %131 = math.rsqrt %130 : vector<32x1xf32>
    %132 = vector.broadcast %131 : vector<32x1xf32> to vector<32x64xf32>
    %133 = arith.mulf %123, %132 : vector<32x64xf32>
    %134 = arith.truncf %133 : vector<32x64xf32> to vector<32x64xbf16>
    %c0_29 = arith.constant 0 : index
    %c0_30 = arith.constant 0 : index
    %c0_31 = arith.constant 0 : index
    %135 = vector.load %arg9[%c0_29, %c0_30, %c0_31] : memref<1x64x128xbf16, #tpu.memory_space<vmem>>, vector<1x64x128xbf16>
    %136 = vector.shape_cast %135 : vector<1x64x128xbf16> to vector<64x128xbf16>
    %cst_32 = arith.constant dense<0.000000e+00> : vector<32x128xf32>
    %137 = tpu.matmul %134, %136, %cst_32 {dimension_numbers = #tpu.dot_dimension_numbers<[1], [0], [0], [1], [0, 0, 1, 1], [], []>} : vector<32x64xbf16>, vector<64x128xbf16>, vector<32x128xf32> -> vector<32x128xf32>
    %138 = vector.extract_strided_slice %137 {offsets = [0, 0], sizes = [32, 64], strides = [1, 1]} : vector<32x128xf32> to vector<32x64xf32>
    %139 = vector.extract_strided_slice %137 {offsets = [0, 64], sizes = [32, 64], strides = [1, 1]} : vector<32x128xf32> to vector<32x64xf32>
    %140 = arith.negf %139 : vector<32x64xf32>
    %141 = math.exp %140 : vector<32x64xf32>
    %cst_33 = arith.constant 1.000000e+00 : f32
    %142 = vector.broadcast %cst_33 : f32 to vector<32x64xf32>
    %143 = arith.addf %142, %141 : vector<32x64xf32>
    %144 = arith.divf %142, %143 : vector<32x64xf32>
    %145 = arith.mulf %139, %144 : vector<32x64xf32>
    %146 = arith.mulf %138, %145 : vector<32x64xf32>
    %147 = arith.truncf %146 : vector<32x64xf32> to vector<32x64xbf16>
    %c0_34 = arith.constant 0 : index
    %c0_35 = arith.constant 0 : index
    %c0_36 = arith.constant 0 : index
    %148 = vector.load %arg10[%c0_34, %c0_35, %c0_36] : memref<1x64x64xbf16, #tpu.memory_space<vmem>>, vector<1x64x64xbf16>
    %149 = vector.shape_cast %148 : vector<1x64x64xbf16> to vector<64x64xbf16>
    %cst_37 = arith.constant dense<0.000000e+00> : vector<32x64xf32>
    %150 = tpu.matmul %147, %149, %cst_37 {dimension_numbers = #tpu.dot_dimension_numbers<[1], [0], [0], [1], [0, 0, 1, 1], [], []>} : vector<32x64xbf16>, vector<64x64xbf16>, vector<32x64xf32> -> vector<32x64xf32>
    %151 = arith.addf %123, %150 : vector<32x64xf32>
    %152 = arith.mulf %151, %151 : vector<32x64xf32>
    %cst_38 = arith.constant dense<0.000000e+00> : vector<32xf32>
    %153 = vector.multi_reduction <add>, %152, %cst_38 [1] : vector<32x64xf32> to vector<32xf32>
    %154 = vector.shape_cast %153 : vector<32xf32> to vector<32x1xf32>
    %cst_39 = arith.constant 6.400000e+01 : f32
    %155 = vector.broadcast %cst_39 : f32 to vector<32x1xf32>
    %156 = arith.divf %154, %155 : vector<32x1xf32>
    %cst_40 = arith.constant 9.99999997E-7 : f32
    %157 = vector.broadcast %cst_40 : f32 to vector<32x1xf32>
    %158 = arith.addf %156, %157 : vector<32x1xf32>
    %159 = math.rsqrt %158 : vector<32x1xf32>
    %160 = vector.broadcast %159 : vector<32x1xf32> to vector<32x64xf32>
    %161 = arith.mulf %151, %160 : vector<32x64xf32>
    %162 = arith.truncf %161 : vector<32x64xf32> to vector<32x64xbf16>
    %c0_41 = arith.constant 0 : index
    %c0_42 = arith.constant 0 : index
    %163 = vector.load %arg11[%c0_41, %c0_42] : memref<64x128xbf16, #tpu.memory_space<vmem>>, vector<64x128xbf16>
    %cst_43 = arith.constant dense<0.000000e+00> : vector<32x128xf32>
    %164 = tpu.matmul %162, %163, %cst_43 {dimension_numbers = #tpu.dot_dimension_numbers<[1], [0], [0], [1], [0, 0, 1, 1], [], []>} : vector<32x64xbf16>, vector<64x128xbf16>, vector<32x128xf32> -> vector<32x128xf32>
    %c0_44 = arith.constant 0 : index
    %c0_45 = arith.constant 0 : index
    %165 = vector.load %arg12[%c0_44, %c0_45] : memref<1x128xf32, #tpu.memory_space<vmem>>, vector<1x128xf32>
    %166 = vector.broadcast %165 : vector<1x128xf32> to vector<32x128xf32>
    %167 = arith.addf %164, %166 : vector<32x128xf32>
    %c0_46 = arith.constant 0 : index
    %c0_47 = arith.constant 0 : index
    %168 = vector.load %arg13[%c0_46, %c0_47] : memref<32x128xf32, #tpu.memory_space<vmem>>, vector<32x128xf32>
    tpu.vector_store %arg13[%c0_46, %c0_47], %167 {strides = array<i32>} : memref<32x128xf32, #tpu.memory_space<vmem>>, vector<32x128xf32>,
    return
  }
  func.func @transform_0(%arg0: i32) -> (i32, i32) {
    %c0_i32 = arith.constant 0 : i32
    %c0_i32_0 = arith.constant 0 : i32
    %c0_i32_1 = arith.constant 0 : i32
    return %c0_i32, %c0_i32_0 : i32, i32
  }
  func.func @transform_1(%arg0: i32) -> (i32, i32) {
    %c0_i32 = arith.constant 0 : i32
    %c0_i32_0 = arith.constant 0 : i32
    %c0_i32_1 = arith.constant 0 : i32
    return %c0_i32, %c0_i32_0 : i32, i32
  }
  func.func @transform_2(%arg0: i32) -> (i32, i32) {
    %c0_i32 = arith.constant 0 : i32
    %c0_i32_0 = arith.constant 0 : i32
    %c0_i32_1 = arith.constant 0 : i32
    return %c0_i32, %c0_i32_0 : i32, i32
  }
  func.func @transform_3(%arg0: i32) -> (i32, i32) {
    %c0_i32 = arith.constant 0 : i32
    %c0_i32_0 = arith.constant 0 : i32
    %c0_i32_1 = arith.constant 0 : i32
    return %c0_i32, %c0_i32_0 : i32, i32
  }
  func.func @transform_4(%arg0: i32) -> (i32, i32) {
    %c0_i32 = arith.constant 0 : i32
    %c0_i32_0 = arith.constant 0 : i32
    %c0_i32_1 = arith.constant 0 : i32
    return %c0_i32, %c0_i32_0 : i32, i32
  }
  func.func @transform_5(%arg0: i32) -> (i32, i32) {
    %c0_i32 = arith.constant 0 : i32
    %c0_i32_0 = arith.constant 0 : i32
    %c0_i32_1 = arith.constant 0 : i32
    return %c0_i32, %c0_i32_0 : i32, i32
  }
  func.func @transform_6(%arg0: i32) -> (i32, i32, i32) {
    %c0_i32 = arith.constant 0 : i32
    %c0_i32_0 = arith.constant 0 : i32
    %c0_i32_1 = arith.constant 0 : i32
    %c0_i32_2 = arith.constant 0 : i32
    return %c0_i32, %c0_i32_0, %c0_i32_1 : i32, i32, i32
  }
  func.func @transform_7(%arg0: i32) -> (i32, i32, i32) {
    %c0_i32 = arith.constant 0 : i32
    %c0_i32_0 = arith.constant 0 : i32
    %c0_i32_1 = arith.constant 0 : i32
    %c0_i32_2 = arith.constant 0 : i32
    return %c0_i32, %c0_i32_0, %c0_i32_1 : i32, i32, i32
  }
  func.func @transform_8(%arg0: i32) -> (i32, i32, i32) {
    %c0_i32 = arith.constant 0 : i32
    %c0_i32_0 = arith.constant 0 : i32
    %c0_i32_1 = arith.constant 0 : i32
    %c0_i32_2 = arith.constant 0 : i32
    return %c0_i32, %c0_i32_0, %c0_i32_1 : i32, i32, i32
  }
  func.func @transform_9(%arg0: i32) -> (i32, i32, i32) {
    %c0_i32 = arith.constant 0 : i32
    %c0_i32_0 = arith.constant 0 : i32
    %c0_i32_1 = arith.constant 0 : i32
    %c0_i32_2 = arith.constant 0 : i32
    return %c0_i32, %c0_i32_0, %c0_i32_1 : i32, i32, i32
  }
  func.func @transform_10(%arg0: i32) -> (i32, i32) {
    %c0_i32 = arith.constant 0 : i32
    %c0_i32_0 = arith.constant 0 : i32
    %c0_i32_1 = arith.constant 0 : i32
    return %c0_i32, %c0_i32_0 : i32, i32
  }
  func.func @transform_11(%arg0: i32) -> (i32, i32) {
    %c0_i32 = arith.constant 0 : i32
    %c0_i32_0 = arith.constant 0 : i32
    %c0_i32_1 = arith.constant 0 : i32
    return %c0_i32, %c0_i32_0 : i32, i32
  }
  func.func @transform_12(%arg0: i32) -> (i32, i32) {
    %c0_i32 = arith.constant 0 : i32
    %c0_i32_0 = arith.constant 0 : i32
    %c0_i32_1 = arith.constant 0 : i32
    return %c0_i32, %c0_i32_0 : i32, i32
  }
}

</mosaic_0001>

<llo_original>
// kernel: tpu_custom_call.1
$region0: #{tpu_custom_call.1}
  #allocation0 [shape = 'u32[]', space=smem, size = 0x4, offset = 0x4, fixed_abs, tag = 'smem constant byte address 0x4 - core index']
  #allocation1 [shape = 'u32[144,128]{1,0:T(1,128)}', space=vmem, size = 0x12000, scoped, tag = 'internal scratch']
  %s0 = inlined_call_operand.vmem [shape: f32[32,768], index: 0, kind: input, shape index: {}]
  %s1 = inlined_call_operand.vmem [shape: bf16[768,64], index: 1, kind: input, shape index: {}]
  %s2 = inlined_call_operand.vmem [shape: f32[1,64], index: 2, kind: input, shape index: {}]
  %s3 = inlined_call_operand.vmem [shape: f32[32,128], index: 3, kind: input, shape index: {}]
  %s4 = inlined_call_operand.vmem [shape: f32[32,128], index: 4, kind: input, shape index: {}]
  %s5 = inlined_call_operand.vmem [shape: f32[32,32], index: 5, kind: input, shape index: {}]
  %s6 = inlined_call_operand.vmem [shape: bf16[1,64,320], index: 6, kind: input, shape index: {}]
  %s7 = inlined_call_operand.vmem [shape: bf16[1,64,64], index: 7, kind: input, shape index: {}]
  %s8 = inlined_call_operand.vmem [shape: bf16[1,64,128], index: 8, kind: input, shape index: {}]
  %s9 = inlined_call_operand.vmem [shape: bf16[1,64,64], index: 9, kind: input, shape index: {}]
  %s10 = inlined_call_operand.vmem [shape: bf16[64,128], index: 10, kind: input, shape index: {}]
  %s11 = inlined_call_operand.vmem [shape: f32[1,128], index: 11, kind: input, shape index: {}]
  %s12 = inlined_call_operand.hbm [shape: f32[32,128], index: 12, kind: output, shape index: {}]
  %s13 = sld [smem:[#allocation0]]
  $region58: #{tpu_custom_call.1} parent=0
    _
  %s15 = ssub.s32 1, %s13
  %s16 = scalar_select 0, %s15, %s13
  $region1: #{tpu_custom_call.1} parent=0
    #allocation2 [shape = 'u8[16384]{0}', space=vmem, size = 0x4000, scoped, tag = 'output window, operand 0, single buffered']
    #allocation3 [shape = 's32[1]{0}', space=sflag, size = 0x4, scoped, tag = 'scoped memory for tpu_custom_call.1']
    %17 = vsyncpa [#allocation3], 0
    // Predicated region
    $region2: #{tpu_custom_call.1} parent=1 // pred_check
      _
    $region3: #{tpu_custom_call.1} parent=1 // pred_check_branch
      %19 = sbr.rel (0) target = $region5
    $region4: #{tpu_custom_call.1} parent=1 // pred_region
      _
    $region5: #{tpu_custom_call.1} parent=1 // pred_fallthru
      _
    // Predicated region
    $region6: #{tpu_custom_call.1} parent=1 // pred_check
      _
    $region7: #{tpu_custom_call.1} parent=1 // pred_check_branch
      %21 = sbr.rel (0) target = $region9
    $region8: #{tpu_custom_call.1} parent=1 // pred_region
      _
    $region9: #{tpu_custom_call.1} parent=1 // pred_fallthru
      _
    // Predicated region
    $region10: #{tpu_custom_call.1} parent=1 // pred_check
      _
    $region11: #{tpu_custom_call.1} parent=1 // pred_check_branch
      %23 = sbr.rel (0) target = $region13
    $region12: #{tpu_custom_call.1} parent=1 // pred_region
      _
    $region13: #{tpu_custom_call.1} parent=1 // pred_fallthru
      _
    // Predicated region
    $region14: #{tpu_custom_call.1} parent=1 // pred_check
      _
    $region15: #{tpu_custom_call.1} parent=1 // pred_check_branch
      %25 = sbr.rel (0) target = $region17
    $region16: #{tpu_custom_call.1} parent=1 // pred_region
      _
    $region17: #{tpu_custom_call.1} parent=1 // pred_fallthru
      _
    // Predicated region
    $region18: #{tpu_custom_call.1} parent=1 // pred_check
      _
    $region19: #{tpu_custom_call.1} parent=1 // pred_check_branch
      %27 = sbr.rel (0) target = $region21
    $region20: #{tpu_custom_call.1} parent=1 // pred_region
      _
    $region21: #{tpu_custom_call.1} parent=1 // pred_fallthru
      _
    // Predicated region
    $region22: #{tpu_custom_call.1} parent=1 // pred_check
      _
    $region23: #{tpu_custom_call.1} parent=1 // pred_check_branch
      %29 = sbr.rel (0) target = $region25
    $region24: #{tpu_custom_call.1} parent=1 // pred_region
      _
    $region25: #{tpu_custom_call.1} parent=1 // pred_fallthru
      _
    // Predicated region
    $region26: #{tpu_custom_call.1} parent=1 // pred_check
      _
    $region27: #{tpu_custom_call.1} parent=1 // pred_check_branch
      %31 = sbr.rel (0) target = $region29
    $region28: #{tpu_custom_call.1} parent=1 // pred_region
      _
    $region29: #{tpu_custom_call.1} parent=1 // pred_fallthru
      _
    // Predicated region
    $region30: #{tpu_custom_call.1} parent=1 // pred_check
      _
    $region31: #{tpu_custom_call.1} parent=1 // pred_check_branch
      %33 = sbr.rel (0) target = $region33
    $region32: #{tpu_custom_call.1} parent=1 // pred_region
      _
    $region33: #{tpu_custom_call.1} parent=1 // pred_fallthru
      _
    // Predicated region
    $region34: #{tpu_custom_call.1} parent=1 // pred_check
      _
    $region35: #{tpu_custom_call.1} parent=1 // pred_check_branch
      %35 = sbr.rel (0) target = $region37
    $region36: #{tpu_custom_call.1} parent=1 // pred_region
      _
    $region37: #{tpu_custom_call.1} parent=1 // pred_fallthru
      _
    // Predicated region
    $region38: #{tpu_custom_call.1} parent=1 // pred_check
      _
    $region39: #{tpu_custom_call.1} parent=1 // pred_check_branch
      %37 = sbr.rel (0) target = $region41
    $region40: #{tpu_custom_call.1} parent=1 // pred_region
      _
    $region41: #{tpu_custom_call.1} parent=1 // pred_fallthru
      _
    // Predicated region
    $region42: #{tpu_custom_call.1} parent=1 // pred_check
      _
    $region43: #{tpu_custom_call.1} parent=1 // pred_check_branch
      %39 = sbr.rel (0) target = $region45
    $region44: #{tpu_custom_call.1} parent=1 // pred_region
      _
    $region45: #{tpu_custom_call.1} parent=1 // pred_fallthru
      _
    // Predicated region
    $region46: #{tpu_custom_call.1} parent=1 // pred_check
      _
    $region47: #{tpu_custom_call.1} parent=1 // pred_check_branch
      %41 = sbr.rel (0) target = $region49
    $region48: #{tpu_custom_call.1} parent=1 // pred_region
      _
    $region49: #{tpu_custom_call.1} parent=1 // pred_fallthru
      _
    %v43 = vld [vmem:[%s0] sm:$0xff]
    %v44 = vld [vmem:[%s0 + $0x8] sm:$0xff]
    %v45 = vld [vmem:[%s0 + $0x10] sm:$0xff]
    %v46 = vld [vmem:[%s0 + $0x18] sm:$0xff]
    %v47 = vld [vmem:[%s0 + $0x20] sm:$0xff]
    %v48 = vld [vmem:[%s0 + $0x28] sm:$0xff]
    %v49 = vld [vmem:[%s0 + $0x30] sm:$0xff]
    %v50 = vld [vmem:[%s0 + $0x38] sm:$0xff]
    %v51 = vld [vmem:[%s0 + $0x40] sm:$0xff]
    %v52 = vld [vmem:[%s0 + $0x48] sm:$0xff]
    %v53 = vld [vmem:[%s0 + $0x50] sm:$0xff]
    %v54 = vld [vmem:[%s0 + $0x58] sm:$0xff]
    %v55 = vld [vmem:[%s0 + $0x60] sm:$0xff]
    %v56 = vld [vmem:[%s0 + $0x68] sm:$0xff]
    %v57 = vld [vmem:[%s0 + $0x70] sm:$0xff]
    %v58 = vld [vmem:[%s0 + $0x78] sm:$0xff]
    %v59 = vld [vmem:[%s0 + $0x80] sm:$0xff]
    %v60 = vld [vmem:[%s0 + $0x88] sm:$0xff]
    %v61 = vld [vmem:[%s0 + $0x90] sm:$0xff]
    %v62 = vld [vmem:[%s0 + $0x98] sm:$0xff]
    %v63 = vld [vmem:[%s0 + $0xa0] sm:$0xff]
    %v64 = vld [vmem:[%s0 + $0xa8] sm:$0xff]
    %v65 = vld [vmem:[%s0 + $0xb0] sm:$0xff]
    %v66 = vld [vmem:[%s0 + $0xb8] sm:$0xff]
    %v67 = vld [vmem:[%s3] sm:$0xff]
    %v68 = vld [vmem:[%s3 + $0x8] sm:$0xff]
    %v69 = vld [vmem:[%s3 + $0x10] sm:$0xff]
    %v70 = vld [vmem:[%s3 + $0x18] sm:$0xff]
    %v71 = vld [vmem:[%s4] sm:$0xff]
    %v72 = vld [vmem:[%s4 + $0x8] sm:$0xff]
    %v73 = vld [vmem:[%s4 + $0x10] sm:$0xff]
    %v74 = vld [vmem:[%s4 + $0x18] sm:$0xff]
    %v75 = vld [vmem:[%s5] sm:$0xff]
    %v76 = vld [vmem:[%s5 + $0x8] sm:$0xff]
    %v77 = vld [vmem:[%s5 + $0x10] sm:$0xff]
    %v78 = vld [vmem:[%s5 + $0x18] sm:$0xff]
    %v79 = vpack.c.bf16 %v49, %v43
    %v80 = vpack.c.bf16 %v50, %v44
    %v81 = vpack.c.bf16 %v51, %v45
    %v82 = vpack.c.bf16 %v52, %v46
    %v83 = vpack.c.bf16 %v53, %v47
    %v84 = vpack.c.bf16 %v54, %v48
    %v85 = vpack.c.bf16 %v61, %v55
    %v86 = vpack.c.bf16 %v62, %v56
    %v87 = vpack.c.bf16 %v63, %v57
    %v88 = vpack.c.bf16 %v64, %v58
    %v89 = vpack.c.bf16 %v65, %v59
    %v90 = vpack.c.bf16 %v66, %v60
    %v91 = vld [vmem:[%s1] sm:$0xf]
    %v92 = vld [vmem:[%s1 + $0x4] sm:$0xf]
    %v93 = vld [vmem:[%s1 + $0x8] sm:$0xf]
    %v94 = vld [vmem:[%s1 + $0xc] sm:$0xf]
    %v95 = vld [vmem:[%s1 + $0x10] sm:$0xf]
    %v96 = vld [vmem:[%s1 + $0x14] sm:$0xf]
    %v97 = vld [vmem:[%s1 + $0x18] sm:$0xf]
    %v98 = vld [vmem:[%s1 + $0x1c] sm:$0xf]
    %v99 = vld [vmem:[%s1 + $0x20] sm:$0xf]
    %v100 = vld [vmem:[%s1 + $0x24] sm:$0xf]
    %v101 = vld [vmem:[%s1 + $0x28] sm:$0xf]
    %v102 = vld [vmem:[%s1 + $0x2c] sm:$0xf]
    %v103 = vld [vmem:[%s1 + $0x30] sm:$0xf]
    %v104 = vld [vmem:[%s1 + $0x34] sm:$0xf]
    %v105 = vld [vmem:[%s1 + $0x38] sm:$0xf]
    %v106 = vld [vmem:[%s1 + $0x3c] sm:$0xf]
    %v107 = vld [vmem:[%s1 + $0x40] sm:$0xf]
    %v108 = vld [vmem:[%s1 + $0x44] sm:$0xf]
    %v109 = vld [vmem:[%s1 + $0x48] sm:$0xf]
    %v110 = vld [vmem:[%s1 + $0x4c] sm:$0xf]
    %v111 = vld [vmem:[%s1 + $0x50] sm:$0xf]
    %v112 = vld [vmem:[%s1 + $0x54] sm:$0xf]
    %v113 = vld [vmem:[%s1 + $0x58] sm:$0xf]
    %v114 = vld [vmem:[%s1 + $0x5c] sm:$0xf]
    %v115 = vld [vmem:[%s1 + $0x60] sm:$0xf]
    %v116 = vld [vmem:[%s1 + $0x64] sm:$0xf]
    %v117 = vld [vmem:[%s1 + $0x68] sm:$0xf]
    %v118 = vld [vmem:[%s1 + $0x6c] sm:$0xf]
    %v119 = vld [vmem:[%s1 + $0x70] sm:$0xf]
    %v120 = vld [vmem:[%s1 + $0x74] sm:$0xf]
    %v121 = vld [vmem:[%s1 + $0x78] sm:$0xf]
    %v122 = vld [vmem:[%s1 + $0x7c] sm:$0xf]
    %v123 = vld [vmem:[%s1 + $0x80] sm:$0xf]
    %v124 = vld [vmem:[%s1 + $0x84] sm:$0xf]
    %v125 = vld [vmem:[%s1 + $0x88] sm:$0xf]
    %v126 = vld [vmem:[%s1 + $0x8c] sm:$0xf]
    %v127 = vld [vmem:[%s1 + $0x90] sm:$0xf]
    %v128 = vld [vmem:[%s1 + $0x94] sm:$0xf]
    %v129 = vld [vmem:[%s1 + $0x98] sm:$0xf]
    %v130 = vld [vmem:[%s1 + $0x9c] sm:$0xf]
    %v131 = vld [vmem:[%s1 + $0xa0] sm:$0xf]
    %v132 = vld [vmem:[%s1 + $0xa4] sm:$0xf]
    %v133 = vld [vmem:[%s1 + $0xa8] sm:$0xf]
    %v134 = vld [vmem:[%s1 + $0xac] sm:$0xf]
    %v135 = vld [vmem:[%s1 + $0xb0] sm:$0xf]
    %v136 = vld [vmem:[%s1 + $0xb4] sm:$0xf]
    %v137 = vld [vmem:[%s1 + $0xb8] sm:$0xf]
    %v138 = vld [vmem:[%s1 + $0xbc] sm:$0xf]
    %v139 = vld [vmem:[%s1 + $0xc0] sm:$0xf]
    %v140 = vld [vmem:[%s1 + $0xc4] sm:$0xf]
    %v141 = vld [vmem:[%s1 + $0xc8] sm:$0xf]
    %v142 = vld [vmem:[%s1 + $0xcc] sm:$0xf]
    %v143 = vld [vmem:[%s1 + $0xd0] sm:$0xf]
    %v144 = vld [vmem:[%s1 + $0xd4] sm:$0xf]
    %v145 = vld [vmem:[%s1 + $0xd8] sm:$0xf]
    %v146 = vld [vmem:[%s1 + $0xdc] sm:$0xf]
    %v147 = vld [vmem:[%s1 + $0xe0] sm:$0xf]
    %v148 = vld [vmem:[%s1 + $0xe4] sm:$0xf]
    %v149 = vld [vmem:[%s1 + $0xe8] sm:$0xf]
    %v150 = vld [vmem:[%s1 + $0xec] sm:$0xf]
    %v151 = vld [vmem:[%s1 + $0xf0] sm:$0xf]
    %v152 = vld [vmem:[%s1 + $0xf4] sm:$0xf]
    %v153 = vld [vmem:[%s1 + $0xf8] sm:$0xf]
    %v154 = vld [vmem:[%s1 + $0xfc] sm:$0xf]
    %v155 = vld [vmem:[%s1 + $0x100] sm:$0xf]
    %v156 = vld [vmem:[%s1 + $0x104] sm:$0xf]
    %v157 = vld [vmem:[%s1 + $0x108] sm:$0xf]
    %v158 = vld [vmem:[%s1 + $0x10c] sm:$0xf]
    %v159 = vld [vmem:[%s1 + $0x110] sm:$0xf]
    %v160 = vld [vmem:[%s1 + $0x114] sm:$0xf]
    %v161 = vld [vmem:[%s1 + $0x118] sm:$0xf]
    %v162 = vld [vmem:[%s1 + $0x11c] sm:$0xf]
    %v163 = vld [vmem:[%s1 + $0x120] sm:$0xf]
    %v164 = vld [vmem:[%s1 + $0x124] sm:$0xf]
    %v165 = vld [vmem:[%s1 + $0x128] sm:$0xf]
    %v166 = vld [vmem:[%s1 + $0x12c] sm:$0xf]
    %v167 = vld [vmem:[%s1 + $0x130] sm:$0xf]
    %v168 = vld [vmem:[%s1 + $0x134] sm:$0xf]
    %v169 = vld [vmem:[%s1 + $0x138] sm:$0xf]
    %v170 = vld [vmem:[%s1 + $0x13c] sm:$0xf]
    %v171 = vld [vmem:[%s1 + $0x140] sm:$0xf]
    %v172 = vld [vmem:[%s1 + $0x144] sm:$0xf]
    %v173 = vld [vmem:[%s1 + $0x148] sm:$0xf]
    %v174 = vld [vmem:[%s1 + $0x14c] sm:$0xf]
    %v175 = vld [vmem:[%s1 + $0x150] sm:$0xf]
    %v176 = vld [vmem:[%s1 + $0x154] sm:$0xf]
    %v177 = vld [vmem:[%s1 + $0x158] sm:$0xf]
    %v178 = vld [vmem:[%s1 + $0x15c] sm:$0xf]
    %v179 = vld [vmem:[%s1 + $0x160] sm:$0xf]
    %v180 = vld [vmem:[%s1 + $0x164] sm:$0xf]
    %v181 = vld [vmem:[%s1 + $0x168] sm:$0xf]
    %v182 = vld [vmem:[%s1 + $0x16c] sm:$0xf]
    %v183 = vld [vmem:[%s1 + $0x170] sm:$0xf]
    %v184 = vld [vmem:[%s1 + $0x174] sm:$0xf]
    %v185 = vld [vmem:[%s1 + $0x178] sm:$0xf]
    %v186 = vld [vmem:[%s1 + $0x17c] sm:$0xf]
    %v187 = vld [vmem:[%s2] sm:$0x1]
    %v189 = vlaneseq
    %v190 = vshrl.u32 %v189, 7
    %v191 = vsub.s32 0, %v190
    %v192 = vrot.slane %v187, %v191
    %v290 = vunpack.c.l.b16 %v91
    %v291 = vunpack.c.l.b16 %v92
    %v292 = vunpack.c.l.b16 %v93
    %v293 = vunpack.c.l.b16 %v94
    %v294 = vunpack.c.l.b16 %v95
    %v295 = vunpack.c.l.b16 %v96
    %v296 = vunpack.c.l.b16 %v97
    %v297 = vunpack.c.l.b16 %v98
    %v298 = vunpack.c.l.b16 %v99
    %v299 = vunpack.c.l.b16 %v100
    %v300 = vunpack.c.l.b16 %v101
    %v301 = vunpack.c.l.b16 %v102
    %v302 = vunpack.c.l.b16 %v103
    %v303 = vunpack.c.l.b16 %v104
    %v304 = vunpack.c.l.b16 %v105
    %v305 = vunpack.c.l.b16 %v106
    %v306 = vunpack.c.l.b16 %v107
    %v307 = vunpack.c.l.b16 %v108
    %v308 = vunpack.c.l.b16 %v109
    %v309 = vunpack.c.l.b16 %v110
    %v310 = vunpack.c.l.b16 %v111
    %v311 = vunpack.c.l.b16 %v112
    %v312 = vunpack.c.l.b16 %v113
    %v313 = vunpack.c.l.b16 %v114
    %v314 = vunpack.c.l.b16 %v115
    %v315 = vunpack.c.l.b16 %v116
    %v316 = vunpack.c.l.b16 %v117
    %v317 = vunpack.c.l.b16 %v118
    %v318 = vunpack.c.l.b16 %v119
    %v319 = vunpack.c.l.b16 %v120
    %v320 = vunpack.c.l.b16 %v121
    %v321 = vunpack.c.l.b16 %v122
    %v322 = vunpack.c.l.b16 %v123
    %v323 = vunpack.c.l.b16 %v124
    %v324 = vunpack.c.l.b16 %v125
    %v325 = vunpack.c.l.b16 %v126
    %v326 = vunpack.c.l.b16 %v127
    %v327 = vunpack.c.l.b16 %v128
    %v328 = vunpack.c.l.b16 %v129
    %v329 = vunpack.c.l.b16 %v130
    %v330 = vunpack.c.l.b16 %v131
    %v331 = vunpack.c.l.b16 %v132
    %v332 = vunpack.c.l.b16 %v133
    %v333 = vunpack.c.l.b16 %v134
    %v334 = vunpack.c.l.b16 %v135
    %v335 = vunpack.c.l.b16 %v136
    %v336 = vunpack.c.l.b16 %v137
    %v337 = vunpack.c.l.b16 %v138
    %v338 = vunpack.c.l.b16 %v139
    %v339 = vunpack.c.l.b16 %v140
    %v340 = vunpack.c.l.b16 %v141
    %v341 = vunpack.c.l.b16 %v142
    %v342 = vunpack.c.l.b16 %v143
    %v343 = vunpack.c.l.b16 %v144
    %v344 = vunpack.c.l.b16 %v145
    %v345 = vunpack.c.l.b16 %v146
    %v346 = vunpack.c.l.b16 %v147
    %v347 = vunpack.c.l.b16 %v148
    %v348 = vunpack.c.l.b16 %v149
    %v349 = vunpack.c.l.b16 %v150
    %v350 = vunpack.c.l.b16 %v151
    %v351 = vunpack.c.l.b16 %v152
    %v352 = vunpack.c.l.b16 %v153
    %v353 = vunpack.c.l.b16 %v154
    %v354 = vunpack.c.l.b16 %v155
    %v355 = vunpack.c.l.b16 %v156
    %v356 = vunpack.c.l.b16 %v157
    %v357 = vunpack.c.l.b16 %v158
    %v358 = vunpack.c.l.b16 %v159
    %v359 = vunpack.c.l.b16 %v160
    %v360 = vunpack.c.l.b16 %v161
    %v361 = vunpack.c.l.b16 %v162
    %v362 = vunpack.c.l.b16 %v163
    %v363 = vunpack.c.l.b16 %v164
    %v364 = vunpack.c.l.b16 %v165
    %v365 = vunpack.c.l.b16 %v166
    %v366 = vunpack.c.l.b16 %v167
    %v367 = vunpack.c.l.b16 %v168
    %v368 = vunpack.c.l.b16 %v169
    %v369 = vunpack.c.l.b16 %v170
    %v370 = vunpack.c.l.b16 %v171
    %v371 = vunpack.c.l.b16 %v172
    %v372 = vunpack.c.l.b16 %v173
    %v373 = vunpack.c.l.b16 %v174
    %v374 = vunpack.c.l.b16 %v175
    %v375 = vunpack.c.l.b16 %v176
    %v376 = vunpack.c.l.b16 %v177
    %v377 = vunpack.c.l.b16 %v178
    %v378 = vunpack.c.l.b16 %v179
    %v379 = vunpack.c.l.b16 %v180
    %v380 = vunpack.c.l.b16 %v181
    %v381 = vunpack.c.l.b16 %v182
    %v382 = vunpack.c.l.b16 %v183
    %v383 = vunpack.c.l.b16 %v184
    %v384 = vunpack.c.l.b16 %v185
    %v385 = vunpack.c.l.b16 %v186
    %v386 = vpack.c.b16 %v291, %v290
    %v387 = vpack.c.b16 %v293, %v292
    %v388 = vpack.c.b16 %v295, %v294
    %v389 = vpack.c.b16 %v297, %v296
    %v390 = vpack.c.b16 %v299, %v298
    %v391 = vpack.c.b16 %v301, %v300
    %v392 = vpack.c.b16 %v303, %v302
    %v393 = vpack.c.b16 %v305, %v304
    %v394 = vpack.c.b16 %v307, %v306
    %v395 = vpack.c.b16 %v309, %v308
    %v396 = vpack.c.b16 %v311, %v310
    %v397 = vpack.c.b16 %v313, %v312
    %v398 = vpack.c.b16 %v315, %v314
    %v399 = vpack.c.b16 %v317, %v316
    %v400 = vpack.c.b16 %v319, %v318
    %v401 = vpack.c.b16 %v321, %v320
    %v402 = vpack.c.b16 %v323, %v322
    %v403 = vpack.c.b16 %v325, %v324
    %v404 = vpack.c.b16 %v327, %v326
    %v405 = vpack.c.b16 %v329, %v328
    %v406 = vpack.c.b16 %v331, %v330
    %v407 = vpack.c.b16 %v333, %v332
    %v408 = vpack.c.b16 %v335, %v334
    %v409 = vpack.c.b16 %v337, %v336
    %v410 = vpack.c.b16 %v339, %v338
    %v411 = vpack.c.b16 %v341, %v340
    %v412 = vpack.c.b16 %v343, %v342
    %v413 = vpack.c.b16 %v345, %v344
    %v414 = vpack.c.b16 %v347, %v346
    %v415 = vpack.c.b16 %v349, %v348
    %v416 = vpack.c.b16 %v351, %v350
    %v417 = vpack.c.b16 %v353, %v352
    %v418 = vpack.c.b16 %v355, %v354
    %v419 = vpack.c.b16 %v357, %v356
    %v420 = vpack.c.b16 %v359, %v358
    %v421 = vpack.c.b16 %v361, %v360
    %v422 = vpack.c.b16 %v363, %v362
    %v423 = vpack.c.b16 %v365, %v364
    %v424 = vpack.c.b16 %v367, %v366
    %v425 = vpack.c.b16 %v369, %v368
    %v426 = vpack.c.b16 %v371, %v370
    %v427 = vpack.c.b16 %v373, %v372
    %v428 = vpack.c.b16 %v375, %v374
    %v429 = vpack.c.b16 %v377, %v376
    %v430 = vpack.c.b16 %v379, %v378
    %v431 = vpack.c.b16 %v381, %v380
    %v432 = vpack.c.b16 %v383, %v382
    %v433 = vpack.c.b16 %v385, %v384
    %482 = vmatprep.subr.bf16.mxu0 0
    %483 = vmatpush1.bf16.msra.mxu0 %v393
    %484 = vmatprep.subr.bf16.mxu0 0
    %485 = vmatpush1.bf16.msra.mxu0 %v392
    %486 = vmatprep.subr.bf16.mxu0 0
    %487 = vmatpush1.bf16.msra.mxu0 %v391
    %488 = vmatprep.subr.bf16.mxu0 0
    %489 = vmatpush1.bf16.msra.mxu0 %v390
    %490 = vmatprep.subr.bf16.mxu0 0
    %491 = vmatpush1.bf16.msra.mxu0 %v389
    %492 = vmatprep.subr.bf16.mxu0 0
    %493 = vmatpush1.bf16.msra.mxu0 %v388
    %494 = vmatprep.subr.bf16.mxu0 0
    %495 = vmatpush1.bf16.msra.mxu0 %v387
    %496 = vmatprep.subr.bf16.mxu0 0
    %497 = vmatpush1.bf16.msra.mxu0 %v386
    %498 = vmatprep.subr.bf16.mxu0 0
    %499 = vmatpush2.bf16.msra.mxu0 %v401
    %500 = vmatprep.subr.bf16.mxu0 0
    %501 = vmatpush2.bf16.msra.mxu0 %v400
    %502 = vmatprep.subr.bf16.mxu0 0
    %503 = vmatpush2.bf16.msra.mxu0 %v399
    %504 = vmatprep.subr.bf16.mxu0 0
    %505 = vmatpush2.bf16.msra.mxu0 %v398
    %506 = vmatprep.subr.bf16.mxu0 0
    %507 = vmatpush2.bf16.msra.mxu0 %v397
    %508 = vmatprep.subr.bf16.mxu0 0
    %509 = vmatpush2.bf16.msra.mxu0 %v396
    %510 = vmatprep.subr.bf16.mxu0 0
    %511 = vmatpush2.bf16.msra.mxu0 %v395
    %512 = vmatprep.subr.bf16.mxu0 0
    %513 = vmatpush2.bf16.msra.mxu0 %v394
    %514 = vmatprep.mubr.bf16.mxu0 %v80
    %515 = vmatmul.mubr.bf16.gmra.mxu0 %v79
    %v516 = vpop.f32.mrf.mxu0
    %v517 = vadd.f32 %v192, %v516
    %v518 = vpop.f32.mrf.mxu0
    %v519 = vpop.f32.mrf.mxu0
    %v520 = vadd.f32 %v192, %v519
    %v521 = vpop.f32.mrf.mxu0
    %522 = vmatprep.mubr.bf16.mxu0 %v86
    %523 = vmatmul.mubr.bf16.gmra.mxu0 %v85
    %v524 = vpop.f32.mrf.mxu0
    %v525 = vadd.f32 %v192, %v524
    %v526 = vpop.f32.mrf.mxu0
    %v527 = vpop.f32.mrf.mxu0
    %v528 = vadd.f32 %v192, %v527
    %v529 = vpop.f32.mrf.mxu0
    %530 = vdwg.mxu0
    %531 = vmatprep.subr.bf16.mxu0 0
    %532 = vmatpush1.bf16.msra.mxu0 %v409
    %533 = vmatprep.subr.bf16.mxu0 0
    %534 = vmatpush1.bf16.msra.mxu0 %v408
    %535 = vmatprep.subr.bf16.mxu0 0
    %536 = vmatpush1.bf16.msra.mxu0 %v407
    %537 = vmatprep.subr.bf16.mxu0 0
    %538 = vmatpush1.bf16.msra.mxu0 %v406
    %539 = vmatprep.subr.bf16.mxu0 0
    %540 = vmatpush1.bf16.msra.mxu0 %v405
    %541 = vmatprep.subr.bf16.mxu0 0
    %542 = vmatpush1.bf16.msra.mxu0 %v404
    %543 = vmatprep.subr.bf16.mxu0 0
    %544 = vmatpush1.bf16.msra.mxu0 %v403
    %545 = vmatprep.subr.bf16.mxu0 0
    %546 = vmatpush1.bf16.msra.mxu0 %v402
    %547 = vmatprep.subr.bf16.mxu0 0
    %548 = vmatpush2.bf16.msra.mxu0 %v417
    %549 = vmatprep.subr.bf16.mxu0 0
    %550 = vmatpush2.bf16.msra.mxu0 %v416
    %551 = vmatprep.subr.bf16.mxu0 0
    %552 = vmatpush2.bf16.msra.mxu0 %v415
    %553 = vmatprep.subr.bf16.mxu0 0
    %554 = vmatpush2.bf16.msra.mxu0 %v414
    %555 = vmatprep.subr.bf16.mxu0 0
    %556 = vmatpush2.bf16.msra.mxu0 %v413
    %557 = vmatprep.subr.bf16.mxu0 0
    %558 = vmatpush2.bf16.msra.mxu0 %v412
    %559 = vmatprep.subr.bf16.mxu0 0
    %560 = vmatpush2.bf16.msra.mxu0 %v411
    %561 = vmatprep.subr.bf16.mxu0 0
    %562 = vmatpush2.bf16.msra.mxu0 %v410
    %563 = vmatprep.mubr.bf16.mxu0 %v82
    %564 = vmatmul.mubr.bf16.gmra.mxu0 %v81
    %v565 = vpop.f32.mrf.mxu0
    %v566 = vadd.f32 %v517, %v565
    %v567 = vpop.f32.mrf.mxu0
    %v568 = vpop.f32.mrf.mxu0
    %v569 = vadd.f32 %v520, %v568
    %v570 = vpop.f32.mrf.mxu0
    %571 = vmatprep.mubr.bf16.mxu0 %v88
    %572 = vmatmul.mubr.bf16.gmra.mxu0 %v87
    %v573 = vpop.f32.mrf.mxu0
    %v574 = vadd.f32 %v525, %v573
    %v575 = vpop.f32.mrf.mxu0
    %v576 = vpop.f32.mrf.mxu0
    %v577 = vadd.f32 %v528, %v576
    %v578 = vpop.f32.mrf.mxu0
    %579 = vdwg.mxu0
    %580 = vmatprep.subr.bf16.mxu0 0
    %581 = vmatpush1.bf16.msra.mxu0 %v425
    %582 = vmatprep.subr.bf16.mxu0 0
    %583 = vmatpush1.bf16.msra.mxu0 %v424
    %584 = vmatprep.subr.bf16.mxu0 0
    %585 = vmatpush1.bf16.msra.mxu0 %v423
    %586 = vmatprep.subr.bf16.mxu0 0
    %587 = vmatpush1.bf16.msra.mxu0 %v422
    %588 = vmatprep.subr.bf16.mxu0 0
    %589 = vmatpush1.bf16.msra.mxu0 %v421
    %590 = vmatprep.subr.bf16.mxu0 0
    %591 = vmatpush1.bf16.msra.mxu0 %v420
    %592 = vmatprep.subr.bf16.mxu0 0
    %593 = vmatpush1.bf16.msra.mxu0 %v419
    %594 = vmatprep.subr.bf16.mxu0 0
    %595 = vmatpush1.bf16.msra.mxu0 %v418
    %596 = vmatprep.subr.bf16.mxu0 0
    %597 = vmatpush2.bf16.msra.mxu0 %v433
    %598 = vmatprep.subr.bf16.mxu0 0
    %599 = vmatpush2.bf16.msra.mxu0 %v432
    %600 = vmatprep.subr.bf16.mxu0 0
    %601 = vmatpush2.bf16.msra.mxu0 %v431
    %602 = vmatprep.subr.bf16.mxu0 0
    %603 = vmatpush2.bf16.msra.mxu0 %v430
    %604 = vmatprep.subr.bf16.mxu0 0
    %605 = vmatpush2.bf16.msra.mxu0 %v429
    %606 = vmatprep.subr.bf16.mxu0 0
    %607 = vmatpush2.bf16.msra.mxu0 %v428
    %608 = vmatprep.subr.bf16.mxu0 0
    %609 = vmatpush2.bf16.msra.mxu0 %v427
    %610 = vmatprep.subr.bf16.mxu0 0
    %611 = vmatpush2.bf16.msra.mxu0 %v426
    %612 = vmatprep.mubr.bf16.mxu0 %v84
    %613 = vmatmul.mubr.bf16.gmra.mxu0 %v83
    %v614 = vpop.f32.mrf.mxu0
    %v615 = vadd.f32 %v566, %v614
    %v616 = vpop.f32.mrf.mxu0
    %v617 = vpop.f32.mrf.mxu0
    %v618 = vadd.f32 %v569, %v617
    %v619 = vpop.f32.mrf.mxu0
    %620 = vmatprep.mubr.bf16.mxu0 %v90
    %621 = vmatmul.mubr.bf16.gmra.mxu0 %v89
    %v622 = vpop.f32.mrf.mxu0
    %v623 = vadd.f32 %v574, %v622
    %v624 = vpop.f32.mrf.mxu0
    %v625 = vpop.f32.mrf.mxu0
    %v626 = vadd.f32 %v577, %v625
    %v627 = vpop.f32.mrf.mxu0
    %628 = vdwg.mxu0
    %v629 = vmul.f32 %v615, %v615
    %v630 = vmul.f32 %v618, %v618
    %v631 = vmul.f32 %v623, %v623
    %v632 = vmul.f32 %v626, %v626
    %vm633 = vcmask 523264
    %v634 = vsel %vm633, %v629, 0.0
    %635 = vadd.xlane.f32.xlu0 %v634
    %v636 = vpop.xlane.xlu0 %635
    %v637 = vsel %vm633, %v630, 0.0
    %638 = vadd.xlane.f32.xlu0 %v637
    %v639 = vpop.xlane.xlu0 %638
    %v640 = vsel %vm633, %v631, 0.0
    %641 = vadd.xlane.f32.xlu0 %v640
    %v642 = vpop.xlane.xlu0 %641
    %v643 = vsel %vm633, %v632, 0.0
    %644 = vadd.xlane.f32.xlu0 %v643
    %v645 = vpop.xlane.xlu0 %644
    %v646 = vrcp.pop 64.0
    %v647 = vmul.f32 %v636, %v646
    %v648 = vmul.f32 %v639, %v646
    %v649 = vmul.f32 %v642, %v646
    %v650 = vmul.f32 %v645, %v646
    %v651 = vadd.f32 %v647, 1e-06
    %v652 = vadd.f32 %v648, 1e-06
    %v653 = vadd.f32 %v649, 1e-06
    %v654 = vadd.f32 %v650, 1e-06
    %v655 = vrsqrt.pop %v651
    %v656 = vrsqrt.pop %v652
    %v657 = vrsqrt.pop %v653
    %v658 = vrsqrt.pop %v654
    %v659 = vmul.f32 %v615, %v655
    %v660 = vmul.f32 %v618, %v656
    %v661 = vmul.f32 %v623, %v657
    %v662 = vmul.f32 %v626, %v658
    %v663 = vpack.c.bf16 %v660, %v659
    %v664 = vpack.c.bf16 %v662, %v661
    %v665 = vld [vmem:[%s6] sm:$0xff]
    %v666 = vld [vmem:[%s6 + $0x8] sm:$0xf]
    %v667 = vld [vmem:[%s6 + $0xc] sm:$0xff]
    %v668 = vld [vmem:[%s6 + $0x14] sm:$0xf]
    %v669 = vld [vmem:[%s6 + $0x18] sm:$0xff]
    %v670 = vld [vmem:[%s6 + $0x20] sm:$0xf]
    %v671 = vld [vmem:[%s6 + $0x24] sm:$0xff]
    %v672 = vld [vmem:[%s6 + $0x2c] sm:$0xf]
    %v673 = vld [vmem:[%s6 + $0x30] sm:$0xff]
    %v674 = vld [vmem:[%s6 + $0x38] sm:$0xf]
    %v675 = vld [vmem:[%s6 + $0x3c] sm:$0xff]
    %v676 = vld [vmem:[%s6 + $0x44] sm:$0xf]
    %v677 = vld [vmem:[%s6 + $0x48] sm:$0xff]
    %v678 = vld [vmem:[%s6 + $0x50] sm:$0xf]
    %v679 = vld [vmem:[%s6 + $0x54] sm:$0xff]
    %v680 = vld [vmem:[%s6 + $0x5c] sm:$0xf]
    %v697 = vunpack.c.l.b16 %v665
    %v698 = vunpack.c.h.b16 %v665
    %v699 = vunpack.c.l.b16 %v666
    %v700 = vunpack.c.l.b16 %v667
    %v701 = vunpack.c.h.b16 %v667
    %v702 = vunpack.c.l.b16 %v668
    %v703 = vunpack.c.l.b16 %v669
    %v704 = vunpack.c.h.b16 %v669
    %v705 = vunpack.c.l.b16 %v670
    %v706 = vunpack.c.l.b16 %v671
    %v707 = vunpack.c.h.b16 %v671
    %v708 = vunpack.c.l.b16 %v672
    %v709 = vunpack.c.l.b16 %v673
    %v710 = vunpack.c.h.b16 %v673
    %v711 = vunpack.c.l.b16 %v674
    %v712 = vunpack.c.l.b16 %v675
    %v713 = vunpack.c.h.b16 %v675
    %v714 = vunpack.c.l.b16 %v676
    %v715 = vunpack.c.l.b16 %v677
    %v716 = vunpack.c.h.b16 %v677
    %v717 = vunpack.c.l.b16 %v678
    %v718 = vunpack.c.l.b16 %v679
    %v719 = vunpack.c.h.b16 %v679
    %v720 = vunpack.c.l.b16 %v680
    %v721 = vpack.c.b16 %v700, %v697
    %v722 = vpack.c.b16 %v701, %v698
    %v723 = vpack.c.b16 %v702, %v699
    %v724 = vpack.c.b16 %v706, %v703
    %v725 = vpack.c.b16 %v707, %v704
    %v726 = vpack.c.b16 %v708, %v705
    %v727 = vpack.c.b16 %v712, %v709
    %v728 = vpack.c.b16 %v713, %v710
    %v729 = vpack.c.b16 %v714, %v711
    %v730 = vpack.c.b16 %v718, %v715
    %v731 = vpack.c.b16 %v719, %v716
    %v732 = vpack.c.b16 %v720, %v717
    %v746 = vsel %vm633, %v663, 0
    %v749 = vsel %vm633, %v664, 0
    %751 = vmatprep.subr.bf16.mxu0 0
    %752 = vmatpush1.bf16.msra.mxu0 0
    %753 = vmatprep.subr.bf16.mxu0 0
    %754 = vmatpush1.bf16.msra.mxu0 0
    %755 = vmatprep.subr.bf16.mxu0 0
    %756 = vmatpush1.bf16.msra.mxu0 0
    %757 = vmatprep.subr.bf16.mxu0 0
    %758 = vmatpush1.bf16.msra.mxu0 0
    %759 = vmatprep.subr.bf16.mxu0 %v731
    %760 = vmatpush1.bf16.msra.mxu0 %v730
    %761 = vmatprep.subr.bf16.mxu0 %v728
    %762 = vmatpush1.bf16.msra.mxu0 %v727
    %763 = vmatprep.subr.bf16.mxu0 %v725
    %764 = vmatpush1.bf16.msra.mxu0 %v724
    %765 = vmatprep.subr.bf16.mxu0 %v722
    %766 = vmatpush1.bf16.msra.mxu0 %v721
    %767 = vmatprep.subr.bf16.mxu0 0
    %768 = vmatpush2.bf16.msra.mxu0 0
    %769 = vmatprep.subr.bf16.mxu0 0
    %770 = vmatpush2.bf16.msra.mxu0 0
    %771 = vmatprep.subr.bf16.mxu0 0
    %772 = vmatpush2.bf16.msra.mxu0 0
    %773 = vmatprep.subr.bf16.mxu0 0
    %774 = vmatpush2.bf16.msra.mxu0 0
    %775 = vmatprep.subr.bf16.mxu0 0
    %776 = vmatpush2.bf16.msra.mxu0 0
    %777 = vmatprep.subr.bf16.mxu0 0
    %778 = vmatpush2.bf16.msra.mxu0 0
    %779 = vmatprep.subr.bf16.mxu0 0
    %780 = vmatpush2.bf16.msra.mxu0 0
    %781 = vmatprep.subr.bf16.mxu0 0
    %782 = vmatpush2.bf16.msra.mxu0 0
    %783 = vmatprep.mubr.bf16.mxu0 0
    %784 = vmatmul.mubr.bf16.gmra.mxu0 %v746
    %v785 = vpop.f32.mrf.mxu0
    %v786 = vadd.f32 0.0, %v785
    %v787 = vpop.f32.mrf.mxu0
    %v788 = vadd.f32 0.0, %v787
    %v789 = vpop.f32.mrf.mxu0
    %v790 = vadd.f32 0.0, %v789
    %v791 = vpop.f32.mrf.mxu0
    %v792 = vadd.f32 0.0, %v791
    %793 = vmatprep.mubr.bf16.mxu0 0
    %794 = vmatmul.mubr.bf16.gmra.mxu0 %v749
    %v795 = vpop.f32.mrf.mxu0
    %v796 = vadd.f32 0.0, %v795
    %v797 = vpop.f32.mrf.mxu0
    %v798 = vadd.f32 0.0, %v797
    %v799 = vpop.f32.mrf.mxu0
    %v800 = vadd.f32 0.0, %v799
    %v801 = vpop.f32.mrf.mxu0
    %v802 = vadd.f32 0.0, %v801
    %803 = vdwg.mxu0
    %804 = vmatprep.subr.bf16.mxu0 0
    %805 = vmatpush1.bf16.msra.mxu0 0
    %806 = vmatprep.subr.bf16.mxu0 0
    %807 = vmatpush1.bf16.msra.mxu0 0
    %808 = vmatprep.subr.bf16.mxu0 0
    %809 = vmatpush1.bf16.msra.mxu0 0
    %810 = vmatprep.subr.bf16.mxu0 0
    %811 = vmatpush1.bf16.msra.mxu0 0
    %812 = vmatprep.subr.bf16.mxu0 0
    %813 = vmatpush1.bf16.msra.mxu0 %v732
    %814 = vmatprep.subr.bf16.mxu0 0
    %815 = vmatpush1.bf16.msra.mxu0 %v729
    %816 = vmatprep.subr.bf16.mxu0 0
    %817 = vmatpush1.bf16.msra.mxu0 %v726
    %818 = vmatprep.subr.bf16.mxu0 0
    %819 = vmatpush1.bf16.msra.mxu0 %v723
    %820 = vmatprep.subr.bf16.mxu0 0
    %821 = vmatpush2.bf16.msra.mxu0 0
    %822 = vmatprep.subr.bf16.mxu0 0
    %823 = vmatpush2.bf16.msra.mxu0 0
    %824 = vmatprep.subr.bf16.mxu0 0
    %825 = vmatpush2.bf16.msra.mxu0 0
    %826 = vmatprep.subr.bf16.mxu0 0
    %827 = vmatpush2.bf16.msra.mxu0 0
    %828 = vmatprep.subr.bf16.mxu0 0
    %829 = vmatpush2.bf16.msra.mxu0 0
    %830 = vmatprep.subr.bf16.mxu0 0
    %831 = vmatpush2.bf16.msra.mxu0 0
    %832 = vmatprep.subr.bf16.mxu0 0
    %833 = vmatpush2.bf16.msra.mxu0 0
    %834 = vmatprep.subr.bf16.mxu0 0
    %835 = vmatpush2.bf16.msra.mxu0 0
    %836 = vmatprep.mubr.bf16.mxu0 0
    %837 = vmatmul.mubr.bf16.gmra.mxu0 %v746
    %v838 = vpop.f32.mrf.mxu0
    %v839 = vadd.f32 0.0, %v838
    %v840 = vpop.f32.mrf.mxu0
    %v841 = vpop.f32.mrf.mxu0
    %v842 = vadd.f32 0.0, %v841
    %v843 = vpop.f32.mrf.mxu0
    %844 = vmatprep.mubr.bf16.mxu0 0
    %845 = vmatmul.mubr.bf16.gmra.mxu0 %v749
    %v846 = vpop.f32.mrf.mxu0
    %v847 = vadd.f32 0.0, %v846
    %v848 = vpop.f32.mrf.mxu0
    %v849 = vpop.f32.mrf.mxu0
    %v850 = vadd.f32 0.0, %v849
    %v851 = vpop.f32.mrf.mxu0
    %852 = vdwg.mxu0
    %v853 = vmul.f32 %v786, %v67
    %v854 = vmul.f32 %v790, %v68
    %v855 = vmul.f32 %v796, %v69
    %v856 = vmul.f32 %v800, %v70
    %v857 = vmul.f32 %v788, %v71
    %v858 = vmul.f32 %v792, %v72
    %v859 = vmul.f32 %v798, %v73
    %v860 = vmul.f32 %v802, %v74
    %v861 = vadd.f32 %v853, %v857
    %v862 = vadd.f32 %v854, %v858
    %v863 = vadd.f32 %v855, %v859
    %v864 = vadd.f32 %v856, %v860
    %869 = vrot.lane.b32.xlu0 %v861, 120
    %v870 = vpop.permute.xlu0 %869
    %871 = vrot.lane.b32.xlu0 %v862, 120
    %v872 = vpop.permute.xlu0 %871
    %873 = vrot.lane.b32.xlu0 %v863, 120
    %v874 = vpop.permute.xlu0 %873
    %875 = vrot.lane.b32.xlu0 %v864, 120
    %v876 = vpop.permute.xlu0 %875
    %881 = vrot.lane.b32.xlu0 %v861, 112
    %v882 = vpop.permute.xlu0 %881
    %883 = vrot.lane.b32.xlu0 %v862, 112
    %v884 = vpop.permute.xlu0 %883
    %885 = vrot.lane.b32.xlu0 %v863, 112
    %v886 = vpop.permute.xlu0 %885
    %887 = vrot.lane.b32.xlu0 %v864, 112
    %v888 = vpop.permute.xlu0 %887
    %893 = vrot.lane.b32.xlu0 %v861, 104
    %v894 = vpop.permute.xlu0 %893
    %895 = vrot.lane.b32.xlu0 %v862, 104
    %v896 = vpop.permute.xlu0 %895
    %897 = vrot.lane.b32.xlu0 %v863, 104
    %v898 = vpop.permute.xlu0 %897
    %899 = vrot.lane.b32.xlu0 %v864, 104
    %v900 = vpop.permute.xlu0 %899
    %905 = vrot.lane.b32.xlu0 %v861, 96
    %v906 = vpop.permute.xlu0 %905
    %907 = vrot.lane.b32.xlu0 %v862, 96
    %v908 = vpop.permute.xlu0 %907
    %909 = vrot.lane.b32.xlu0 %v863, 96
    %v910 = vpop.permute.xlu0 %909
    %911 = vrot.lane.b32.xlu0 %v864, 96
    %v912 = vpop.permute.xlu0 %911
    %917 = vrot.lane.b32.xlu0 %v861, 88
    %v918 = vpop.permute.xlu0 %917
    %919 = vrot.lane.b32.xlu0 %v862, 88
    %v920 = vpop.permute.xlu0 %919
    %921 = vrot.lane.b32.xlu0 %v863, 88
    %v922 = vpop.permute.xlu0 %921
    %923 = vrot.lane.b32.xlu0 %v864, 88
    %v924 = vpop.permute.xlu0 %923
    %929 = vrot.lane.b32.xlu0 %v861, 80
    %v930 = vpop.permute.xlu0 %929
    %931 = vrot.lane.b32.xlu0 %v862, 80
    %v932 = vpop.permute.xlu0 %931
    %933 = vrot.lane.b32.xlu0 %v863, 80
    %v934 = vpop.permute.xlu0 %933
    %935 = vrot.lane.b32.xlu0 %v864, 80
    %v936 = vpop.permute.xlu0 %935
    %941 = vrot.lane.b32.xlu0 %v861, 72
    %v942 = vpop.permute.xlu0 %941
    %943 = vrot.lane.b32.xlu0 %v862, 72
    %v944 = vpop.permute.xlu0 %943
    %945 = vrot.lane.b32.xlu0 %v863, 72
    %v946 = vpop.permute.xlu0 %945
    %947 = vrot.lane.b32.xlu0 %v864, 72
    %v948 = vpop.permute.xlu0 %947
    %957 = vrot.lane.b32.xlu0 %v839, 120
    %v958 = vpop.permute.xlu0 %957
    %959 = vrot.lane.b32.xlu0 %v842, 120
    %v960 = vpop.permute.xlu0 %959
    %961 = vrot.lane.b32.xlu0 %v847, 120
    %v962 = vpop.permute.xlu0 %961
    %963 = vrot.lane.b32.xlu0 %v850, 120
    %v964 = vpop.permute.xlu0 %963
    %969 = vrot.lane.b32.xlu0 %v839, 112
    %v970 = vpop.permute.xlu0 %969
    %971 = vrot.lane.b32.xlu0 %v842, 112
    %v972 = vpop.permute.xlu0 %971
    %973 = vrot.lane.b32.xlu0 %v847, 112
    %v974 = vpop.permute.xlu0 %973
    %975 = vrot.lane.b32.xlu0 %v850, 112
    %v976 = vpop.permute.xlu0 %975
    %981 = vrot.lane.b32.xlu0 %v839, 104
    %v982 = vpop.permute.xlu0 %981
    %983 = vrot.lane.b32.xlu0 %v842, 104
    %v984 = vpop.permute.xlu0 %983
    %985 = vrot.lane.b32.xlu0 %v847, 104
    %v986 = vpop.permute.xlu0 %985
    %987 = vrot.lane.b32.xlu0 %v850, 104
    %v988 = vpop.permute.xlu0 %987
    %993 = vrot.lane.b32.xlu0 %v839, 96
    %v994 = vpop.permute.xlu0 %993
    %995 = vrot.lane.b32.xlu0 %v842, 96
    %v996 = vpop.permute.xlu0 %995
    %997 = vrot.lane.b32.xlu0 %v847, 96
    %v998 = vpop.permute.xlu0 %997
    %999 = vrot.lane.b32.xlu0 %v850, 96
    %v1000 = vpop.permute.xlu0 %999
    %1005 = vrot.lane.b32.xlu0 %v839, 88
    %v1006 = vpop.permute.xlu0 %1005
    %1007 = vrot.lane.b32.xlu0 %v842, 88
    %v1008 = vpop.permute.xlu0 %1007
    %1009 = vrot.lane.b32.xlu0 %v847, 88
    %v1010 = vpop.permute.xlu0 %1009
    %1011 = vrot.lane.b32.xlu0 %v850, 88
    %v1012 = vpop.permute.xlu0 %1011
    %1017 = vrot.lane.b32.xlu0 %v839, 80
    %v1018 = vpop.permute.xlu0 %1017
    %1019 = vrot.lane.b32.xlu0 %v842, 80
    %v1020 = vpop.permute.xlu0 %1019
    %1021 = vrot.lane.b32.xlu0 %v847, 80
    %v1022 = vpop.permute.xlu0 %1021
    %1023 = vrot.lane.b32.xlu0 %v850, 80
    %v1024 = vpop.permute.xlu0 %1023
    %1029 = vrot.lane.b32.xlu0 %v839, 72
    %v1030 = vpop.permute.xlu0 %1029
    %1031 = vrot.lane.b32.xlu0 %v842, 72
    %v1032 = vpop.permute.xlu0 %1031
    %1033 = vrot.lane.b32.xlu0 %v847, 72
    %v1034 = vpop.permute.xlu0 %1033
    %1035 = vrot.lane.b32.xlu0 %v850, 72
    %v1036 = vpop.permute.xlu0 %1035
    %v1041 = vpack.c.bf16 %v862, %v861
    %v1042 = vpack.c.bf16 %v864, %v863
    %v1043 = vpack.c.bf16 %v872, %v870
    %v1044 = vpack.c.bf16 %v876, %v874
    %v1045 = vpack.c.bf16 %v884, %v882
    %v1046 = vpack.c.bf16 %v888, %v886
    %v1047 = vpack.c.bf16 %v896, %v894
    %v1048 = vpack.c.bf16 %v900, %v898
    %v1049 = vpack.c.bf16 %v908, %v906
    %v1050 = vpack.c.bf16 %v912, %v910
    %v1051 = vpack.c.bf16 %v920, %v918
    %v1052 = vpack.c.bf16 %v924, %v922
    %v1053 = vpack.c.bf16 %v932, %v930
    %v1054 = vpack.c.bf16 %v936, %v934
    %v1055 = vpack.c.bf16 %v944, %v942
    %v1056 = vpack.c.bf16 %v948, %v946
    %1059 = vrot.lane.b32.xlu0 %v1041, 64
    %v1060 = vpop.permute.xlu0 %1059
    %1061 = vrot.lane.b32.xlu0 %v1042, 64
    %v1062 = vpop.permute.xlu0 %1061
    %vm1063 = vcmask 64512
    %v1065 = vsel %vm1063, %v1041, 0
    %v1068 = vsel %vm1063, %v1042, 0
    %v1071 = vsel %vm1063, %v1060, 0
    %v1074 = vsel %vm1063, %v1062, 0
    %1076 = vmatprep.subr.bf16.mxu0 0
    %1077 = vmatpush1.bf16.xpose.msra.mxu0 0
    %1078 = vmatprep.subr.bf16.mxu0 0
    %1079 = vmatpush1.bf16.xpose.msra.mxu0 0
    %1080 = vmatprep.subr.bf16.mxu0 0
    %1081 = vmatpush1.bf16.xpose.msra.mxu0 0
    %1082 = vmatprep.subr.bf16.mxu0 0
    %1083 = vmatpush1.bf16.xpose.msra.mxu0 0
    %1084 = vmatprep.subr.bf16.mxu0 0
    %1085 = vmatpush1.bf16.xpose.msra.mxu0 0
    %1086 = vmatprep.subr.bf16.mxu0 0
    %1087 = vmatpush1.bf16.xpose.msra.mxu0 0
    %1088 = vmatprep.subr.bf16.mxu0 0
    %1089 = vmatpush1.bf16.xpose.msra.mxu0 %v1074
    %1090 = vmatprep.subr.bf16.mxu0 0
    %1091 = vmatpush1.bf16.xpose.msra.mxu0 %v1071
    %1092 = vmatprep.subr.bf16.mxu0 0
    %1093 = vmatpush2.bf16.xpose.msra.mxu0 0
    %1094 = vmatprep.subr.bf16.mxu0 0
    %1095 = vmatpush2.bf16.xpose.msra.mxu0 0
    %1096 = vmatprep.subr.bf16.mxu0 0
    %1097 = vmatpush2.bf16.xpose.msra.mxu0 0
    %1098 = vmatprep.subr.bf16.mxu0 0
    %1099 = vmatpush2.bf16.xpose.msra.mxu0 0
    %1100 = vmatprep.subr.bf16.mxu0 0
    %1101 = vmatpush2.bf16.xpose.msra.mxu0 0
    %1102 = vmatprep.subr.bf16.mxu0 0
    %1103 = vmatpush2.bf16.xpose.msra.mxu0 0
    %1104 = vmatprep.subr.bf16.mxu0 0
    %1105 = vmatpush2.bf16.xpose.msra.mxu0 0
    %1106 = vmatprep.subr.bf16.mxu0 0
    %1107 = vmatpush2.bf16.xpose.msra.mxu0 0
    %1108 = vmatprep.mubr.bf16.mxu0 0
    %1109 = vmatmul.mubr.bf16.gmra.mxu0 %v1065
    %v1110 = vpop.f32.mrf.mxu0
    %v1111 = vadd.f32 %v75, %v1110
    %v1112 = vpop.f32.mrf.mxu0
    %v1113 = vpop.f32.mrf.mxu0
    %v1114 = vadd.f32 %v76, %v1113
    %v1115 = vpop.f32.mrf.mxu0
    %1116 = vmatprep.mubr.bf16.mxu0 0
    %1117 = vmatmul.mubr.bf16.gmra.mxu0 %v1068
    %v1118 = vpop.f32.mrf.mxu0
    %v1119 = vadd.f32 %v77, %v1118
    %v1120 = vpop.f32.mrf.mxu0
    %v1121 = vpop.f32.mrf.mxu0
    %v1122 = vadd.f32 %v78, %v1121
    %v1123 = vpop.f32.mrf.mxu0
    %1124 = vdwg.mxu0
    %1127 = vrot.lane.b32.xlu0 %v1043, 64
    %v1128 = vpop.permute.xlu0 %1127
    %1129 = vrot.lane.b32.xlu0 %v1044, 64
    %v1130 = vpop.permute.xlu0 %1129
    %v1132 = vsel %vm1063, %v1043, 0
    %v1135 = vsel %vm1063, %v1044, 0
    %v1138 = vsel %vm1063, %v1128, 0
    %v1141 = vsel %vm1063, %v1130, 0
    %1143 = vmatprep.subr.bf16.mxu0 0
    %1144 = vmatpush1.bf16.xpose.msra.mxu0 0
    %1145 = vmatprep.subr.bf16.mxu0 0
    %1146 = vmatpush1.bf16.xpose.msra.mxu0 0
    %1147 = vmatprep.subr.bf16.mxu0 0
    %1148 = vmatpush1.bf16.xpose.msra.mxu0 0
    %1149 = vmatprep.subr.bf16.mxu0 0
    %1150 = vmatpush1.bf16.xpose.msra.mxu0 0
    %1151 = vmatprep.subr.bf16.mxu0 0
    %1152 = vmatpush1.bf16.xpose.msra.mxu0 0
    %1153 = vmatprep.subr.bf16.mxu0 0
    %1154 = vmatpush1.bf16.xpose.msra.mxu0 0
    %1155 = vmatprep.subr.bf16.mxu0 0
    %1156 = vmatpush1.bf16.xpose.msra.mxu0 %v1141
    %1157 = vmatprep.subr.bf16.mxu0 0
    %1158 = vmatpush1.bf16.xpose.msra.mxu0 %v1138
    %1159 = vmatprep.subr.bf16.mxu0 0
    %1160 = vmatpush2.bf16.xpose.msra.mxu0 0
    %1161 = vmatprep.subr.bf16.mxu0 0
    %1162 = vmatpush2.bf16.xpose.msra.mxu0 0
    %1163 = vmatprep.subr.bf16.mxu0 0
    %1164 = vmatpush2.bf16.xpose.msra.mxu0 0
    %1165 = vmatprep.subr.bf16.mxu0 0
    %1166 = vmatpush2.bf16.xpose.msra.mxu0 0
    %1167 = vmatprep.subr.bf16.mxu0 0
    %1168 = vmatpush2.bf16.xpose.msra.mxu0 0
    %1169 = vmatprep.subr.bf16.mxu0 0
    %1170 = vmatpush2.bf16.xpose.msra.mxu0 0
    %1171 = vmatprep.subr.bf16.mxu0 0
    %1172 = vmatpush2.bf16.xpose.msra.mxu0 0
    %1173 = vmatprep.subr.bf16.mxu0 0
    %1174 = vmatpush2.bf16.xpose.msra.mxu0 0
    %1175 = vmatprep.mubr.bf16.mxu0 0
    %1176 = vmatmul.mubr.bf16.gmra.mxu0 %v1132
    %v1177 = vpop.f32.mrf.mxu0
    %v1178 = vadd.f32 %v75, %v1177
    %v1179 = vpop.f32.mrf.mxu0
    %v1180 = vpop.f32.mrf.mxu0
    %v1181 = vadd.f32 %v76, %v1180
    %v1182 = vpop.f32.mrf.mxu0
    %1183 = vmatprep.mubr.bf16.mxu0 0
    %1184 = vmatmul.mubr.bf16.gmra.mxu0 %v1135
    %v1185 = vpop.f32.mrf.mxu0
    %v1186 = vadd.f32 %v77, %v1185
    %v1187 = vpop.f32.mrf.mxu0
    %v1188 = vpop.f32.mrf.mxu0
    %v1189 = vadd.f32 %v78, %v1188
    %v1190 = vpop.f32.mrf.mxu0
    %1191 = vdwg.mxu0
    %1194 = vrot.lane.b32.xlu0 %v1045, 64
    %v1195 = vpop.permute.xlu0 %1194
    %1196 = vrot.lane.b32.xlu0 %v1046, 64
    %v1197 = vpop.permute.xlu0 %1196
    %v1199 = vsel %vm1063, %v1045, 0
    %v1202 = vsel %vm1063, %v1046, 0
    %v1205 = vsel %vm1063, %v1195, 0
    %v1208 = vsel %vm1063, %v1197, 0
    %1210 = vmatprep.subr.bf16.mxu0 0
    %1211 = vmatpush1.bf16.xpose.msra.mxu0 0
    %1212 = vmatprep.subr.bf16.mxu0 0
    %1213 = vmatpush1.bf16.xpose.msra.mxu0 0
    %1214 = vmatprep.subr.bf16.mxu0 0
    %1215 = vmatpush1.bf16.xpose.msra.mxu0 0
    %1216 = vmatprep.subr.bf16.mxu0 0
    %1217 = vmatpush1.bf16.xpose.msra.mxu0 0
    %1218 = vmatprep.subr.bf16.mxu0 0
    %1219 = vmatpush1.bf16.xpose.msra.mxu0 0
    %1220 = vmatprep.subr.bf16.mxu0 0
    %1221 = vmatpush1.bf16.xpose.msra.mxu0 0
    %1222 = vmatprep.subr.bf16.mxu0 0
    %1223 = vmatpush1.bf16.xpose.msra.mxu0 %v1208
    %1224 = vmatprep.subr.bf16.mxu0 0
    %1225 = vmatpush1.bf16.xpose.msra.mxu0 %v1205
    %1226 = vmatprep.subr.bf16.mxu0 0
    %1227 = vmatpush2.bf16.xpose.msra.mxu0 0
    %1228 = vmatprep.subr.bf16.mxu0 0
    %1229 = vmatpush2.bf16.xpose.msra.mxu0 0
    %1230 = vmatprep.subr.bf16.mxu0 0
    %1231 = vmatpush2.bf16.xpose.msra.mxu0 0
    %1232 = vmatprep.subr.bf16.mxu0 0
    %1233 = vmatpush2.bf16.xpose.msra.mxu0 0
    %1234 = vmatprep.subr.bf16.mxu0 0
    %1235 = vmatpush2.bf16.xpose.msra.mxu0 0
    %1236 = vmatprep.subr.bf16.mxu0 0
    %1237 = vmatpush2.bf16.xpose.msra.mxu0 0
    %1238 = vmatprep.subr.bf16.mxu0 0
    %1239 = vmatpush2.bf16.xpose.msra.mxu0 0
    %1240 = vmatprep.subr.bf16.mxu0 0
    %1241 = vmatpush2.bf16.xpose.msra.mxu0 0
    %1242 = vmatprep.mubr.bf16.mxu0 0
    %1243 = vmatmul.mubr.bf16.gmra.mxu0 %v1199
    %v1244 = vpop.f32.mrf.mxu0
    %v1245 = vadd.f32 %v75, %v1244
    %v1246 = vpop.f32.mrf.mxu0
    %v1247 = vpop.f32.mrf.mxu0
    %v1248 = vadd.f32 %v76, %v1247
    %v1249 = vpop.f32.mrf.mxu0
    %1250 = vmatprep.mubr.bf16.mxu0 0
    %1251 = vmatmul.mubr.bf16.gmra.mxu0 %v1202
    %v1252 = vpop.f32.mrf.mxu0
    %v1253 = vadd.f32 %v77, %v1252
    %v1254 = vpop.f32.mrf.mxu0
    %v1255 = vpop.f32.mrf.mxu0
    %v1256 = vadd.f32 %v78, %v1255
    %v1257 = vpop.f32.mrf.mxu0
    %1258 = vdwg.mxu0
    %1261 = vrot.lane.b32.xlu0 %v1047, 64
    %v1262 = vpop.permute.xlu0 %1261
    %1263 = vrot.lane.b32.xlu0 %v1048, 64
    %v1264 = vpop.permute.xlu0 %1263
    %v1266 = vsel %vm1063, %v1047, 0
    %v1269 = vsel %vm1063, %v1048, 0
    %v1272 = vsel %vm1063, %v1262, 0
    %v1275 = vsel %vm1063, %v1264, 0
    %1277 = vmatprep.subr.bf16.mxu0 0
    %1278 = vmatpush1.bf16.xpose.msra.mxu0 0
    %1279 = vmatprep.subr.bf16.mxu0 0
    %1280 = vmatpush1.bf16.xpose.msra.mxu0 0
    %1281 = vmatprep.subr.bf16.mxu0 0
    %1282 = vmatpush1.bf16.xpose.msra.mxu0 0
    %1283 = vmatprep.subr.bf16.mxu0 0
    %1284 = vmatpush1.bf16.xpose.msra.mxu0 0
    %1285 = vmatprep.subr.bf16.mxu0 0
    %1286 = vmatpush1.bf16.xpose.msra.mxu0 0
    %1287 = vmatprep.subr.bf16.mxu0 0
    %1288 = vmatpush1.bf16.xpose.msra.mxu0 0
    %1289 = vmatprep.subr.bf16.mxu0 0
    %1290 = vmatpush1.bf16.xpose.msra.mxu0 %v1275
    %1291 = vmatprep.subr.bf16.mxu0 0
    %1292 = vmatpush1.bf16.xpose.msra.mxu0 %v1272
    %1293 = vmatprep.subr.bf16.mxu0 0
    %1294 = vmatpush2.bf16.xpose.msra.mxu0 0
    %1295 = vmatprep.subr.bf16.mxu0 0
    %1296 = vmatpush2.bf16.xpose.msra.mxu0 0
    %1297 = vmatprep.subr.bf16.mxu0 0
    %1298 = vmatpush2.bf16.xpose.msra.mxu0 0
    %1299 = vmatprep.subr.bf16.mxu0 0
    %1300 = vmatpush2.bf16.xpose.msra.mxu0 0
    %1301 = vmatprep.subr.bf16.mxu0 0
    %1302 = vmatpush2.bf16.xpose.msra.mxu0 0
    %1303 = vmatprep.subr.bf16.mxu0 0
    %1304 = vmatpush2.bf16.xpose.msra.mxu0 0
    %1305 = vmatprep.subr.bf16.mxu0 0
    %1306 = vmatpush2.bf16.xpose.msra.mxu0 0
    %1307 = vmatprep.subr.bf16.mxu0 0
    %1308 = vmatpush2.bf16.xpose.msra.mxu0 0
    %1309 = vmatprep.mubr.bf16.mxu0 0
    %1310 = vmatmul.mubr.bf16.gmra.mxu0 %v1266
    %v1311 = vpop.f32.mrf.mxu0
    %v1312 = vadd.f32 %v75, %v1311
    %v1313 = vpop.f32.mrf.mxu0
    %v1314 = vpop.f32.mrf.mxu0
    %v1315 = vadd.f32 %v76, %v1314
    %v1316 = vpop.f32.mrf.mxu0
    %1317 = vmatprep.mubr.bf16.mxu0 0
    %1318 = vmatmul.mubr.bf16.gmra.mxu0 %v1269
    %v1319 = vpop.f32.mrf.mxu0
    %v1320 = vadd.f32 %v77, %v1319
    %v1321 = vpop.f32.mrf.mxu0
    %v1322 = vpop.f32.mrf.mxu0
    %v1323 = vadd.f32 %v78, %v1322
    %v1324 = vpop.f32.mrf.mxu0
    %1325 = vdwg.mxu0
    %1328 = vrot.lane.b32.xlu0 %v1049, 64
    %v1329 = vpop.permute.xlu0 %1328
    %1330 = vrot.lane.b32.xlu0 %v1050, 64
    %v1331 = vpop.permute.xlu0 %1330
    %v1333 = vsel %vm1063, %v1049, 0
    %v1336 = vsel %vm1063, %v1050, 0
    %v1339 = vsel %vm1063, %v1329, 0
    %v1342 = vsel %vm1063, %v1331, 0
    %1344 = vmatprep.subr.bf16.mxu0 0
    %1345 = vmatpush1.bf16.xpose.msra.mxu0 0
    %1346 = vmatprep.subr.bf16.mxu0 0
    %1347 = vmatpush1.bf16.xpose.msra.mxu0 0
    %1348 = vmatprep.subr.bf16.mxu0 0
    %1349 = vmatpush1.bf16.xpose.msra.mxu0 0
    %1350 = vmatprep.subr.bf16.mxu0 0
    %1351 = vmatpush1.bf16.xpose.msra.mxu0 0
    %1352 = vmatprep.subr.bf16.mxu0 0
    %1353 = vmatpush1.bf16.xpose.msra.mxu0 0
    %1354 = vmatprep.subr.bf16.mxu0 0
    %1355 = vmatpush1.bf16.xpose.msra.mxu0 0
    %1356 = vmatprep.subr.bf16.mxu0 0
    %1357 = vmatpush1.bf16.xpose.msra.mxu0 %v1342
    %1358 = vmatprep.subr.bf16.mxu0 0
    %1359 = vmatpush1.bf16.xpose.msra.mxu0 %v1339
    %1360 = vmatprep.subr.bf16.mxu0 0
    %1361 = vmatpush2.bf16.xpose.msra.mxu0 0
    %1362 = vmatprep.subr.bf16.mxu0 0
    %1363 = vmatpush2.bf16.xpose.msra.mxu0 0
    %1364 = vmatprep.subr.bf16.mxu0 0
    %1365 = vmatpush2.bf16.xpose.msra.mxu0 0
    %1366 = vmatprep.subr.bf16.mxu0 0
    %1367 = vmatpush2.bf16.xpose.msra.mxu0 0
    %1368 = vmatprep.subr.bf16.mxu0 0
    %1369 = vmatpush2.bf16.xpose.msra.mxu0 0
    %1370 = vmatprep.subr.bf16.mxu0 0
    %1371 = vmatpush2.bf16.xpose.msra.mxu0 0
    %1372 = vmatprep.subr.bf16.mxu0 0
    %1373 = vmatpush2.bf16.xpose.msra.mxu0 0
    %1374 = vmatprep.subr.bf16.mxu0 0
    %1375 = vmatpush2.bf16.xpose.msra.mxu0 0
    %1376 = vmatprep.mubr.bf16.mxu0 0
    %1377 = vmatmul.mubr.bf16.gmra.mxu0 %v1333
    %v1378 = vpop.f32.mrf.mxu0
    %v1379 = vadd.f32 %v75, %v1378
    %v1380 = vpop.f32.mrf.mxu0
    %v1381 = vpop.f32.mrf.mxu0
    %v1382 = vadd.f32 %v76, %v1381
    %v1383 = vpop.f32.mrf.mxu0
    %1384 = vmatprep.mubr.bf16.mxu0 0
    %1385 = vmatmul.mubr.bf16.gmra.mxu0 %v1336
    %v1386 = vpop.f32.mrf.mxu0
    %v1387 = vadd.f32 %v77, %v1386
    %v1388 = vpop.f32.mrf.mxu0
    %v1389 = vpop.f32.mrf.mxu0
    %v1390 = vadd.f32 %v78, %v1389
    %v1391 = vpop.f32.mrf.mxu0
    %1392 = vdwg.mxu0
    %1395 = vrot.lane.b32.xlu0 %v1051, 64
    %v1396 = vpop.permute.xlu0 %1395
    %1397 = vrot.lane.b32.xlu0 %v1052, 64
    %v1398 = vpop.permute.xlu0 %1397
    %v1400 = vsel %vm1063, %v1051, 0
    %v1403 = vsel %vm1063, %v1052, 0
    %v1406 = vsel %vm1063, %v1396, 0
    %v1409 = vsel %vm1063, %v1398, 0
    %1411 = vmatprep.subr.bf16.mxu0 0
    %1412 = vmatpush1.bf16.xpose.msra.mxu0 0
    %1413 = vmatprep.subr.bf16.mxu0 0
    %1414 = vmatpush1.bf16.xpose.msra.mxu0 0
    %1415 = vmatprep.subr.bf16.mxu0 0
    %1416 = vmatpush1.bf16.xpose.msra.mxu0 0
    %1417 = vmatprep.subr.bf16.mxu0 0
    %1418 = vmatpush1.bf16.xpose.msra.mxu0 0
    %1419 = vmatprep.subr.bf16.mxu0 0
    %1420 = vmatpush1.bf16.xpose.msra.mxu0 0
    %1421 = vmatprep.subr.bf16.mxu0 0
    %1422 = vmatpush1.bf16.xpose.msra.mxu0 0
    %1423 = vmatprep.subr.bf16.mxu0 0
    %1424 = vmatpush1.bf16.xpose.msra.mxu0 %v1409
    %1425 = vmatprep.subr.bf16.mxu0 0
    %1426 = vmatpush1.bf16.xpose.msra.mxu0 %v1406
    %1427 = vmatprep.subr.bf16.mxu0 0
    %1428 = vmatpush2.bf16.xpose.msra.mxu0 0
    %1429 = vmatprep.subr.bf16.mxu0 0
    %1430 = vmatpush2.bf16.xpose.msra.mxu0 0
    %1431 = vmatprep.subr.bf16.mxu0 0
    %1432 = vmatpush2.bf16.xpose.msra.mxu0 0
    %1433 = vmatprep.subr.bf16.mxu0 0
    %1434 = vmatpush2.bf16.xpose.msra.mxu0 0
    %1435 = vmatprep.subr.bf16.mxu0 0
    %1436 = vmatpush2.bf16.xpose.msra.mxu0 0
    %1437 = vmatprep.subr.bf16.mxu0 0
    %1438 = vmatpush2.bf16.xpose.msra.mxu0 0
    %1439 = vmatprep.subr.bf16.mxu0 0
    %1440 = vmatpush2.bf16.xpose.msra.mxu0 0
    %1441 = vmatprep.subr.bf16.mxu0 0
    %1442 = vmatpush2.bf16.xpose.msra.mxu0 0
    %1443 = vmatprep.mubr.bf16.mxu0 0
    %1444 = vmatmul.mubr.bf16.gmra.mxu0 %v1400
    %v1445 = vpop.f32.mrf.mxu0
    %v1446 = vadd.f32 %v75, %v1445
    %v1447 = vpop.f32.mrf.mxu0
    %v1448 = vpop.f32.mrf.mxu0
    %v1449 = vadd.f32 %v76, %v1448
    %v1450 = vpop.f32.mrf.mxu0
    %1451 = vmatprep.mubr.bf16.mxu0 0
    %1452 = vmatmul.mubr.bf16.gmra.mxu0 %v1403
    %v1453 = vpop.f32.mrf.mxu0
    %v1454 = vadd.f32 %v77, %v1453
    %v1455 = vpop.f32.mrf.mxu0
    %v1456 = vpop.f32.mrf.mxu0
    %v1457 = vadd.f32 %v78, %v1456
    %v1458 = vpop.f32.mrf.mxu0
    %1459 = vdwg.mxu0
    %1462 = vrot.lane.b32.xlu0 %v1053, 64
    %v1463 = vpop.permute.xlu0 %1462
    %1464 = vrot.lane.b32.xlu0 %v1054, 64
    %v1465 = vpop.permute.xlu0 %1464
    %v1467 = vsel %vm1063, %v1053, 0
    %v1470 = vsel %vm1063, %v1054, 0
    %v1473 = vsel %vm1063, %v1463, 0
    %v1476 = vsel %vm1063, %v1465, 0
    %1478 = vmatprep.subr.bf16.mxu0 0
    %1479 = vmatpush1.bf16.xpose.msra.mxu0 0
    %1480 = vmatprep.subr.bf16.mxu0 0
    %1481 = vmatpush1.bf16.xpose.msra.mxu0 0
    %1482 = vmatprep.subr.bf16.mxu0 0
    %1483 = vmatpush1.bf16.xpose.msra.mxu0 0
    %1484 = vmatprep.subr.bf16.mxu0 0
    %1485 = vmatpush1.bf16.xpose.msra.mxu0 0
    %1486 = vmatprep.subr.bf16.mxu0 0
    %1487 = vmatpush1.bf16.xpose.msra.mxu0 0
    %1488 = vmatprep.subr.bf16.mxu0 0
    %1489 = vmatpush1.bf16.xpose.msra.mxu0 0
    %1490 = vmatprep.subr.bf16.mxu0 0
    %1491 = vmatpush1.bf16.xpose.msra.mxu0 %v1476
    %1492 = vmatprep.subr.bf16.mxu0 0
    %1493 = vmatpush1.bf16.xpose.msra.mxu0 %v1473
    %1494 = vmatprep.subr.bf16.mxu0 0
    %1495 = vmatpush2.bf16.xpose.msra.mxu0 0
    %1496 = vmatprep.subr.bf16.mxu0 0
    %1497 = vmatpush2.bf16.xpose.msra.mxu0 0
    %1498 = vmatprep.subr.bf16.mxu0 0
    %1499 = vmatpush2.bf16.xpose.msra.mxu0 0
    %1500 = vmatprep.subr.bf16.mxu0 0
    %1501 = vmatpush2.bf16.xpose.msra.mxu0 0
    %1502 = vmatprep.subr.bf16.mxu0 0
    %1503 = vmatpush2.bf16.xpose.msra.mxu0 0
    %1504 = vmatprep.subr.bf16.mxu0 0
    %1505 = vmatpush2.bf16.xpose.msra.mxu0 0
    %1506 = vmatprep.subr.bf16.mxu0 0
    %1507 = vmatpush2.bf16.xpose.msra.mxu0 0
    %1508 = vmatprep.subr.bf16.mxu0 0
    %1509 = vmatpush2.bf16.xpose.msra.mxu0 0
    %1510 = vmatprep.mubr.bf16.mxu0 0
    %1511 = vmatmul.mubr.bf16.gmra.mxu0 %v1467
    %v1512 = vpop.f32.mrf.mxu0
    %v1513 = vadd.f32 %v75, %v1512
    %v1514 = vpop.f32.mrf.mxu0
    %v1515 = vpop.f32.mrf.mxu0
    %v1516 = vadd.f32 %v76, %v1515
    %v1517 = vpop.f32.mrf.mxu0
    %1518 = vmatprep.mubr.bf16.mxu0 0
    %1519 = vmatmul.mubr.bf16.gmra.mxu0 %v1470
    %v1520 = vpop.f32.mrf.mxu0
    %v1521 = vadd.f32 %v77, %v1520
    %v1522 = vpop.f32.mrf.mxu0
    %v1523 = vpop.f32.mrf.mxu0
    %v1524 = vadd.f32 %v78, %v1523
    %v1525 = vpop.f32.mrf.mxu0
    %1526 = vdwg.mxu0
    %1529 = vrot.lane.b32.xlu0 %v1055, 64
    %v1530 = vpop.permute.xlu0 %1529
    %1531 = vrot.lane.b32.xlu0 %v1056, 64
    %v1532 = vpop.permute.xlu0 %1531
    %v1534 = vsel %vm1063, %v1055, 0
    %v1537 = vsel %vm1063, %v1056, 0
    %v1540 = vsel %vm1063, %v1530, 0
    %v1543 = vsel %vm1063, %v1532, 0
    %1545 = vmatprep.subr.bf16.mxu0 0
    %1546 = vmatpush1.bf16.xpose.msra.mxu0 0
    %1547 = vmatprep.subr.bf16.mxu0 0
    %1548 = vmatpush1.bf16.xpose.msra.mxu0 0
    %1549 = vmatprep.subr.bf16.mxu0 0
    %1550 = vmatpush1.bf16.xpose.msra.mxu0 0
    %1551 = vmatprep.subr.bf16.mxu0 0
    %1552 = vmatpush1.bf16.xpose.msra.mxu0 0
    %1553 = vmatprep.subr.bf16.mxu0 0
    %1554 = vmatpush1.bf16.xpose.msra.mxu0 0
    %1555 = vmatprep.subr.bf16.mxu0 0
    %1556 = vmatpush1.bf16.xpose.msra.mxu0 0
    %1557 = vmatprep.subr.bf16.mxu0 0
    %1558 = vmatpush1.bf16.xpose.msra.mxu0 %v1543
    %1559 = vmatprep.subr.bf16.mxu0 0
    %1560 = vmatpush1.bf16.xpose.msra.mxu0 %v1540
    %1561 = vmatprep.subr.bf16.mxu0 0
    %1562 = vmatpush2.bf16.xpose.msra.mxu0 0
    %1563 = vmatprep.subr.bf16.mxu0 0
    %1564 = vmatpush2.bf16.xpose.msra.mxu0 0
    %1565 = vmatprep.subr.bf16.mxu0 0
    %1566 = vmatpush2.bf16.xpose.msra.mxu0 0
    %1567 = vmatprep.subr.bf16.mxu0 0
    %1568 = vmatpush2.bf16.xpose.msra.mxu0 0
    %1569 = vmatprep.subr.bf16.mxu0 0
    %1570 = vmatpush2.bf16.xpose.msra.mxu0 0
    %1571 = vmatprep.subr.bf16.mxu0 0
    %1572 = vmatpush2.bf16.xpose.msra.mxu0 0
    %1573 = vmatprep.subr.bf16.mxu0 0
    %1574 = vmatpush2.bf16.xpose.msra.mxu0 0
    %1575 = vmatprep.subr.bf16.mxu0 0
    %1576 = vmatpush2.bf16.xpose.msra.mxu0 0
    %1577 = vmatprep.mubr.bf16.mxu0 0
    %1578 = vmatmul.mubr.bf16.gmra.mxu0 %v1534
    %v1579 = vpop.f32.mrf.mxu0
    %v1580 = vadd.f32 %v75, %v1579
    %v1581 = vpop.f32.mrf.mxu0
    %v1582 = vpop.f32.mrf.mxu0
    %v1583 = vadd.f32 %v76, %v1582
    %v1584 = vpop.f32.mrf.mxu0
    %1585 = vmatprep.mubr.bf16.mxu0 0
    %1586 = vmatmul.mubr.bf16.gmra.mxu0 %v1537
    %v1587 = vpop.f32.mrf.mxu0
    %v1588 = vadd.f32 %v77, %v1587
    %v1589 = vpop.f32.mrf.mxu0
    %v1590 = vpop.f32.mrf.mxu0
    %v1591 = vadd.f32 %v78, %v1590
    %v1592 = vpop.f32.mrf.mxu0
    %1593 = vdwg.mxu0
    %vm1594 = vcmask 261120
    %v1595 = vsel %vm1594, %v1111, -inf
    %1596 = vmax.xlane.f32.xlu0 %v1595
    %v1597 = vpop.xlane.xlu0 %1596
    %v1598 = vsel %vm1594, %v1114, -inf
    %1599 = vmax.xlane.f32.xlu0 %v1598
    %v1600 = vpop.xlane.xlu0 %1599
    %v1601 = vsel %vm1594, %v1119, -inf
    %1602 = vmax.xlane.f32.xlu0 %v1601
    %v1603 = vpop.xlane.xlu0 %1602
    %v1604 = vsel %vm1594, %v1122, -inf
    %1605 = vmax.xlane.f32.xlu0 %v1604
    %v1606 = vpop.xlane.xlu0 %1605
    %v1607 = vsel %vm1594, %v1178, -inf
    %1608 = vmax.xlane.f32.xlu0 %v1607
    %v1609 = vpop.xlane.xlu0 %1608
    %v1610 = vsel %vm1594, %v1181, -inf
    %1611 = vmax.xlane.f32.xlu0 %v1610
    %v1612 = vpop.xlane.xlu0 %1611
    %v1613 = vsel %vm1594, %v1186, -inf
    %1614 = vmax.xlane.f32.xlu0 %v1613
    %v1615 = vpop.xlane.xlu0 %1614
    %v1616 = vsel %vm1594, %v1189, -inf
    %1617 = vmax.xlane.f32.xlu0 %v1616
    %v1618 = vpop.xlane.xlu0 %1617
    %v1619 = vsel %vm1594, %v1245, -inf
    %1620 = vmax.xlane.f32.xlu0 %v1619
    %v1621 = vpop.xlane.xlu0 %1620
    %v1622 = vsel %vm1594, %v1248, -inf
    %1623 = vmax.xlane.f32.xlu0 %v1622
    %v1624 = vpop.xlane.xlu0 %1623
    %v1625 = vsel %vm1594, %v1253, -inf
    %1626 = vmax.xlane.f32.xlu0 %v1625
    %v1627 = vpop.xlane.xlu0 %1626
    %v1628 = vsel %vm1594, %v1256, -inf
    %1629 = vmax.xlane.f32.xlu0 %v1628
    %v1630 = vpop.xlane.xlu0 %1629
    %v1631 = vsel %vm1594, %v1312, -inf
    %1632 = vmax.xlane.f32.xlu0 %v1631
    %v1633 = vpop.xlane.xlu0 %1632
    %v1634 = vsel %vm1594, %v1315, -inf
    %1635 = vmax.xlane.f32.xlu0 %v1634
    %v1636 = vpop.xlane.xlu0 %1635
    %v1637 = vsel %vm1594, %v1320, -inf
    %1638 = vmax.xlane.f32.xlu0 %v1637
    %v1639 = vpop.xlane.xlu0 %1638
    %v1640 = vsel %vm1594, %v1323, -inf
    %1641 = vmax.xlane.f32.xlu0 %v1640
    %v1642 = vpop.xlane.xlu0 %1641
    %v1643 = vsel %vm1594, %v1379, -inf
    %1644 = vmax.xlane.f32.xlu0 %v1643
    %v1645 = vpop.xlane.xlu0 %1644
    %v1646 = vsel %vm1594, %v1382, -inf
    %1647 = vmax.xlane.f32.xlu0 %v1646
    %v1648 = vpop.xlane.xlu0 %1647
    %v1649 = vsel %vm1594, %v1387, -inf
    %1650 = vmax.xlane.f32.xlu0 %v1649
    %v1651 = vpop.xlane.xlu0 %1650
    %v1652 = vsel %vm1594, %v1390, -inf
    %1653 = vmax.xlane.f32.xlu0 %v1652
    %v1654 = vpop.xlane.xlu0 %1653
    %v1655 = vsel %vm1594, %v1446, -inf
    %1656 = vmax.xlane.f32.xlu0 %v1655
    %v1657 = vpop.xlane.xlu0 %1656
    %v1658 = vsel %vm1594, %v1449, -inf
    %1659 = vmax.xlane.f32.xlu0 %v1658
    %v1660 = vpop.xlane.xlu0 %1659
    %v1661 = vsel %vm1594, %v1454, -inf
    %1662 = vmax.xlane.f32.xlu0 %v1661
    %v1663 = vpop.xlane.xlu0 %1662
    %v1664 = vsel %vm1594, %v1457, -inf
    %1665 = vmax.xlane.f32.xlu0 %v1664
    %v1666 = vpop.xlane.xlu0 %1665
    %v1667 = vsel %vm1594, %v1513, -inf
    %1668 = vmax.xlane.f32.xlu0 %v1667
    %v1669 = vpop.xlane.xlu0 %1668
    %v1670 = vsel %vm1594, %v1516, -inf
    %1671 = vmax.xlane.f32.xlu0 %v1670
    %v1672 = vpop.xlane.xlu0 %1671
    %v1673 = vsel %vm1594, %v1521, -inf
    %1674 = vmax.xlane.f32.xlu0 %v1673
    %v1675 = vpop.xlane.xlu0 %1674
    %v1676 = vsel %vm1594, %v1524, -inf
    %1677 = vmax.xlane.f32.xlu0 %v1676
    %v1678 = vpop.xlane.xlu0 %1677
    %v1679 = vsel %vm1594, %v1580, -inf
    %1680 = vmax.xlane.f32.xlu0 %v1679
    %v1681 = vpop.xlane.xlu0 %1680
    %v1682 = vsel %vm1594, %v1583, -inf
    %1683 = vmax.xlane.f32.xlu0 %v1682
    %v1684 = vpop.xlane.xlu0 %1683
    %v1685 = vsel %vm1594, %v1588, -inf
    %1686 = vmax.xlane.f32.xlu0 %v1685
    %v1687 = vpop.xlane.xlu0 %1686
    %v1688 = vsel %vm1594, %v1591, -inf
    %1689 = vmax.xlane.f32.xlu0 %v1688
    %v1690 = vpop.xlane.xlu0 %1689
    %v1691 = vsub.f32 %v1111, %v1597
    %v1692 = vsub.f32 %v1114, %v1600
    %v1693 = vsub.f32 %v1119, %v1603
    %v1694 = vsub.f32 %v1122, %v1606
    %v1695 = vsub.f32 %v1178, %v1609
    %v1696 = vsub.f32 %v1181, %v1612
    %v1697 = vsub.f32 %v1186, %v1615
    %v1698 = vsub.f32 %v1189, %v1618
    %v1699 = vsub.f32 %v1245, %v1621
    %v1700 = vsub.f32 %v1248, %v1624
    %v1701 = vsub.f32 %v1253, %v1627
    %v1702 = vsub.f32 %v1256, %v1630
    %v1703 = vsub.f32 %v1312, %v1633
    %v1704 = vsub.f32 %v1315, %v1636
    %v1705 = vsub.f32 %v1320, %v1639
    %v1706 = vsub.f32 %v1323, %v1642
    %v1707 = vsub.f32 %v1379, %v1645
    %v1708 = vsub.f32 %v1382, %v1648
    %v1709 = vsub.f32 %v1387, %v1651
    %v1710 = vsub.f32 %v1390, %v1654
    %v1711 = vsub.f32 %v1446, %v1657
    %v1712 = vsub.f32 %v1449, %v1660
    %v1713 = vsub.f32 %v1454, %v1663
    %v1714 = vsub.f32 %v1457, %v1666
    %v1715 = vsub.f32 %v1513, %v1669
    %v1716 = vsub.f32 %v1516, %v1672
    %v1717 = vsub.f32 %v1521, %v1675
    %v1718 = vsub.f32 %v1524, %v1678
    %v1719 = vsub.f32 %v1580, %v1681
    %v1720 = vsub.f32 %v1583, %v1684
    %v1721 = vsub.f32 %v1588, %v1687
    %v1722 = vsub.f32 %v1591, %v1690
    %v1723 = vmul.f32 %v1691, 1.442695
    %v1724 = vpow.pop %v1723
    %v1725 = vmul.f32 %v1692, 1.442695
    %v1726 = vpow.pop %v1725
    %v1727 = vmul.f32 %v1693, 1.442695
    %v1728 = vpow.pop %v1727
    %v1729 = vmul.f32 %v1694, 1.442695
    %v1730 = vpow.pop %v1729
    %v1731 = vmul.f32 %v1695, 1.442695
    %v1732 = vpow.pop %v1731
    %v1733 = vmul.f32 %v1696, 1.442695
    %v1734 = vpow.pop %v1733
    %v1735 = vmul.f32 %v1697, 1.442695
    %v1736 = vpow.pop %v1735
    %v1737 = vmul.f32 %v1698, 1.442695
    %v1738 = vpow.pop %v1737
    %v1739 = vmul.f32 %v1699, 1.442695
    %v1740 = vpow.pop %v1739
    %v1741 = vmul.f32 %v1700, 1.442695
    %v1742 = vpow.pop %v1741
    %v1743 = vmul.f32 %v1701, 1.442695
    %v1744 = vpow.pop %v1743
    %v1745 = vmul.f32 %v1702, 1.442695
    %v1746 = vpow.pop %v1745
    %v1747 = vmul.f32 %v1703, 1.442695
    %v1748 = vpow.pop %v1747
    %v1749 = vmul.f32 %v1704, 1.442695
    %v1750 = vpow.pop %v1749
    %v1751 = vmul.f32 %v1705, 1.442695
    %v1752 = vpow.pop %v1751
    %v1753 = vmul.f32 %v1706, 1.442695
    %v1754 = vpow.pop %v1753
    %v1755 = vmul.f32 %v1707, 1.442695
    %v1756 = vpow.pop %v1755
    %v1757 = vmul.f32 %v1708, 1.442695
    %v1758 = vpow.pop %v1757
    %v1759 = vmul.f32 %v1709, 1.442695
    %v1760 = vpow.pop %v1759
    %v1761 = vmul.f32 %v1710, 1.442695
    %v1762 = vpow.pop %v1761
    %v1763 = vmul.f32 %v1711, 1.442695
    %v1764 = vpow.pop %v1763
    %v1765 = vmul.f32 %v1712, 1.442695
    %v1766 = vpow.pop %v1765
    %v1767 = vmul.f32 %v1713, 1.442695
    %v1768 = vpow.pop %v1767
    %v1769 = vmul.f32 %v1714, 1.442695
    %v1770 = vpow.pop %v1769
    %v1771 = vmul.f32 %v1715, 1.442695
    %v1772 = vpow.pop %v1771
    %v1773 = vmul.f32 %v1716, 1.442695
    %v1774 = vpow.pop %v1773
    %v1775 = vmul.f32 %v1717, 1.442695
    %v1776 = vpow.pop %v1775
    %v1777 = vmul.f32 %v1718, 1.442695
    %v1778 = vpow.pop %v1777
    %v1779 = vmul.f32 %v1719, 1.442695
    %v1780 = vpow.pop %v1779
    %v1781 = vmul.f32 %v1720, 1.442695
    %v1782 = vpow.pop %v1781
    %v1783 = vmul.f32 %v1721, 1.442695
    %v1784 = vpow.pop %v1783
    %v1785 = vmul.f32 %v1722, 1.442695
    %v1786 = vpow.pop %v1785
    %v1787 = vsel %vm1594, %v1724, 0.0
    %1788 = vadd.xlane.f32.xlu0 %v1787
    %v1789 = vpop.xlane.xlu0 %1788
    %v1790 = vsel %vm1594, %v1726, 0.0
    %1791 = vadd.xlane.f32.xlu0 %v1790
    %v1792 = vpop.xlane.xlu0 %1791
    %v1793 = vsel %vm1594, %v1728, 0.0
    %1794 = vadd.xlane.f32.xlu0 %v1793
    %v1795 = vpop.xlane.xlu0 %1794
    %v1796 = vsel %vm1594, %v1730, 0.0
    %1797 = vadd.xlane.f32.xlu0 %v1796
    %v1798 = vpop.xlane.xlu0 %1797
    %v1799 = vsel %vm1594, %v1732, 0.0
    %1800 = vadd.xlane.f32.xlu0 %v1799
    %v1801 = vpop.xlane.xlu0 %1800
    %v1802 = vsel %vm1594, %v1734, 0.0
    %1803 = vadd.xlane.f32.xlu0 %v1802
    %v1804 = vpop.xlane.xlu0 %1803
    %v1805 = vsel %vm1594, %v1736, 0.0
    %1806 = vadd.xlane.f32.xlu0 %v1805
    %v1807 = vpop.xlane.xlu0 %1806
    %v1808 = vsel %vm1594, %v1738, 0.0
    %1809 = vadd.xlane.f32.xlu0 %v1808
    %v1810 = vpop.xlane.xlu0 %1809
    %v1811 = vsel %vm1594, %v1740, 0.0
    %1812 = vadd.xlane.f32.xlu0 %v1811
    %v1813 = vpop.xlane.xlu0 %1812
    %v1814 = vsel %vm1594, %v1742, 0.0
    %1815 = vadd.xlane.f32.xlu0 %v1814
    %v1816 = vpop.xlane.xlu0 %1815
    %v1817 = vsel %vm1594, %v1744, 0.0
    %1818 = vadd.xlane.f32.xlu0 %v1817
    %v1819 = vpop.xlane.xlu0 %1818
    %v1820 = vsel %vm1594, %v1746, 0.0
    %1821 = vadd.xlane.f32.xlu0 %v1820
    %v1822 = vpop.xlane.xlu0 %1821
    %v1823 = vsel %vm1594, %v1748, 0.0
    %1824 = vadd.xlane.f32.xlu0 %v1823
    %v1825 = vpop.xlane.xlu0 %1824
    %v1826 = vsel %vm1594, %v1750, 0.0
    %1827 = vadd.xlane.f32.xlu0 %v1826
    %v1828 = vpop.xlane.xlu0 %1827
    %v1829 = vsel %vm1594, %v1752, 0.0
    %1830 = vadd.xlane.f32.xlu0 %v1829
    %v1831 = vpop.xlane.xlu0 %1830
    %v1832 = vsel %vm1594, %v1754, 0.0
    %1833 = vadd.xlane.f32.xlu0 %v1832
    %v1834 = vpop.xlane.xlu0 %1833
    %v1835 = vsel %vm1594, %v1756, 0.0
    %1836 = vadd.xlane.f32.xlu0 %v1835
    %v1837 = vpop.xlane.xlu0 %1836
    %v1838 = vsel %vm1594, %v1758, 0.0
    %1839 = vadd.xlane.f32.xlu0 %v1838
    %v1840 = vpop.xlane.xlu0 %1839
    %v1841 = vsel %vm1594, %v1760, 0.0
    %1842 = vadd.xlane.f32.xlu0 %v1841
    %v1843 = vpop.xlane.xlu0 %1842
    %v1844 = vsel %vm1594, %v1762, 0.0
    %1845 = vadd.xlane.f32.xlu0 %v1844
    %v1846 = vpop.xlane.xlu0 %1845
    %v1847 = vsel %vm1594, %v1764, 0.0
    %1848 = vadd.xlane.f32.xlu0 %v1847
    %v1849 = vpop.xlane.xlu0 %1848
    %v1850 = vsel %vm1594, %v1766, 0.0
    %1851 = vadd.xlane.f32.xlu0 %v1850
    %v1852 = vpop.xlane.xlu0 %1851
    %v1853 = vsel %vm1594, %v1768, 0.0
    %1854 = vadd.xlane.f32.xlu0 %v1853
    %v1855 = vpop.xlane.xlu0 %1854
    %v1856 = vsel %vm1594, %v1770, 0.0
    %1857 = vadd.xlane.f32.xlu0 %v1856
    %v1858 = vpop.xlane.xlu0 %1857
    %v1859 = vsel %vm1594, %v1772, 0.0
    %1860 = vadd.xlane.f32.xlu0 %v1859
    %v1861 = vpop.xlane.xlu0 %1860
    %v1862 = vsel %vm1594, %v1774, 0.0
    %1863 = vadd.xlane.f32.xlu0 %v1862
    %v1864 = vpop.xlane.xlu0 %1863
    %v1865 = vsel %vm1594, %v1776, 0.0
    %1866 = vadd.xlane.f32.xlu0 %v1865
    %v1867 = vpop.xlane.xlu0 %1866
    %v1868 = vsel %vm1594, %v1778, 0.0
    %1869 = vadd.xlane.f32.xlu0 %v1868
    %v1870 = vpop.xlane.xlu0 %1869
    %v1871 = vsel %vm1594, %v1780, 0.0
    %1872 = vadd.xlane.f32.xlu0 %v1871
    %v1873 = vpop.xlane.xlu0 %1872
    %v1874 = vsel %vm1594, %v1782, 0.0
    %1875 = vadd.xlane.f32.xlu0 %v1874
    %v1876 = vpop.xlane.xlu0 %1875
    %v1877 = vsel %vm1594, %v1784, 0.0
    %1878 = vadd.xlane.f32.xlu0 %v1877
    %v1879 = vpop.xlane.xlu0 %1878
    %v1880 = vsel %vm1594, %v1786, 0.0
    %1881 = vadd.xlane.f32.xlu0 %v1880
    %v1882 = vpop.xlane.xlu0 %1881
    %v1883 = vrcp.pop %v1789
    %v1884 = vrcp.pop %v1792
    %v1885 = vrcp.pop %v1795
    %v1886 = vrcp.pop %v1798
    %v1887 = vrcp.pop %v1801
    %v1888 = vrcp.pop %v1804
    %v1889 = vrcp.pop %v1807
    %v1890 = vrcp.pop %v1810
    %v1891 = vrcp.pop %v1813
    %v1892 = vrcp.pop %v1816
    %v1893 = vrcp.pop %v1819
    %v1894 = vrcp.pop %v1822
    %v1895 = vrcp.pop %v1825
    %v1896 = vrcp.pop %v1828
    %v1897 = vrcp.pop %v1831
    %v1898 = vrcp.pop %v1834
    %v1899 = vrcp.pop %v1837
    %v1900 = vrcp.pop %v1840
    %v1901 = vrcp.pop %v1843
    %v1902 = vrcp.pop %v1846
    %v1903 = vrcp.pop %v1849
    %v1904 = vrcp.pop %v1852
    %v1905 = vrcp.pop %v1855
    %v1906 = vrcp.pop %v1858
    %v1907 = vrcp.pop %v1861
    %v1908 = vrcp.pop %v1864
    %v1909 = vrcp.pop %v1867
    %v1910 = vrcp.pop %v1870
    %v1911 = vrcp.pop %v1873
    %v1912 = vrcp.pop %v1876
    %v1913 = vrcp.pop %v1879
    %v1914 = vrcp.pop %v1882
    %v1915 = vmul.f32 %v1724, %v1883
    %v1916 = vmul.f32 %v1726, %v1884
    %v1917 = vmul.f32 %v1728, %v1885
    %v1918 = vmul.f32 %v1730, %v1886
    %v1919 = vmul.f32 %v1732, %v1887
    %v1920 = vmul.f32 %v1734, %v1888
    %v1921 = vmul.f32 %v1736, %v1889
    %v1922 = vmul.f32 %v1738, %v1890
    %v1923 = vmul.f32 %v1740, %v1891
    %v1924 = vmul.f32 %v1742, %v1892
    %v1925 = vmul.f32 %v1744, %v1893
    %v1926 = vmul.f32 %v1746, %v1894
    %v1927 = vmul.f32 %v1748, %v1895
    %v1928 = vmul.f32 %v1750, %v1896
    %v1929 = vmul.f32 %v1752, %v1897
    %v1930 = vmul.f32 %v1754, %v1898
    %v1931 = vmul.f32 %v1756, %v1899
    %v1932 = vmul.f32 %v1758, %v1900
    %v1933 = vmul.f32 %v1760, %v1901
    %v1934 = vmul.f32 %v1762, %v1902
    %v1935 = vmul.f32 %v1764, %v1903
    %v1936 = vmul.f32 %v1766, %v1904
    %v1937 = vmul.f32 %v1768, %v1905
    %v1938 = vmul.f32 %v1770, %v1906
    %v1939 = vmul.f32 %v1772, %v1907
    %v1940 = vmul.f32 %v1774, %v1908
    %v1941 = vmul.f32 %v1776, %v1909
    %v1942 = vmul.f32 %v1778, %v1910
    %v1943 = vmul.f32 %v1780, %v1911
    %v1944 = vmul.f32 %v1782, %v1912
    %v1945 = vmul.f32 %v1784, %v1913
    %v1946 = vmul.f32 %v1786, %v1914
    %v1947 = vpack.c.bf16 %v1916, %v1915
    %v1948 = vpack.c.bf16 %v1918, %v1917
    %v1949 = vpack.c.bf16 %v1920, %v1919
    %v1950 = vpack.c.bf16 %v1922, %v1921
    %v1951 = vpack.c.bf16 %v1924, %v1923
    %v1952 = vpack.c.bf16 %v1926, %v1925
    %v1953 = vpack.c.bf16 %v1928, %v1927
    %v1954 = vpack.c.bf16 %v1930, %v1929
    %v1955 = vpack.c.bf16 %v1932, %v1931
    %v1956 = vpack.c.bf16 %v1934, %v1933
    %v1957 = vpack.c.bf16 %v1936, %v1935
    %v1958 = vpack.c.bf16 %v1938, %v1937
    %v1959 = vpack.c.bf16 %v1940, %v1939
    %v1960 = vpack.c.bf16 %v1942, %v1941
    %v1961 = vpack.c.bf16 %v1944, %v1943
    %v1962 = vpack.c.bf16 %v1946, %v1945
    %v1963 = vpack.c.bf16 %v842, %v839
    %v1964 = vpack.c.bf16 %v850, %v847
    %v1965 = vpack.c.bf16 %v960, %v958
    %v1966 = vpack.c.bf16 %v964, %v962
    %v1967 = vpack.c.bf16 %v972, %v970
    %v1968 = vpack.c.bf16 %v976, %v974
    %v1969 = vpack.c.bf16 %v984, %v982
    %v1970 = vpack.c.bf16 %v988, %v986
    %v1971 = vpack.c.bf16 %v996, %v994
    %v1972 = vpack.c.bf16 %v1000, %v998
    %v1973 = vpack.c.bf16 %v1008, %v1006
    %v1974 = vpack.c.bf16 %v1012, %v1010
    %v1975 = vpack.c.bf16 %v1020, %v1018
    %v1976 = vpack.c.bf16 %v1024, %v1022
    %v1977 = vpack.c.bf16 %v1032, %v1030
    %v1978 = vpack.c.bf16 %v1036, %v1034
    %v1980 = vsel %vm1594, %v1947, 0
    %v1983 = vsel %vm1594, %v1948, 0
    %1985 = vmatprep.subr.bf16.mxu0 0
    %1986 = vmatpush1.bf16.msra.mxu0 0
    %1987 = vmatprep.subr.bf16.mxu0 0
    %1988 = vmatpush1.bf16.msra.mxu0 0
    %1989 = vmatprep.subr.bf16.mxu0 0
    %1990 = vmatpush1.bf16.msra.mxu0 0
    %1991 = vmatprep.subr.bf16.mxu0 0
    %1992 = vmatpush1.bf16.msra.mxu0 0
    %1993 = vmatprep.subr.bf16.mxu0 0
    %1994 = vmatpush1.bf16.msra.mxu0 0
    %1995 = vmatprep.subr.bf16.mxu0 0
    %1996 = vmatpush1.bf16.msra.mxu0 0
    %1997 = vmatprep.subr.bf16.mxu0 0
    %1998 = vmatpush1.bf16.msra.mxu0 %v1964
    %1999 = vmatprep.subr.bf16.mxu0 0
    %2000 = vmatpush1.bf16.msra.mxu0 %v1963
    %2001 = vmatprep.subr.bf16.mxu0 0
    %2002 = vmatpush2.bf16.msra.mxu0 0
    %2003 = vmatprep.subr.bf16.mxu0 0
    %2004 = vmatpush2.bf16.msra.mxu0 0
    %2005 = vmatprep.subr.bf16.mxu0 0
    %2006 = vmatpush2.bf16.msra.mxu0 0
    %2007 = vmatprep.subr.bf16.mxu0 0
    %2008 = vmatpush2.bf16.msra.mxu0 0
    %2009 = vmatprep.subr.bf16.mxu0 0
    %2010 = vmatpush2.bf16.msra.mxu0 0
    %2011 = vmatprep.subr.bf16.mxu0 0
    %2012 = vmatpush2.bf16.msra.mxu0 0
    %2013 = vmatprep.subr.bf16.mxu0 0
    %2014 = vmatpush2.bf16.msra.mxu0 0
    %2015 = vmatprep.subr.bf16.mxu0 0
    %2016 = vmatpush2.bf16.msra.mxu0 0
    %2017 = vmatprep.mubr.bf16.mxu0 0
    %2018 = vmatmul.mubr.bf16.gmra.mxu0 %v1980
    %v2019 = vpop.f32.mrf.mxu0
    %v2020 = vadd.f32 0.0, %v2019
    %v2021 = vpop.f32.mrf.mxu0
    %v2022 = vpop.f32.mrf.mxu0
    %v2023 = vadd.f32 0.0, %v2022
    %v2024 = vpop.f32.mrf.mxu0
    %2025 = vmatprep.mubr.bf16.mxu0 0
    %2026 = vmatmul.mubr.bf16.gmra.mxu0 %v1983
    %v2027 = vpop.f32.mrf.mxu0
    %v2028 = vadd.f32 0.0, %v2027
    %v2029 = vpop.f32.mrf.mxu0
    %v2030 = vpop.f32.mrf.mxu0
    %v2031 = vadd.f32 0.0, %v2030
    %v2032 = vpop.f32.mrf.mxu0
    %2033 = vdwg.mxu0
    %v2035 = vsel %vm1594, %v1949, 0
    %v2038 = vsel %vm1594, %v1950, 0
    %2040 = vmatprep.subr.bf16.mxu0 0
    %2041 = vmatpush1.bf16.msra.mxu0 0
    %2042 = vmatprep.subr.bf16.mxu0 0
    %2043 = vmatpush1.bf16.msra.mxu0 0
    %2044 = vmatprep.subr.bf16.mxu0 0
    %2045 = vmatpush1.bf16.msra.mxu0 0
    %2046 = vmatprep.subr.bf16.mxu0 0
    %2047 = vmatpush1.bf16.msra.mxu0 0
    %2048 = vmatprep.subr.bf16.mxu0 0
    %2049 = vmatpush1.bf16.msra.mxu0 0
    %2050 = vmatprep.subr.bf16.mxu0 0
    %2051 = vmatpush1.bf16.msra.mxu0 0
    %2052 = vmatprep.subr.bf16.mxu0 0
    %2053 = vmatpush1.bf16.msra.mxu0 %v1966
    %2054 = vmatprep.subr.bf16.mxu0 0
    %2055 = vmatpush1.bf16.msra.mxu0 %v1965
    %2056 = vmatprep.subr.bf16.mxu0 0
    %2057 = vmatpush2.bf16.msra.mxu0 0
    %2058 = vmatprep.subr.bf16.mxu0 0
    %2059 = vmatpush2.bf16.msra.mxu0 0
    %2060 = vmatprep.subr.bf16.mxu0 0
    %2061 = vmatpush2.bf16.msra.mxu0 0
    %2062 = vmatprep.subr.bf16.mxu0 0
    %2063 = vmatpush2.bf16.msra.mxu0 0
    %2064 = vmatprep.subr.bf16.mxu0 0
    %2065 = vmatpush2.bf16.msra.mxu0 0
    %2066 = vmatprep.subr.bf16.mxu0 0
    %2067 = vmatpush2.bf16.msra.mxu0 0
    %2068 = vmatprep.subr.bf16.mxu0 0
    %2069 = vmatpush2.bf16.msra.mxu0 0
    %2070 = vmatprep.subr.bf16.mxu0 0
    %2071 = vmatpush2.bf16.msra.mxu0 0
    %2072 = vmatprep.mubr.bf16.mxu0 0
    %2073 = vmatmul.mubr.bf16.gmra.mxu0 %v2035
    %v2074 = vpop.f32.mrf.mxu0
    %v2075 = vadd.f32 0.0, %v2074
    %v2076 = vpop.f32.mrf.mxu0
    %v2077 = vpop.f32.mrf.mxu0
    %v2078 = vadd.f32 0.0, %v2077
    %v2079 = vpop.f32.mrf.mxu0
    %2080 = vmatprep.mubr.bf16.mxu0 0
    %2081 = vmatmul.mubr.bf16.gmra.mxu0 %v2038
    %v2082 = vpop.f32.mrf.mxu0
    %v2083 = vadd.f32 0.0, %v2082
    %v2084 = vpop.f32.mrf.mxu0
    %v2085 = vpop.f32.mrf.mxu0
    %v2086 = vadd.f32 0.0, %v2085
    %v2087 = vpop.f32.mrf.mxu0
    %2088 = vdwg.mxu0
    %v2090 = vsel %vm1594, %v1951, 0
    %v2093 = vsel %vm1594, %v1952, 0
    %2095 = vmatprep.subr.bf16.mxu0 0
    %2096 = vmatpush1.bf16.msra.mxu0 0
    %2097 = vmatprep.subr.bf16.mxu0 0
    %2098 = vmatpush1.bf16.msra.mxu0 0
    %2099 = vmatprep.subr.bf16.mxu0 0
    %2100 = vmatpush1.bf16.msra.mxu0 0
    %2101 = vmatprep.subr.bf16.mxu0 0
    %2102 = vmatpush1.bf16.msra.mxu0 0
    %2103 = vmatprep.subr.bf16.mxu0 0
    %2104 = vmatpush1.bf16.msra.mxu0 0
    %2105 = vmatprep.subr.bf16.mxu0 0
    %2106 = vmatpush1.bf16.msra.mxu0 0
    %2107 = vmatprep.subr.bf16.mxu0 0
    %2108 = vmatpush1.bf16.msra.mxu0 %v1968
    %2109 = vmatprep.subr.bf16.mxu0 0
    %2110 = vmatpush1.bf16.msra.mxu0 %v1967
    %2111 = vmatprep.subr.bf16.mxu0 0
    %2112 = vmatpush2.bf16.msra.mxu0 0
    %2113 = vmatprep.subr.bf16.mxu0 0
    %2114 = vmatpush2.bf16.msra.mxu0 0
    %2115 = vmatprep.subr.bf16.mxu0 0
    %2116 = vmatpush2.bf16.msra.mxu0 0
    %2117 = vmatprep.subr.bf16.mxu0 0
    %2118 = vmatpush2.bf16.msra.mxu0 0
    %2119 = vmatprep.subr.bf16.mxu0 0
    %2120 = vmatpush2.bf16.msra.mxu0 0
    %2121 = vmatprep.subr.bf16.mxu0 0
    %2122 = vmatpush2.bf16.msra.mxu0 0
    %2123 = vmatprep.subr.bf16.mxu0 0
    %2124 = vmatpush2.bf16.msra.mxu0 0
    %2125 = vmatprep.subr.bf16.mxu0 0
    %2126 = vmatpush2.bf16.msra.mxu0 0
    %2127 = vmatprep.mubr.bf16.mxu0 0
    %2128 = vmatmul.mubr.bf16.gmra.mxu0 %v2090
    %v2129 = vpop.f32.mrf.mxu0
    %v2130 = vadd.f32 0.0, %v2129
    %v2131 = vpop.f32.mrf.mxu0
    %v2132 = vpop.f32.mrf.mxu0
    %v2133 = vadd.f32 0.0, %v2132
    %v2134 = vpop.f32.mrf.mxu0
    %2135 = vmatprep.mubr.bf16.mxu0 0
    %2136 = vmatmul.mubr.bf16.gmra.mxu0 %v2093
    %v2137 = vpop.f32.mrf.mxu0
    %v2138 = vadd.f32 0.0, %v2137
    %v2139 = vpop.f32.mrf.mxu0
    %v2140 = vpop.f32.mrf.mxu0
    %v2141 = vadd.f32 0.0, %v2140
    %v2142 = vpop.f32.mrf.mxu0
    %2143 = vdwg.mxu0
    %v2145 = vsel %vm1594, %v1953, 0
    %v2148 = vsel %vm1594, %v1954, 0
    %2150 = vmatprep.subr.bf16.mxu0 0
    %2151 = vmatpush1.bf16.msra.mxu0 0
    %2152 = vmatprep.subr.bf16.mxu0 0
    %2153 = vmatpush1.bf16.msra.mxu0 0
    %2154 = vmatprep.subr.bf16.mxu0 0
    %2155 = vmatpush1.bf16.msra.mxu0 0
    %2156 = vmatprep.subr.bf16.mxu0 0
    %2157 = vmatpush1.bf16.msra.mxu0 0
    %2158 = vmatprep.subr.bf16.mxu0 0
    %2159 = vmatpush1.bf16.msra.mxu0 0
    %2160 = vmatprep.subr.bf16.mxu0 0
    %2161 = vmatpush1.bf16.msra.mxu0 0
    %2162 = vmatprep.subr.bf16.mxu0 0
    %2163 = vmatpush1.bf16.msra.mxu0 %v1970
    %2164 = vmatprep.subr.bf16.mxu0 0
    %2165 = vmatpush1.bf16.msra.mxu0 %v1969
    %2166 = vmatprep.subr.bf16.mxu0 0
    %2167 = vmatpush2.bf16.msra.mxu0 0
    %2168 = vmatprep.subr.bf16.mxu0 0
    %2169 = vmatpush2.bf16.msra.mxu0 0
    %2170 = vmatprep.subr.bf16.mxu0 0
    %2171 = vmatpush2.bf16.msra.mxu0 0
    %2172 = vmatprep.subr.bf16.mxu0 0
    %2173 = vmatpush2.bf16.msra.mxu0 0
    %2174 = vmatprep.subr.bf16.mxu0 0
    %2175 = vmatpush2.bf16.msra.mxu0 0
    %2176 = vmatprep.subr.bf16.mxu0 0
    %2177 = vmatpush2.bf16.msra.mxu0 0
    %2178 = vmatprep.subr.bf16.mxu0 0
    %2179 = vmatpush2.bf16.msra.mxu0 0
    %2180 = vmatprep.subr.bf16.mxu0 0
    %2181 = vmatpush2.bf16.msra.mxu0 0
    %2182 = vmatprep.mubr.bf16.mxu0 0
    %2183 = vmatmul.mubr.bf16.gmra.mxu0 %v2145
    %v2184 = vpop.f32.mrf.mxu0
    %v2185 = vadd.f32 0.0, %v2184
    %v2186 = vpop.f32.mrf.mxu0
    %v2187 = vpop.f32.mrf.mxu0
    %v2188 = vadd.f32 0.0, %v2187
    %v2189 = vpop.f32.mrf.mxu0
    %2190 = vmatprep.mubr.bf16.mxu0 0
    %2191 = vmatmul.mubr.bf16.gmra.mxu0 %v2148
    %v2192 = vpop.f32.mrf.mxu0
    %v2193 = vadd.f32 0.0, %v2192
    %v2194 = vpop.f32.mrf.mxu0
    %v2195 = vpop.f32.mrf.mxu0
    %v2196 = vadd.f32 0.0, %v2195
    %v2197 = vpop.f32.mrf.mxu0
    %2198 = vdwg.mxu0
    %v2200 = vsel %vm1594, %v1955, 0
    %v2203 = vsel %vm1594, %v1956, 0
    %2205 = vmatprep.subr.bf16.mxu0 0
    %2206 = vmatpush1.bf16.msra.mxu0 0
    %2207 = vmatprep.subr.bf16.mxu0 0
    %2208 = vmatpush1.bf16.msra.mxu0 0
    %2209 = vmatprep.subr.bf16.mxu0 0
    %2210 = vmatpush1.bf16.msra.mxu0 0
    %2211 = vmatprep.subr.bf16.mxu0 0
    %2212 = vmatpush1.bf16.msra.mxu0 0
    %2213 = vmatprep.subr.bf16.mxu0 0
    %2214 = vmatpush1.bf16.msra.mxu0 0
    %2215 = vmatprep.subr.bf16.mxu0 0
    %2216 = vmatpush1.bf16.msra.mxu0 0
    %2217 = vmatprep.subr.bf16.mxu0 0
    %2218 = vmatpush1.bf16.msra.mxu0 %v1972
    %2219 = vmatprep.subr.bf16.mxu0 0
    %2220 = vmatpush1.bf16.msra.mxu0 %v1971
    %2221 = vmatprep.subr.bf16.mxu0 0
    %2222 = vmatpush2.bf16.msra.mxu0 0
    %2223 = vmatprep.subr.bf16.mxu0 0
    %2224 = vmatpush2.bf16.msra.mxu0 0
    %2225 = vmatprep.subr.bf16.mxu0 0
    %2226 = vmatpush2.bf16.msra.mxu0 0
    %2227 = vmatprep.subr.bf16.mxu0 0
    %2228 = vmatpush2.bf16.msra.mxu0 0
    %2229 = vmatprep.subr.bf16.mxu0 0
    %2230 = vmatpush2.bf16.msra.mxu0 0
    %2231 = vmatprep.subr.bf16.mxu0 0
    %2232 = vmatpush2.bf16.msra.mxu0 0
    %2233 = vmatprep.subr.bf16.mxu0 0
    %2234 = vmatpush2.bf16.msra.mxu0 0
    %2235 = vmatprep.subr.bf16.mxu0 0
    %2236 = vmatpush2.bf16.msra.mxu0 0
    %2237 = vmatprep.mubr.bf16.mxu0 0
    %2238 = vmatmul.mubr.bf16.gmra.mxu0 %v2200
    %v2239 = vpop.f32.mrf.mxu0
    %v2240 = vadd.f32 0.0, %v2239
    %v2241 = vpop.f32.mrf.mxu0
    %v2242 = vpop.f32.mrf.mxu0
    %v2243 = vadd.f32 0.0, %v2242
    %v2244 = vpop.f32.mrf.mxu0
    %2245 = vmatprep.mubr.bf16.mxu0 0
    %2246 = vmatmul.mubr.bf16.gmra.mxu0 %v2203
    %v2247 = vpop.f32.mrf.mxu0
    %v2248 = vadd.f32 0.0, %v2247
    %v2249 = vpop.f32.mrf.mxu0
    %v2250 = vpop.f32.mrf.mxu0
    %v2251 = vadd.f32 0.0, %v2250
    %v2252 = vpop.f32.mrf.mxu0
    %2253 = vdwg.mxu0
    %v2255 = vsel %vm1594, %v1957, 0
    %v2258 = vsel %vm1594, %v1958, 0
    %2260 = vmatprep.subr.bf16.mxu0 0
    %2261 = vmatpush1.bf16.msra.mxu0 0
    %2262 = vmatprep.subr.bf16.mxu0 0
    %2263 = vmatpush1.bf16.msra.mxu0 0
    %2264 = vmatprep.subr.bf16.mxu0 0
    %2265 = vmatpush1.bf16.msra.mxu0 0
    %2266 = vmatprep.subr.bf16.mxu0 0
    %2267 = vmatpush1.bf16.msra.mxu0 0
    %2268 = vmatprep.subr.bf16.mxu0 0
    %2269 = vmatpush1.bf16.msra.mxu0 0
    %2270 = vmatprep.subr.bf16.mxu0 0
    %2271 = vmatpush1.bf16.msra.mxu0 0
    %2272 = vmatprep.subr.bf16.mxu0 0
    %2273 = vmatpush1.bf16.msra.mxu0 %v1974
    %2274 = vmatprep.subr.bf16.mxu0 0
    %2275 = vmatpush1.bf16.msra.mxu0 %v1973
    %2276 = vmatprep.subr.bf16.mxu0 0
    %2277 = vmatpush2.bf16.msra.mxu0 0
    %2278 = vmatprep.subr.bf16.mxu0 0
    %2279 = vmatpush2.bf16.msra.mxu0 0
    %2280 = vmatprep.subr.bf16.mxu0 0
    %2281 = vmatpush2.bf16.msra.mxu0 0
    %2282 = vmatprep.subr.bf16.mxu0 0
    %2283 = vmatpush2.bf16.msra.mxu0 0
    %2284 = vmatprep.subr.bf16.mxu0 0
    %2285 = vmatpush2.bf16.msra.mxu0 0
    %2286 = vmatprep.subr.bf16.mxu0 0
    %2287 = vmatpush2.bf16.msra.mxu0 0
    %2288 = vmatprep.subr.bf16.mxu0 0
    %2289 = vmatpush2.bf16.msra.mxu0 0
    %2290 = vmatprep.subr.bf16.mxu0 0
    %2291 = vmatpush2.bf16.msra.mxu0 0
    %2292 = vmatprep.mubr.bf16.mxu0 0
    %2293 = vmatmul.mubr.bf16.gmra.mxu0 %v2255
    %v2294 = vpop.f32.mrf.mxu0
    %v2295 = vadd.f32 0.0, %v2294
    %v2296 = vpop.f32.mrf.mxu0
    %v2297 = vpop.f32.mrf.mxu0
    %v2298 = vadd.f32 0.0, %v2297
    %v2299 = vpop.f32.mrf.mxu0
    %2300 = vmatprep.mubr.bf16.mxu0 0
    %2301 = vmatmul.mubr.bf16.gmra.mxu0 %v2258
    %v2302 = vpop.f32.mrf.mxu0
    %v2303 = vadd.f32 0.0, %v2302
    %v2304 = vpop.f32.mrf.mxu0
    %v2305 = vpop.f32.mrf.mxu0
    %v2306 = vadd.f32 0.0, %v2305
    %v2307 = vpop.f32.mrf.mxu0
    %2308 = vdwg.mxu0
    %v2310 = vsel %vm1594, %v1959, 0
    %v2313 = vsel %vm1594, %v1960, 0
    %2315 = vmatprep.subr.bf16.mxu0 0
    %2316 = vmatpush1.bf16.msra.mxu0 0
    %2317 = vmatprep.subr.bf16.mxu0 0
    %2318 = vmatpush1.bf16.msra.mxu0 0
    %2319 = vmatprep.subr.bf16.mxu0 0
    %2320 = vmatpush1.bf16.msra.mxu0 0
    %2321 = vmatprep.subr.bf16.mxu0 0
    %2322 = vmatpush1.bf16.msra.mxu0 0
    %2323 = vmatprep.subr.bf16.mxu0 0
    %2324 = vmatpush1.bf16.msra.mxu0 0
    %2325 = vmatprep.subr.bf16.mxu0 0
    %2326 = vmatpush1.bf16.msra.mxu0 0
    %2327 = vmatprep.subr.bf16.mxu0 0
    %2328 = vmatpush1.bf16.msra.mxu0 %v1976
    %2329 = vmatprep.subr.bf16.mxu0 0
    %2330 = vmatpush1.bf16.msra.mxu0 %v1975
    %2331 = vmatprep.subr.bf16.mxu0 0
    %2332 = vmatpush2.bf16.msra.mxu0 0
    %2333 = vmatprep.subr.bf16.mxu0 0
    %2334 = vmatpush2.bf16.msra.mxu0 0
    %2335 = vmatprep.subr.bf16.mxu0 0
    %2336 = vmatpush2.bf16.msra.mxu0 0
    %2337 = vmatprep.subr.bf16.mxu0 0
    %2338 = vmatpush2.bf16.msra.mxu0 0
    %2339 = vmatprep.subr.bf16.mxu0 0
    %2340 = vmatpush2.bf16.msra.mxu0 0
    %2341 = vmatprep.subr.bf16.mxu0 0
    %2342 = vmatpush2.bf16.msra.mxu0 0
    %2343 = vmatprep.subr.bf16.mxu0 0
    %2344 = vmatpush2.bf16.msra.mxu0 0
    %2345 = vmatprep.subr.bf16.mxu0 0
    %2346 = vmatpush2.bf16.msra.mxu0 0
    %2347 = vmatprep.mubr.bf16.mxu0 0
    %2348 = vmatmul.mubr.bf16.gmra.mxu0 %v2310
    %v2349 = vpop.f32.mrf.mxu0
    %v2350 = vadd.f32 0.0, %v2349
    %v2351 = vpop.f32.mrf.mxu0
    %v2352 = vpop.f32.mrf.mxu0
    %v2353 = vadd.f32 0.0, %v2352
    %v2354 = vpop.f32.mrf.mxu0
    %2355 = vmatprep.mubr.bf16.mxu0 0
    %2356 = vmatmul.mubr.bf16.gmra.mxu0 %v2313
    %v2357 = vpop.f32.mrf.mxu0
    %v2358 = vadd.f32 0.0, %v2357
    %v2359 = vpop.f32.mrf.mxu0
    %v2360 = vpop.f32.mrf.mxu0
    %v2361 = vadd.f32 0.0, %v2360
    %v2362 = vpop.f32.mrf.mxu0
    %2363 = vdwg.mxu0
    %v2365 = vsel %vm1594, %v1961, 0
    %v2368 = vsel %vm1594, %v1962, 0
    %2370 = vmatprep.subr.bf16.mxu0 0
    %2371 = vmatpush1.bf16.msra.mxu0 0
    %2372 = vmatprep.subr.bf16.mxu0 0
    %2373 = vmatpush1.bf16.msra.mxu0 0
    %2374 = vmatprep.subr.bf16.mxu0 0
    %2375 = vmatpush1.bf16.msra.mxu0 0
    %2376 = vmatprep.subr.bf16.mxu0 0
    %2377 = vmatpush1.bf16.msra.mxu0 0
    %2378 = vmatprep.subr.bf16.mxu0 0
    %2379 = vmatpush1.bf16.msra.mxu0 0
    %2380 = vmatprep.subr.bf16.mxu0 0
    %2381 = vmatpush1.bf16.msra.mxu0 0
    %2382 = vmatprep.subr.bf16.mxu0 0
    %2383 = vmatpush1.bf16.msra.mxu0 %v1978
    %2384 = vmatprep.subr.bf16.mxu0 0
    %2385 = vmatpush1.bf16.msra.mxu0 %v1977
    %2386 = vmatprep.subr.bf16.mxu0 0
    %2387 = vmatpush2.bf16.msra.mxu0 0
    %2388 = vmatprep.subr.bf16.mxu0 0
    %2389 = vmatpush2.bf16.msra.mxu0 0
    %2390 = vmatprep.subr.bf16.mxu0 0
    %2391 = vmatpush2.bf16.msra.mxu0 0
    %2392 = vmatprep.subr.bf16.mxu0 0
    %2393 = vmatpush2.bf16.msra.mxu0 0
    %2394 = vmatprep.subr.bf16.mxu0 0
    %2395 = vmatpush2.bf16.msra.mxu0 0
    %2396 = vmatprep.subr.bf16.mxu0 0
    %2397 = vmatpush2.bf16.msra.mxu0 0
    %2398 = vmatprep.subr.bf16.mxu0 0
    %2399 = vmatpush2.bf16.msra.mxu0 0
    %2400 = vmatprep.subr.bf16.mxu0 0
    %2401 = vmatpush2.bf16.msra.mxu0 0
    %2402 = vmatprep.mubr.bf16.mxu0 0
    %2403 = vmatmul.mubr.bf16.gmra.mxu0 %v2365
    %v2404 = vpop.f32.mrf.mxu0
    %v2405 = vadd.f32 0.0, %v2404
    %v2406 = vpop.f32.mrf.mxu0
    %v2407 = vpop.f32.mrf.mxu0
    %v2408 = vadd.f32 0.0, %v2407
    %v2409 = vpop.f32.mrf.mxu0
    %2410 = vmatprep.mubr.bf16.mxu0 0
    %2411 = vmatmul.mubr.bf16.gmra.mxu0 %v2368
    %v2412 = vpop.f32.mrf.mxu0
    %v2413 = vadd.f32 0.0, %v2412
    %v2414 = vpop.f32.mrf.mxu0
    %v2415 = vpop.f32.mrf.mxu0
    %v2416 = vadd.f32 0.0, %v2415
    %v2417 = vpop.f32.mrf.mxu0
    %2418 = vdwg.mxu0
    %2423 = vrot.lane.b32.xlu0 %v2075, 8
    %v2424 = vpop.permute.xlu0 %2423
    %2425 = vrot.lane.b32.xlu0 %v2078, 8
    %v2426 = vpop.permute.xlu0 %2425
    %2427 = vrot.lane.b32.xlu0 %v2083, 8
    %v2428 = vpop.permute.xlu0 %2427
    %2429 = vrot.lane.b32.xlu0 %v2086, 8
    %v2430 = vpop.permute.xlu0 %2429
    %2439 = vrot.lane.b32.xlu0 %v2130, 16
    %v2440 = vpop.permute.xlu0 %2439
    %2441 = vrot.lane.b32.xlu0 %v2133, 16
    %v2442 = vpop.permute.xlu0 %2441
    %2443 = vrot.lane.b32.xlu0 %v2138, 16
    %v2444 = vpop.permute.xlu0 %2443
    %2445 = vrot.lane.b32.xlu0 %v2141, 16
    %v2446 = vpop.permute.xlu0 %2445
    %2455 = vrot.lane.b32.xlu0 %v2185, 24
    %v2456 = vpop.permute.xlu0 %2455
    %2457 = vrot.lane.b32.xlu0 %v2188, 24
    %v2458 = vpop.permute.xlu0 %2457
    %2459 = vrot.lane.b32.xlu0 %v2193, 24
    %v2460 = vpop.permute.xlu0 %2459
    %2461 = vrot.lane.b32.xlu0 %v2196, 24
    %v2462 = vpop.permute.xlu0 %2461
    %2471 = vrot.lane.b32.xlu0 %v2240, 32
    %v2472 = vpop.permute.xlu0 %2471
    %2473 = vrot.lane.b32.xlu0 %v2243, 32
    %v2474 = vpop.permute.xlu0 %2473
    %2475 = vrot.lane.b32.xlu0 %v2248, 32
    %v2476 = vpop.permute.xlu0 %2475
    %2477 = vrot.lane.b32.xlu0 %v2251, 32
    %v2478 = vpop.permute.xlu0 %2477
    %2487 = vrot.lane.b32.xlu0 %v2295, 40
    %v2488 = vpop.permute.xlu0 %2487
    %2489 = vrot.lane.b32.xlu0 %v2298, 40
    %v2490 = vpop.permute.xlu0 %2489
    %2491 = vrot.lane.b32.xlu0 %v2303, 40
    %v2492 = vpop.permute.xlu0 %2491
    %2493 = vrot.lane.b32.xlu0 %v2306, 40
    %v2494 = vpop.permute.xlu0 %2493
    %2503 = vrot.lane.b32.xlu0 %v2350, 48
    %v2504 = vpop.permute.xlu0 %2503
    %2505 = vrot.lane.b32.xlu0 %v2353, 48
    %v2506 = vpop.permute.xlu0 %2505
    %2507 = vrot.lane.b32.xlu0 %v2358, 48
    %v2508 = vpop.permute.xlu0 %2507
    %2509 = vrot.lane.b32.xlu0 %v2361, 48
    %v2510 = vpop.permute.xlu0 %2509
    %2519 = vrot.lane.b32.xlu0 %v2405, 56
    %v2520 = vpop.permute.xlu0 %2519
    %2521 = vrot.lane.b32.xlu0 %v2408, 56
    %v2522 = vpop.permute.xlu0 %2521
    %2523 = vrot.lane.b32.xlu0 %v2413, 56
    %v2524 = vpop.permute.xlu0 %2523
    %2525 = vrot.lane.b32.xlu0 %v2416, 56
    %v2526 = vpop.permute.xlu0 %2525
    %v2531 = vsel %vm1063, %v2020, %v2424
    %v2532 = vsel %vm1063, %v2023, %v2426
    %v2533 = vsel %vm1063, %v2028, %v2428
    %v2534 = vsel %vm1063, %v2031, %v2430
    %vm2535 = vcmask 130048
    %v2536 = vsel %vm2535, %v2531, %v2440
    %v2537 = vsel %vm2535, %v2532, %v2442
    %v2538 = vsel %vm2535, %v2533, %v2444
    %v2539 = vsel %vm2535, %v2534, %v2446
    %vm2540 = vcmask 195584
    %v2541 = vsel %vm2540, %v2536, %v2456
    %v2542 = vsel %vm2540, %v2537, %v2458
    %v2543 = vsel %vm2540, %v2538, %v2460
    %v2544 = vsel %vm2540, %v2539, %v2462
    %v2545 = vsel %vm1594, %v2541, %v2472
    %v2546 = vsel %vm1594, %v2542, %v2474
    %v2547 = vsel %vm1594, %v2543, %v2476
    %v2548 = vsel %vm1594, %v2544, %v2478
    %vm2549 = vcmask 326656
    %v2550 = vsel %vm2549, %v2545, %v2488
    %v2551 = vsel %vm2549, %v2546, %v2490
    %v2552 = vsel %vm2549, %v2547, %v2492
    %v2553 = vsel %vm2549, %v2548, %v2494
    %vm2554 = vcmask 392192
    %v2555 = vsel %vm2554, %v2550, %v2504
    %v2556 = vsel %vm2554, %v2551, %v2506
    %v2557 = vsel %vm2554, %v2552, %v2508
    %v2558 = vsel %vm2554, %v2553, %v2510
    %vm2559 = vcmask 457728
    %v2560 = vsel %vm2559, %v2555, %v2520
    %v2561 = vsel %vm2559, %v2556, %v2522
    %v2562 = vsel %vm2559, %v2557, %v2524
    %v2563 = vsel %vm2559, %v2558, %v2526
    %v2564 = vpack.c.bf16 %v2561, %v2560
    %v2565 = vpack.c.bf16 %v2563, %v2562
    %v2566 = vld [vmem:[%s7] sm:$0xf]
    %v2567 = vld [vmem:[%s7 + $0x4] sm:$0xf]
    %v2568 = vld [vmem:[%s7 + $0x8] sm:$0xf]
    %v2569 = vld [vmem:[%s7 + $0xc] sm:$0xf]
    %v2570 = vld [vmem:[%s7 + $0x10] sm:$0xf]
    %v2571 = vld [vmem:[%s7 + $0x14] sm:$0xf]
    %v2572 = vld [vmem:[%s7 + $0x18] sm:$0xf]
    %v2573 = vld [vmem:[%s7 + $0x1c] sm:$0xf]
    %v2582 = vunpack.c.l.b16 %v2566
    %v2583 = vunpack.c.l.b16 %v2567
    %v2584 = vunpack.c.l.b16 %v2568
    %v2585 = vunpack.c.l.b16 %v2569
    %v2586 = vunpack.c.l.b16 %v2570
    %v2587 = vunpack.c.l.b16 %v2571
    %v2588 = vunpack.c.l.b16 %v2572
    %v2589 = vunpack.c.l.b16 %v2573
    %v2590 = vpack.c.b16 %v2583, %v2582
    %v2591 = vpack.c.b16 %v2585, %v2584
    %v2592 = vpack.c.b16 %v2587, %v2586
    %v2593 = vpack.c.b16 %v2589, %v2588
    %v2599 = vsel %vm633, %v2564, 0
    %v2602 = vsel %vm633, %v2565, 0
    %2604 = vmatprep.subr.bf16.mxu0 0
    %2605 = vmatpush1.bf16.msra.mxu0 0
    %2606 = vmatprep.subr.bf16.mxu0 0
    %2607 = vmatpush1.bf16.msra.mxu0 0
    %2608 = vmatprep.subr.bf16.mxu0 0
    %2609 = vmatpush1.bf16.msra.mxu0 0
    %2610 = vmatprep.subr.bf16.mxu0 0
    %2611 = vmatpush1.bf16.msra.mxu0 0
    %2612 = vmatprep.subr.bf16.mxu0 0
    %2613 = vmatpush1.bf16.msra.mxu0 %v2593
    %2614 = vmatprep.subr.bf16.mxu0 0
    %2615 = vmatpush1.bf16.msra.mxu0 %v2592
    %2616 = vmatprep.subr.bf16.mxu0 0
    %2617 = vmatpush1.bf16.msra.mxu0 %v2591
    %2618 = vmatprep.subr.bf16.mxu0 0
    %2619 = vmatpush1.bf16.msra.mxu0 %v2590
    %2620 = vmatprep.subr.bf16.mxu0 0
    %2621 = vmatpush2.bf16.msra.mxu0 0
    %2622 = vmatprep.subr.bf16.mxu0 0
    %2623 = vmatpush2.bf16.msra.mxu0 0
    %2624 = vmatprep.subr.bf16.mxu0 0
    %2625 = vmatpush2.bf16.msra.mxu0 0
    %2626 = vmatprep.subr.bf16.mxu0 0
    %2627 = vmatpush2.bf16.msra.mxu0 0
    %2628 = vmatprep.subr.bf16.mxu0 0
    %2629 = vmatpush2.bf16.msra.mxu0 0
    %2630 = vmatprep.subr.bf16.mxu0 0
    %2631 = vmatpush2.bf16.msra.mxu0 0
    %2632 = vmatprep.subr.bf16.mxu0 0
    %2633 = vmatpush2.bf16.msra.mxu0 0
    %2634 = vmatprep.subr.bf16.mxu0 0
    %2635 = vmatpush2.bf16.msra.mxu0 0
    %2636 = vmatprep.mubr.bf16.mxu0 0
    %2637 = vmatmul.mubr.bf16.gmra.mxu0 %v2599
    %v2638 = vpop.f32.mrf.mxu0
    %v2639 = vadd.f32 0.0, %v2638
    %v2640 = vpop.f32.mrf.mxu0
    %v2641 = vpop.f32.mrf.mxu0
    %v2642 = vadd.f32 0.0, %v2641
    %v2643 = vpop.f32.mrf.mxu0
    %2644 = vmatprep.mubr.bf16.mxu0 0
    %2645 = vmatmul.mubr.bf16.gmra.mxu0 %v2602
    %v2646 = vpop.f32.mrf.mxu0
    %v2647 = vadd.f32 0.0, %v2646
    %v2648 = vpop.f32.mrf.mxu0
    %v2649 = vpop.f32.mrf.mxu0
    %v2650 = vadd.f32 0.0, %v2649
    %v2651 = vpop.f32.mrf.mxu0
    %2652 = vdwg.mxu0
    %v2653 = vadd.f32 %v615, %v2639
    %v2654 = vadd.f32 %v618, %v2642
    %v2655 = vadd.f32 %v623, %v2647
    %v2656 = vadd.f32 %v626, %v2650
    %v2657 = vmul.f32 %v2653, %v2653
    %v2658 = vmul.f32 %v2654, %v2654
    %v2659 = vmul.f32 %v2655, %v2655
    %v2660 = vmul.f32 %v2656, %v2656
    %v2661 = vsel %vm633, %v2657, 0.0
    %2662 = vadd.xlane.f32.xlu0 %v2661
    %v2663 = vpop.xlane.xlu0 %2662
    %v2664 = vsel %vm633, %v2658, 0.0
    %2665 = vadd.xlane.f32.xlu0 %v2664
    %v2666 = vpop.xlane.xlu0 %2665
    %v2667 = vsel %vm633, %v2659, 0.0
    %2668 = vadd.xlane.f32.xlu0 %v2667
    %v2669 = vpop.xlane.xlu0 %2668
    %v2670 = vsel %vm633, %v2660, 0.0
    %2671 = vadd.xlane.f32.xlu0 %v2670
    %v2672 = vpop.xlane.xlu0 %2671
    %v2673 = vmul.f32 %v2663, %v646
    %v2674 = vmul.f32 %v2666, %v646
    %v2675 = vmul.f32 %v2669, %v646
    %v2676 = vmul.f32 %v2672, %v646
    %v2677 = vadd.f32 %v2673, 1e-06
    %v2678 = vadd.f32 %v2674, 1e-06
    %v2679 = vadd.f32 %v2675, 1e-06
    %v2680 = vadd.f32 %v2676, 1e-06
    %v2681 = vrsqrt.pop %v2677
    %v2682 = vrsqrt.pop %v2678
    %v2683 = vrsqrt.pop %v2679
    %v2684 = vrsqrt.pop %v2680
    %v2685 = vmul.f32 %v2653, %v2681
    %v2686 = vmul.f32 %v2654, %v2682
    %v2687 = vmul.f32 %v2655, %v2683
    %v2688 = vmul.f32 %v2656, %v2684
    %v2689 = vpack.c.bf16 %v2686, %v2685
    %v2690 = vpack.c.bf16 %v2688, %v2687
    %v2691 = vld [vmem:[%s8] sm:$0xf]
    %v2692 = vld [vmem:[%s8 + $0x4] sm:$0xf]
    %v2693 = vld [vmem:[%s8 + $0x8] sm:$0xf]
    %v2694 = vld [vmem:[%s8 + $0xc] sm:$0xf]
    %v2695 = vld [vmem:[%s8 + $0x10] sm:$0xf]
    %v2696 = vld [vmem:[%s8 + $0x14] sm:$0xf]
    %v2697 = vld [vmem:[%s8 + $0x18] sm:$0xf]
    %v2698 = vld [vmem:[%s8 + $0x1c] sm:$0xf]
    %v2707 = vunpack.c.l.b16 %v2691
    %v2708 = vunpack.c.l.b16 %v2692
    %v2709 = vunpack.c.l.b16 %v2693
    %v2710 = vunpack.c.l.b16 %v2694
    %v2711 = vunpack.c.l.b16 %v2695
    %v2712 = vunpack.c.l.b16 %v2696
    %v2713 = vunpack.c.l.b16 %v2697
    %v2714 = vunpack.c.l.b16 %v2698
    %v2715 = vpack.c.b16 %v2708, %v2707
    %v2716 = vpack.c.b16 %v2710, %v2709
    %v2717 = vpack.c.b16 %v2712, %v2711
    %v2718 = vpack.c.b16 %v2714, %v2713
    %v2724 = vsel %vm633, %v2689, 0
    %v2727 = vsel %vm633, %v2690, 0
    %2729 = vmatprep.subr.bf16.mxu0 0
    %2730 = vmatpush1.bf16.msra.mxu0 0
    %2731 = vmatprep.subr.bf16.mxu0 0
    %2732 = vmatpush1.bf16.msra.mxu0 0
    %2733 = vmatprep.subr.bf16.mxu0 0
    %2734 = vmatpush1.bf16.msra.mxu0 0
    %2735 = vmatprep.subr.bf16.mxu0 0
    %2736 = vmatpush1.bf16.msra.mxu0 0
    %2737 = vmatprep.subr.bf16.mxu0 0
    %2738 = vmatpush1.bf16.msra.mxu0 %v2718
    %2739 = vmatprep.subr.bf16.mxu0 0
    %2740 = vmatpush1.bf16.msra.mxu0 %v2717
    %2741 = vmatprep.subr.bf16.mxu0 0
    %2742 = vmatpush1.bf16.msra.mxu0 %v2716
    %2743 = vmatprep.subr.bf16.mxu0 0
    %2744 = vmatpush1.bf16.msra.mxu0 %v2715
    %2745 = vmatprep.subr.bf16.mxu0 0
    %2746 = vmatpush2.bf16.msra.mxu0 0
    %2747 = vmatprep.subr.bf16.mxu0 0
    %2748 = vmatpush2.bf16.msra.mxu0 0
    %2749 = vmatprep.subr.bf16.mxu0 0
    %2750 = vmatpush2.bf16.msra.mxu0 0
    %2751 = vmatprep.subr.bf16.mxu0 0
    %2752 = vmatpush2.bf16.msra.mxu0 0
    %2753 = vmatprep.subr.bf16.mxu0 0
    %2754 = vmatpush2.bf16.msra.mxu0 0
    %2755 = vmatprep.subr.bf16.mxu0 0
    %2756 = vmatpush2.bf16.msra.mxu0 0
    %2757 = vmatprep.subr.bf16.mxu0 0
    %2758 = vmatpush2.bf16.msra.mxu0 0
    %2759 = vmatprep.subr.bf16.mxu0 0
    %2760 = vmatpush2.bf16.msra.mxu0 0
    %2761 = vmatprep.mubr.bf16.mxu0 0
    %2762 = vmatmul.mubr.bf16.gmra.mxu0 %v2724
    %v2763 = vpop.f32.mrf.mxu0
    %v2764 = vadd.f32 0.0, %v2763
    %v2765 = vpop.f32.mrf.mxu0
    %v2766 = vpop.f32.mrf.mxu0
    %v2767 = vadd.f32 0.0, %v2766
    %v2768 = vpop.f32.mrf.mxu0
    %2769 = vmatprep.mubr.bf16.mxu0 0
    %2770 = vmatmul.mubr.bf16.gmra.mxu0 %v2727
    %v2771 = vpop.f32.mrf.mxu0
    %v2772 = vadd.f32 0.0, %v2771
    %v2773 = vpop.f32.mrf.mxu0
    %v2774 = vpop.f32.mrf.mxu0
    %v2775 = vadd.f32 0.0, %v2774
    %v2776 = vpop.f32.mrf.mxu0
    %2777 = vdwg.mxu0
    %v2778 = vxor.u32 %v2764, 2147483648
    %v2779 = vxor.u32 %v2767, 2147483648
    %v2780 = vxor.u32 %v2772, 2147483648
    %v2781 = vxor.u32 %v2775, 2147483648
    %v2782 = vmul.f32 %v2778, 1.442695
    %v2783 = vpow.pop %v2782
    %v2784 = vmul.f32 %v2779, 1.442695
    %v2785 = vpow.pop %v2784
    %v2786 = vmul.f32 %v2780, 1.442695
    %v2787 = vpow.pop %v2786
    %v2788 = vmul.f32 %v2781, 1.442695
    %v2789 = vpow.pop %v2788
    %v2790 = vadd.f32 %v2783, 1.0
    %v2791 = vadd.f32 %v2785, 1.0
    %v2792 = vadd.f32 %v2787, 1.0
    %v2793 = vadd.f32 %v2789, 1.0
    %v2794 = vrcp.pop %v2790
    %v2795 = vmul.f32 1.0, %v2794
    %v2796 = vrcp.pop %v2791
    %v2797 = vmul.f32 1.0, %v2796
    %v2798 = vrcp.pop %v2792
    %v2799 = vmul.f32 1.0, %v2798
    %v2800 = vrcp.pop %v2793
    %v2801 = vmul.f32 1.0, %v2800
    %v2802 = vmul.f32 %v2764, %v2795
    %v2803 = vmul.f32 %v2767, %v2797
    %v2804 = vmul.f32 %v2772, %v2799
    %v2805 = vmul.f32 %v2775, %v2801
    %2810 = vrot.lane.b32.xlu0 %v2802, 64
    %v2811 = vpop.permute.xlu0 %2810
    %2812 = vrot.lane.b32.xlu0 %v2803, 64
    %v2813 = vpop.permute.xlu0 %2812
    %2814 = vrot.lane.b32.xlu0 %v2804, 64
    %v2815 = vpop.permute.xlu0 %2814
    %2816 = vrot.lane.b32.xlu0 %v2805, 64
    %v2817 = vpop.permute.xlu0 %2816
    %v2822 = vmul.f32 %v2764, %v2811
    %v2823 = vmul.f32 %v2767, %v2813
    %v2824 = vmul.f32 %v2772, %v2815
    %v2825 = vmul.f32 %v2775, %v2817
    %v2826 = vpack.c.bf16 %v2823, %v2822
    %v2827 = vpack.c.bf16 %v2825, %v2824
    %v2828 = vld [vmem:[%s9] sm:$0xf]
    %v2829 = vld [vmem:[%s9 + $0x4] sm:$0xf]
    %v2830 = vld [vmem:[%s9 + $0x8] sm:$0xf]
    %v2831 = vld [vmem:[%s9 + $0xc] sm:$0xf]
    %v2832 = vld [vmem:[%s9 + $0x10] sm:$0xf]
    %v2833 = vld [vmem:[%s9 + $0x14] sm:$0xf]
    %v2834 = vld [vmem:[%s9 + $0x18] sm:$0xf]
    %v2835 = vld [vmem:[%s9 + $0x1c] sm:$0xf]
    %v2844 = vunpack.c.l.b16 %v2828
    %v2845 = vunpack.c.l.b16 %v2829
    %v2846 = vunpack.c.l.b16 %v2830
    %v2847 = vunpack.c.l.b16 %v2831
    %v2848 = vunpack.c.l.b16 %v2832
    %v2849 = vunpack.c.l.b16 %v2833
    %v2850 = vunpack.c.l.b16 %v2834
    %v2851 = vunpack.c.l.b16 %v2835
    %v2852 = vpack.c.b16 %v2845, %v2844
    %v2853 = vpack.c.b16 %v2847, %v2846
    %v2854 = vpack.c.b16 %v2849, %v2848
    %v2855 = vpack.c.b16 %v2851, %v2850
    %v2861 = vsel %vm633, %v2826, 0
    %v2864 = vsel %vm633, %v2827, 0
    %2866 = vmatprep.subr.bf16.mxu0 0
    %2867 = vmatpush1.bf16.msra.mxu0 0
    %2868 = vmatprep.subr.bf16.mxu0 0
    %2869 = vmatpush1.bf16.msra.mxu0 0
    %2870 = vmatprep.subr.bf16.mxu0 0
    %2871 = vmatpush1.bf16.msra.mxu0 0
    %2872 = vmatprep.subr.bf16.mxu0 0
    %2873 = vmatpush1.bf16.msra.mxu0 0
    %2874 = vmatprep.subr.bf16.mxu0 0
    %2875 = vmatpush1.bf16.msra.mxu0 %v2855
    %2876 = vmatprep.subr.bf16.mxu0 0
    %2877 = vmatpush1.bf16.msra.mxu0 %v2854
    %2878 = vmatprep.subr.bf16.mxu0 0
    %2879 = vmatpush1.bf16.msra.mxu0 %v2853
    %2880 = vmatprep.subr.bf16.mxu0 0
    %2881 = vmatpush1.bf16.msra.mxu0 %v2852
    %2882 = vmatprep.subr.bf16.mxu0 0
    %2883 = vmatpush2.bf16.msra.mxu0 0
    %2884 = vmatprep.subr.bf16.mxu0 0
    %2885 = vmatpush2.bf16.msra.mxu0 0
    %2886 = vmatprep.subr.bf16.mxu0 0
    %2887 = vmatpush2.bf16.msra.mxu0 0
    %2888 = vmatprep.subr.bf16.mxu0 0
    %2889 = vmatpush2.bf16.msra.mxu0 0
    %2890 = vmatprep.subr.bf16.mxu0 0
    %2891 = vmatpush2.bf16.msra.mxu0 0
    %2892 = vmatprep.subr.bf16.mxu0 0
    %2893 = vmatpush2.bf16.msra.mxu0 0
    %2894 = vmatprep.subr.bf16.mxu0 0
    %2895 = vmatpush2.bf16.msra.mxu0 0
    %2896 = vmatprep.subr.bf16.mxu0 0
    %2897 = vmatpush2.bf16.msra.mxu0 0
    %2898 = vmatprep.mubr.bf16.mxu0 0
    %2899 = vmatmul.mubr.bf16.gmra.mxu0 %v2861
    %v2900 = vpop.f32.mrf.mxu0
    %v2901 = vadd.f32 0.0, %v2900
    %v2902 = vpop.f32.mrf.mxu0
    %v2903 = vpop.f32.mrf.mxu0
    %v2904 = vadd.f32 0.0, %v2903
    %v2905 = vpop.f32.mrf.mxu0
    %2906 = vmatprep.mubr.bf16.mxu0 0
    %2907 = vmatmul.mubr.bf16.gmra.mxu0 %v2864
    %v2908 = vpop.f32.mrf.mxu0
    %v2909 = vadd.f32 0.0, %v2908
    %v2910 = vpop.f32.mrf.mxu0
    %v2911 = vpop.f32.mrf.mxu0
    %v2912 = vadd.f32 0.0, %v2911
    %v2913 = vpop.f32.mrf.mxu0
    %2914 = vdwg.mxu0
    %v2915 = vadd.f32 %v2653, %v2901
    %v2916 = vadd.f32 %v2654, %v2904
    %v2917 = vadd.f32 %v2655, %v2909
    %v2918 = vadd.f32 %v2656, %v2912
    %v2919 = vmul.f32 %v2915, %v2915
    %v2920 = vmul.f32 %v2916, %v2916
    %v2921 = vmul.f32 %v2917, %v2917
    %v2922 = vmul.f32 %v2918, %v2918
    %v2923 = vsel %vm633, %v2919, 0.0
    %2924 = vadd.xlane.f32.xlu0 %v2923
    %v2925 = vpop.xlane.xlu0 %2924
    %v2926 = vsel %vm633, %v2920, 0.0
    %2927 = vadd.xlane.f32.xlu0 %v2926
    %v2928 = vpop.xlane.xlu0 %2927
    %v2929 = vsel %vm633, %v2921, 0.0
    %2930 = vadd.xlane.f32.xlu0 %v2929
    %v2931 = vpop.xlane.xlu0 %2930
    %v2932 = vsel %vm633, %v2922, 0.0
    %2933 = vadd.xlane.f32.xlu0 %v2932
    %v2934 = vpop.xlane.xlu0 %2933
    %v2935 = vmul.f32 %v2925, %v646
    %v2936 = vmul.f32 %v2928, %v646
    %v2937 = vmul.f32 %v2931, %v646
    %v2938 = vmul.f32 %v2934, %v646
    %v2939 = vadd.f32 %v2935, 1e-06
    %v2940 = vadd.f32 %v2936, 1e-06
    %v2941 = vadd.f32 %v2937, 1e-06
    %v2942 = vadd.f32 %v2938, 1e-06
    %v2943 = vrsqrt.pop %v2939
    %v2944 = vrsqrt.pop %v2940
    %v2945 = vrsqrt.pop %v2941
    %v2946 = vrsqrt.pop %v2942
    %v2947 = vmul.f32 %v2915, %v2943
    %v2948 = vmul.f32 %v2916, %v2944
    %v2949 = vmul.f32 %v2917, %v2945
    %v2950 = vmul.f32 %v2918, %v2946
    %v2951 = vpack.c.bf16 %v2948, %v2947
    %v2952 = vpack.c.bf16 %v2950, %v2949
    %v2953 = vld [vmem:[%s10] sm:$0xf]
    %v2954 = vld [vmem:[%s10 + $0x4] sm:$0xf]
    %v2955 = vld [vmem:[%s10 + $0x8] sm:$0xf]
    %v2956 = vld [vmem:[%s10 + $0xc] sm:$0xf]
    %v2957 = vld [vmem:[%s10 + $0x10] sm:$0xf]
    %v2958 = vld [vmem:[%s10 + $0x14] sm:$0xf]
    %v2959 = vld [vmem:[%s10 + $0x18] sm:$0xf]
    %v2960 = vld [vmem:[%s10 + $0x1c] sm:$0xf]
    %v2961 = vld [vmem:[%s11] sm:$0x1]
    %v2963 = vlaneseq
    %v2964 = vshrl.u32 %v2963, 7
    %v2965 = vsub.s32 0, %v2964
    %v2966 = vrot.slane %v2961, %v2965
    %v2976 = vunpack.c.l.b16 %v2953
    %v2977 = vunpack.c.l.b16 %v2954
    %v2978 = vunpack.c.l.b16 %v2955
    %v2979 = vunpack.c.l.b16 %v2956
    %v2980 = vunpack.c.l.b16 %v2957
    %v2981 = vunpack.c.l.b16 %v2958
    %v2982 = vunpack.c.l.b16 %v2959
    %v2983 = vunpack.c.l.b16 %v2960
    %v2984 = vpack.c.b16 %v2977, %v2976
    %v2985 = vpack.c.b16 %v2979, %v2978
    %v2986 = vpack.c.b16 %v2981, %v2980
    %v2987 = vpack.c.b16 %v2983, %v2982
    %v2993 = vsel %vm633, %v2951, 0
    %v2996 = vsel %vm633, %v2952, 0
    %2998 = vmatprep.subr.bf16.mxu0 0
    %2999 = vmatpush1.bf16.msra.mxu0 0
    %3000 = vmatprep.subr.bf16.mxu0 0
    %3001 = vmatpush1.bf16.msra.mxu0 0
    %3002 = vmatprep.subr.bf16.mxu0 0
    %3003 = vmatpush1.bf16.msra.mxu0 0
    %3004 = vmatprep.subr.bf16.mxu0 0
    %3005 = vmatpush1.bf16.msra.mxu0 0
    %3006 = vmatprep.subr.bf16.mxu0 0
    %3007 = vmatpush1.bf16.msra.mxu0 %v2987
    %3008 = vmatprep.subr.bf16.mxu0 0
    %3009 = vmatpush1.bf16.msra.mxu0 %v2986
    %3010 = vmatprep.subr.bf16.mxu0 0
    %3011 = vmatpush1.bf16.msra.mxu0 %v2985
    %3012 = vmatprep.subr.bf16.mxu0 0
    %3013 = vmatpush1.bf16.msra.mxu0 %v2984
    %3014 = vmatprep.subr.bf16.mxu0 0
    %3015 = vmatpush2.bf16.msra.mxu0 0
    %3016 = vmatprep.subr.bf16.mxu0 0
    %3017 = vmatpush2.bf16.msra.mxu0 0
    %3018 = vmatprep.subr.bf16.mxu0 0
    %3019 = vmatpush2.bf16.msra.mxu0 0
    %3020 = vmatprep.subr.bf16.mxu0 0
    %3021 = vmatpush2.bf16.msra.mxu0 0
    %3022 = vmatprep.subr.bf16.mxu0 0
    %3023 = vmatpush2.bf16.msra.mxu0 0
    %3024 = vmatprep.subr.bf16.mxu0 0
    %3025 = vmatpush2.bf16.msra.mxu0 0
    %3026 = vmatprep.subr.bf16.mxu0 0
    %3027 = vmatpush2.bf16.msra.mxu0 0
    %3028 = vmatprep.subr.bf16.mxu0 0
    %3029 = vmatpush2.bf16.msra.mxu0 0
    %3030 = vmatprep.mubr.bf16.mxu0 0
    %3031 = vmatmul.mubr.bf16.gmra.mxu0 %v2993
    %v3032 = vpop.f32.mrf.mxu0
    %v3033 = vadd.f32 %v2966, %v3032
    %v3034 = vpop.f32.mrf.mxu0
    %v3035 = vpop.f32.mrf.mxu0
    %v3036 = vadd.f32 %v2966, %v3035
    %v3037 = vpop.f32.mrf.mxu0
    %3038 = vmatprep.mubr.bf16.mxu0 0
    %3039 = vmatmul.mubr.bf16.gmra.mxu0 %v2996
    %v3040 = vpop.f32.mrf.mxu0
    %v3041 = vadd.f32 %v2966, %v3040
    %v3042 = vpop.f32.mrf.mxu0
    %v3043 = vpop.f32.mrf.mxu0
    %v3044 = vadd.f32 %v2966, %v3043
    %v3045 = vpop.f32.mrf.mxu0
    %3046 = vdwg.mxu0
    %3047 = vst [vmem:[#allocation2] sm:$0xff] %v3033
    %3048 = vst [vmem:[#allocation2 + $0x8] sm:$0xff] %v3036
    %3049 = vst [vmem:[#allocation2 + $0x10] sm:$0xff] %v3041
    %3050 = vst [vmem:[#allocation2 + $0x18] sm:$0xff] %v3044
    // Predicated region
    $region50: #{tpu_custom_call.1} parent=1 // pred_check
      _
    $region51: #{tpu_custom_call.1} parent=1 // pred_check_branch
      %3052 = sbr.rel (0) target = $region53
    $region52: #{tpu_custom_call.1} parent=1 // pred_region
      %s3054 = ssub.s32 512, 512
      %3055 = vsyncadd [#allocation3], %s3054
      %s3056 = sshll.u32 [#allocation2], 4
      %s3057 = int_to_ptr.vmem [resolvable:$true] %s3056
      %3062 = dma.vmem_to_hbm [thread:$0]  %s3057, 512, %s12, [#allocation3], 128, 128, 8
    $region53: #{tpu_custom_call.1} parent=1 // pred_fallthru
      _
    // Predicated region
    $region54: #{tpu_custom_call.1} parent=1 // pred_check
      _
    $region55: #{tpu_custom_call.1} parent=1 // pred_check_branch
      %3064 = sbr.rel (0) target = $region57
    $region56: #{tpu_custom_call.1} parent=1 // pred_region
      %3065 = dma.done [#allocation3], 512
    $region57: #{tpu_custom_call.1} parent=1 // pred_fallthru
      _
    %3066 = vsyncpa [#allocation3], 1

</llo_original>
